<compile_context>
chip_gen: v7x
topology: tpu7x:2x2x1
jax: 0.10.0
libtpu: 0.0.40
codegen_flags: <defaults>
</compile_context>

<pallas_src>
import functools

import jax
import jax.numpy as jnp
from jax.experimental import pallas as pl
from jax.experimental.pallas import tpu as pltpu

D_IN, D_H1, D_H2, D_H3, D_OUT = 6000, 512, 256, 128, 28
K_PAD = 6144     # 6000 rounded up to a multiple of 128 lanes (zero-padded)
OUT_PAD = 128    # 28 rounded up to a lane-dense output slab


def _round_up(n, m):
    return ((n + m - 1) // m) * m


def _prelu(h, a):
    # PReLU(x) = max(0,x) + a*min(0,x); single shared scalar slope per layer.
    return jnp.where(h > 0, h, a * h)


def encoder_kernel(a_ref,                 # SMEM (3,) PReLU slopes, f32
                   x_ref,                 # (TB, TK)        bf16
                   w1_ref, b1_ref,        # (TK, 512)  bf16 / (1, 512) f32
                   w2_ref, b2_ref,        # (512, 256) bf16 / (1, 256) f32
                   w3_ref, b3_ref,        # (256, 128) bf16 / (1, 128) f32
                   w4_ref, b4_ref,        # (128, 128) bf16 / (1, 128) f32
                   o_ref,                 # (TB, OUT_PAD) f32
                   acc_ref):              # VMEM (TB, 512) f32 layer-1 accumulator
    k = pl.program_id(1)

    @pl.when(k == 0)
    def _():
        acc_ref[...] = jnp.zeros_like(acc_ref)

    # Layer-1 partial contraction: bf16 x bf16 -> f32 on the MXU.
    acc_ref[...] += jnp.dot(x_ref[...], w1_ref[...],
                            preferred_element_type=jnp.float32)

    @pl.when(k == pl.num_programs(1) - 1)
    def _():
        # Layer 1 bias + PReLU (f32 on the VPU), then layers 2-4 in bf16.
        h = _prelu(acc_ref[...] + b1_ref[...], a_ref[0])

        h = jnp.dot(h.astype(jnp.bfloat16), w2_ref[...],
                    preferred_element_type=jnp.float32) + b2_ref[...]
        h = _prelu(h, a_ref[1])

        h = jnp.dot(h.astype(jnp.bfloat16), w3_ref[...],
                    preferred_element_type=jnp.float32) + b3_ref[...]
        h = _prelu(h, a_ref[2])

        h = jnp.dot(h.astype(jnp.bfloat16), w4_ref[...],
                    preferred_element_type=jnp.float32) + b4_ref[...]

        o_ref[...] = h.astype(o_ref.dtype)


def prepare_params(params):
    """One-time conversion: pad to TPU-friendly shapes, cast weights to bf16."""
    w1 = jnp.pad(params["w1"], ((0, K_PAD - D_IN), (0, 0))).astype(jnp.bfloat16)
    w2 = params["w2"].astype(jnp.bfloat16)
    w3 = params["w3"].astype(jnp.bfloat16)
    w4 = jnp.pad(params["w4"], ((0, 0), (0, OUT_PAD - D_OUT))).astype(jnp.bfloat16)
    b4 = jnp.pad(params["b4"], ((0, 0), (0, OUT_PAD - D_OUT)))
    return dict(a=params["a"],
                w1=w1, b1=params["b1"],
                w2=w2, b2=params["b2"],
                w3=w3, b3=params["b3"],
                w4=w4, b4=b4)


@functools.partial(jax.jit, static_argnames=("tb",))
def encoder_forward(x, prepared, tb=512):
    """x: (B, 6000) f32.  prepared: output of prepare_params().  tb: max batch tile."""
    B = x.shape[0]

    # Batch tile: multiple of 16 (bf16 sublane packing); force >=2 batch tiles
    # whenever B allows it so the "parallel" axis can shard over 2 TCs (v7x).
    B16 = _round_up(max(B, 1), 16)
    if B16 <= 16:
        TB = 16
    else:
        TB = min(tb, _round_up(-(-B16 // 2), 16))
    B_pad = _round_up(B, TB)
    nb = B_pad // TB

    # K split for layer 1: only when the batch grid has a single step (then the
    # w1/x DMAs would otherwise be fully exposed).  Otherwise keep w1 resident.
    nk = 4 if nb == 1 else 1
    TK = K_PAD // nk

    # bf16 cast fused with the (batch-row, K) zero-pad: one read of f32 x, one
    # half-width padded write; no separate full-f32 pad round trip in HBM.
    xp = jnp.pad(x.astype(jnp.bfloat16),
                 ((0, B_pad - B), (0, K_PAD - D_IN)))

    def const(shape):
        # Resident weight/bias block: same block index every step, single-buffered.
        return pl.BlockSpec(shape, lambda i, k: (0, 0),
                            pipeline_mode=pl.Buffered(1))

    if nk == 1:
        w1_spec = pl.BlockSpec((TK, D_H1), lambda i, k: (k, 0),
                               pipeline_mode=pl.Buffered(1))   # constant -> resident
    else:
        w1_spec = pl.BlockSpec((TK, D_H1), lambda i, k: (k, 0))  # pipelined over k

    smem = pl.BlockSpec(memory_space=pltpu.MemorySpace.SMEM)

    out = pl.pallas_call(
        encoder_kernel,
        out_shape=jax.ShapeDtypeStruct((B_pad, OUT_PAD), jnp.float32),
        grid=(nb, nk),
        in_specs=[
            smem,                                             # PReLU slopes
            pl.BlockSpec((TB, TK), lambda i, k: (i, k)),      # x tile
            w1_spec, const((1, D_H1)),                        # w1, b1
            const((D_H1, D_H2)), const((1, D_H2)),            # w2, b2
            const((D_H2, D_H3)), const((1, D_H3)),            # w3, b3
            const((D_H3, OUT_PAD)), const((1, OUT_PAD)),      # w4, b4 (padded)
        ],
        out_specs=pl.BlockSpec((TB, OUT_PAD), lambda i, k: (i, 0)),
        scratch_shapes=[pltpu.VMEM((TB, D_H1), jnp.float32)],
        compiler_params=pltpu.CompilerParams(
            dimension_semantics=("parallel", "arbitrary"),
            vmem_limit_bytes=48 << 20,
        ),
    )(prepared["a"], xp,
      prepared["w1"], prepared["b1"],
      prepared["w2"], prepared["b2"],
      prepared["w3"], prepared["b3"],
      prepared["w4"], prepared["b4"])

    return out[:B, :D_OUT]


def init_params(key):
    """Deterministic init mimicking PyTorch defaults (U(-1/sqrt(fan_in), +))."""
    dims = [(D_IN, D_H1), (D_H1, D_H2), (D_H2, D_H3), (D_H3, D_OUT)]
    params = {}
    keys = jax.random.split(key, 2 * len(dims))
    for i, (fin, fout) in enumerate(dims):
        bound = 1.0 / (fin ** 0.5)
        w = jax.random.uniform(keys[2 * i], (fin, fout), jnp.float32,
                               minval=-bound, maxval=bound)
        b = jax.random.uniform(keys[2 * i + 1], (1, fout), jnp.float32,
                               minval=-bound, maxval=bound)
        params[f"w{i + 1}"] = w
        params[f"b{i + 1}"] = b
    # PReLU default single parameter per layer, init 0.25
    params["a"] = jnp.full((3,), 0.25, dtype=jnp.float32)
    return params


def encoder_reference(x, p):
    """Pure-JAX reference with the same operand rounding as the kernel:
    bf16 weights AND bf16 activations into each matmul, f32 accumulation."""
    h = x.astype(jnp.bfloat16)
    for i in range(3):
        w = p[f"w{i + 1}"].astype(jnp.bfloat16)
        z = jnp.dot(h, w, preferred_element_type=jnp.float32) + p[f"b{i + 1}"]
        z = jnp.where(z > 0, z, p["a"][i] * z)
        h = z.astype(jnp.bfloat16)
    w4 = p["w4"].astype(jnp.bfloat16)
    return jnp.dot(h, w4, preferred_element_type=jnp.float32) + p["b4"]


if __name__ == "__main__":
    key = jax.random.PRNGKey(0)
    kp, kx = jax.random.split(key)
    params = init_params(kp)
    prepared = prepare_params(params)

    # B=8 / B=5: single batch tile -> K-split pipeline path (+ row padding).
    # B=40: two batch tiles -> resident-w1 path, exercises the parallel axis.
    for B in (8, 5, 40):
        x = jax.random.normal(jax.random.fold_in(kx, B), (B, D_IN),
                              dtype=jnp.float32)
        out = jax.block_until_ready(encoder_forward(x, prepared))
        ref = encoder_reference(x, params)
        assert out.shape == (B, D_OUT)
        err = jnp.max(jnp.abs(out - ref))
        assert jnp.allclose(out, ref, atol=5e-3, rtol=5e-3), (
            f"mismatch vs reference at B={B}: max abs err {err}")

    print("KERNEL_OK")
</pallas_src>

<mosaic_0001>
module attributes {stable_mosaic.version = 11 : i64} {
  func.func @encoder_kernel(%arg0: i32, %arg1: i32, %arg2: memref<3xf32, #tpu.memory_space<smem>>, %arg3: memref<16x1536xbf16, #tpu.memory_space<vmem>>, %arg4: memref<1536x512xbf16, #tpu.memory_space<vmem>>, %arg5: memref<1x512xf32, #tpu.memory_space<vmem>>, %arg6: memref<512x256xbf16, #tpu.memory_space<vmem>>, %arg7: memref<1x256xf32, #tpu.memory_space<vmem>>, %arg8: memref<256x128xbf16, #tpu.memory_space<vmem>>, %arg9: memref<1x128xf32, #tpu.memory_space<vmem>>, %arg10: memref<128x128xbf16, #tpu.memory_space<vmem>>, %arg11: memref<1x128xf32, #tpu.memory_space<vmem>>, %arg12: memref<16x128xf32, #tpu.memory_space<vmem>>, %arg13: memref<16x512xf32, #tpu.memory_space<vmem>>) attributes {dimension_semantics = [#tpu.dimension_semantics<parallel>, #tpu.dimension_semantics<arbitrary>], iteration_bounds = array<i64: 1, 4>, scalar_prefetch = 0 : i64, scratch_operands = 1 : i64, tpu.core_type = #tpu.core_type<tc>, window_params = [{transform_indices = @transform_0, window_bounds = array<i64: 3>}, {transform_indices = @transform_1, window_bounds = array<i64: 16, 1536>}, {transform_indices = @transform_2, window_bounds = array<i64: 1536, 512>}, {pipeline_mode = #tpu.pipeline_mode<synchronous>, transform_indices = @transform_3, window_bounds = array<i64: 1, 512>}, {pipeline_mode = #tpu.pipeline_mode<synchronous>, transform_indices = @transform_4, window_bounds = array<i64: 512, 256>}, {pipeline_mode = #tpu.pipeline_mode<synchronous>, transform_indices = @transform_5, window_bounds = array<i64: 1, 256>}, {pipeline_mode = #tpu.pipeline_mode<synchronous>, transform_indices = @transform_6, window_bounds = array<i64: 256, 128>}, {pipeline_mode = #tpu.pipeline_mode<synchronous>, transform_indices = @transform_7, window_bounds = array<i64: 1, 128>}, {pipeline_mode = #tpu.pipeline_mode<synchronous>, transform_indices = @transform_8, window_bounds = array<i64: 128, 128>}, {pipeline_mode = #tpu.pipeline_mode<synchronous>, transform_indices = @transform_9, window_bounds = array<i64: 1, 128>}, {transform_indices = @transform_10, window_bounds = array<i64: 16, 128>}]} {
    %c0_i32 = arith.constant 0 : i32
    %0 = arith.cmpi eq, %arg1, %c0_i32 : i32
    %1 = arith.extui %0 : i1 to i32
    %c0_i32_0 = arith.constant 0 : i32
    %2 = arith.cmpi ne, %1, %c0_i32_0 : i32
    scf.if %2 {
      %cst_9 = arith.constant 0.000000e+00 : f32
      %12 = vector.broadcast %cst_9 : f32 to vector<16x512xf32>
      %c0_10 = arith.constant 0 : index
      %c0_11 = arith.constant 0 : index
      %13 = vector.load %arg13[%c0_10, %c0_11] : memref<16x512xf32, #tpu.memory_space<vmem>>, vector<16x512xf32>
      tpu.vector_store %arg13[%c0_10, %c0_11], %12 {strides = array<i32>} : memref<16x512xf32, #tpu.memory_space<vmem>>, vector<16x512xf32>,
    } else {
    }
    %c0 = arith.constant 0 : index
    %c0_1 = arith.constant 0 : index
    %3 = vector.load %arg13[%c0, %c0_1] : memref<16x512xf32, #tpu.memory_space<vmem>>, vector<16x512xf32>
    %c0_2 = arith.constant 0 : index
    %c0_3 = arith.constant 0 : index
    %4 = vector.load %arg3[%c0_2, %c0_3] : memref<16x1536xbf16, #tpu.memory_space<vmem>>, vector<16x1536xbf16>
    %c0_4 = arith.constant 0 : index
    %c0_5 = arith.constant 0 : index
    %5 = vector.load %arg4[%c0_4, %c0_5] : memref<1536x512xbf16, #tpu.memory_space<vmem>>, vector<1536x512xbf16>
    %cst = arith.constant dense<0.000000e+00> : vector<16x512xf32>
    %6 = tpu.matmul %4, %5, %cst {dimension_numbers = #tpu.dot_dimension_numbers<[1], [0], [0], [1], [0, 0, 1, 1], [], []>} : vector<16x1536xbf16>, vector<1536x512xbf16>, vector<16x512xf32> -> vector<16x512xf32>
    %7 = arith.addf %3, %6 : vector<16x512xf32>
    %c0_6 = arith.constant 0 : index
    %c0_7 = arith.constant 0 : index
    %8 = vector.load %arg13[%c0_6, %c0_7] : memref<16x512xf32, #tpu.memory_space<vmem>>, vector<16x512xf32>
    tpu.vector_store %arg13[%c0_6, %c0_7], %7 {strides = array<i32>} : memref<16x512xf32, #tpu.memory_space<vmem>>, vector<16x512xf32>,
    %c3_i32 = arith.constant 3 : i32
    %9 = arith.cmpi eq, %arg1, %c3_i32 : i32
    %10 = arith.extui %9 : i1 to i32
    %c0_i32_8 = arith.constant 0 : i32
    %11 = arith.cmpi ne, %10, %c0_i32_8 : i32
    scf.if %11 {
      %c0_9 = arith.constant 0 : index
      %c0_10 = arith.constant 0 : index
      %12 = vector.load %arg13[%c0_9, %c0_10] : memref<16x512xf32, #tpu.memory_space<vmem>>, vector<16x512xf32>
      %c0_11 = arith.constant 0 : index
      %c0_12 = arith.constant 0 : index
      %13 = vector.load %arg5[%c0_11, %c0_12] : memref<1x512xf32, #tpu.memory_space<vmem>>, vector<1x512xf32>
      %14 = vector.broadcast %13 : vector<1x512xf32> to vector<16x512xf32>
      %15 = arith.addf %12, %14 : vector<16x512xf32>
      %c0_13 = arith.constant 0 : index
      %16 = memref.load %arg2[%c0_13] : memref<3xf32, #tpu.memory_space<smem>>
      %cst_14 = arith.constant 0.000000e+00 : f32
      %17 = vector.broadcast %cst_14 : f32 to vector<16x512xf32>
      %18 = arith.cmpf ogt, %15, %17 : vector<16x512xf32>
      %19 = vector.broadcast %16 : f32 to vector<16x512xf32>
      %20 = arith.mulf %19, %15 : vector<16x512xf32>
      %21 = arith.select %18, %15, %20 : vector<16x512xi1>, vector<16x512xf32>
      %22 = arith.truncf %21 : vector<16x512xf32> to vector<16x512xbf16>
      %c0_15 = arith.constant 0 : index
      %c0_16 = arith.constant 0 : index
      %23 = vector.load %arg6[%c0_15, %c0_16] : memref<512x256xbf16, #tpu.memory_space<vmem>>, vector<512x256xbf16>
      %cst_17 = arith.constant dense<0.000000e+00> : vector<16x256xf32>
      %24 = tpu.matmul %22, %23, %cst_17 {dimension_numbers = #tpu.dot_dimension_numbers<[1], [0], [0], [1], [0, 0, 1, 1], [], []>} : vector<16x512xbf16>, vector<512x256xbf16>, vector<16x256xf32> -> vector<16x256xf32>
      %c0_18 = arith.constant 0 : index
      %c0_19 = arith.constant 0 : index
      %25 = vector.load %arg7[%c0_18, %c0_19] : memref<1x256xf32, #tpu.memory_space<vmem>>, vector<1x256xf32>
      %26 = vector.broadcast %25 : vector<1x256xf32> to vector<16x256xf32>
      %27 = arith.addf %24, %26 : vector<16x256xf32>
      %c1 = arith.constant 1 : index
      %28 = memref.load %arg2[%c1] : memref<3xf32, #tpu.memory_space<smem>>
      %cst_20 = arith.constant 0.000000e+00 : f32
      %29 = vector.broadcast %cst_20 : f32 to vector<16x256xf32>
      %30 = arith.cmpf ogt, %27, %29 : vector<16x256xf32>
      %31 = vector.broadcast %28 : f32 to vector<16x256xf32>
      %32 = arith.mulf %31, %27 : vector<16x256xf32>
      %33 = arith.select %30, %27, %32 : vector<16x256xi1>, vector<16x256xf32>
      %34 = arith.truncf %33 : vector<16x256xf32> to vector<16x256xbf16>
      %c0_21 = arith.constant 0 : index
      %c0_22 = arith.constant 0 : index
      %35 = vector.load %arg8[%c0_21, %c0_22] : memref<256x128xbf16, #tpu.memory_space<vmem>>, vector<256x128xbf16>
      %cst_23 = arith.constant dense<0.000000e+00> : vector<16x128xf32>
      %36 = tpu.matmul %34, %35, %cst_23 {dimension_numbers = #tpu.dot_dimension_numbers<[1], [0], [0], [1], [0, 0, 1, 1], [], []>} : vector<16x256xbf16>, vector<256x128xbf16>, vector<16x128xf32> -> vector<16x128xf32>
      %c0_24 = arith.constant 0 : index
      %c0_25 = arith.constant 0 : index
      %37 = vector.load %arg9[%c0_24, %c0_25] : memref<1x128xf32, #tpu.memory_space<vmem>>, vector<1x128xf32>
      %38 = vector.broadcast %37 : vector<1x128xf32> to vector<16x128xf32>
      %39 = arith.addf %36, %38 : vector<16x128xf32>
      %c2 = arith.constant 2 : index
      %40 = memref.load %arg2[%c2] : memref<3xf32, #tpu.memory_space<smem>>
      %cst_26 = arith.constant 0.000000e+00 : f32
      %41 = vector.broadcast %cst_26 : f32 to vector<16x128xf32>
      %42 = arith.cmpf ogt, %39, %41 : vector<16x128xf32>
      %43 = vector.broadcast %40 : f32 to vector<16x128xf32>
      %44 = arith.mulf %43, %39 : vector<16x128xf32>
      %45 = arith.select %42, %39, %44 : vector<16x128xi1>, vector<16x128xf32>
      %46 = arith.truncf %45 : vector<16x128xf32> to vector<16x128xbf16>
      %c0_27 = arith.constant 0 : index
      %c0_28 = arith.constant 0 : index
      %47 = vector.load %arg10[%c0_27, %c0_28] : memref<128x128xbf16, #tpu.memory_space<vmem>>, vector<128x128xbf16>
      %cst_29 = arith.constant dense<0.000000e+00> : vector<16x128xf32>
      %48 = tpu.matmul %46, %47, %cst_29 {dimension_numbers = #tpu.dot_dimension_numbers<[1], [0], [0], [1], [0, 0, 1, 1], [], []>} : vector<16x128xbf16>, vector<128x128xbf16>, vector<16x128xf32> -> vector<16x128xf32>
      %c0_30 = arith.constant 0 : index
      %c0_31 = arith.constant 0 : index
      %49 = vector.load %arg11[%c0_30, %c0_31] : memref<1x128xf32, #tpu.memory_space<vmem>>, vector<1x128xf32>
      %50 = vector.broadcast %49 : vector<1x128xf32> to vector<16x128xf32>
      %51 = arith.addf %48, %50 : vector<16x128xf32>
      %c0_32 = arith.constant 0 : index
      %c0_33 = arith.constant 0 : index
      %52 = vector.load %arg12[%c0_32, %c0_33] : memref<16x128xf32, #tpu.memory_space<vmem>>, vector<16x128xf32>
      tpu.vector_store %arg12[%c0_32, %c0_33], %51 {strides = array<i32>} : memref<16x128xf32, #tpu.memory_space<vmem>>, vector<16x128xf32>,
    } else {
    }
    return
  }
  func.func @transform_0(%arg0: i32, %arg1: i32) -> i32 {
    %c0_i32 = arith.constant 0 : i32
    %c0_i32_0 = arith.constant 0 : i32
    return %c0_i32 : i32
  }
  func.func @transform_1(%arg0: i32, %arg1: i32) -> (i32, i32) {
    %c0_i32 = arith.constant 0 : i32
    return %arg0, %arg1 : i32, i32
  }
  func.func @transform_2(%arg0: i32, %arg1: i32) -> (i32, i32) {
    %c0_i32 = arith.constant 0 : i32
    %c0_i32_0 = arith.constant 0 : i32
    return %arg1, %c0_i32 : i32, i32
  }
  func.func @transform_3(%arg0: i32, %arg1: i32) -> (i32, i32) {
    %c0_i32 = arith.constant 0 : i32
    %c0_i32_0 = arith.constant 0 : i32
    %c0_i32_1 = arith.constant 0 : i32
    return %c0_i32, %c0_i32_0 : i32, i32
  }
  func.func @transform_4(%arg0: i32, %arg1: i32) -> (i32, i32) {
    %c0_i32 = arith.constant 0 : i32
    %c0_i32_0 = arith.constant 0 : i32
    %c0_i32_1 = arith.constant 0 : i32
    return %c0_i32, %c0_i32_0 : i32, i32
  }
  func.func @transform_5(%arg0: i32, %arg1: i32) -> (i32, i32) {
    %c0_i32 = arith.constant 0 : i32
    %c0_i32_0 = arith.constant 0 : i32
    %c0_i32_1 = arith.constant 0 : i32
    return %c0_i32, %c0_i32_0 : i32, i32
  }
  func.func @transform_6(%arg0: i32, %arg1: i32) -> (i32, i32) {
    %c0_i32 = arith.constant 0 : i32
    %c0_i32_0 = arith.constant 0 : i32
    %c0_i32_1 = arith.constant 0 : i32
    return %c0_i32, %c0_i32_0 : i32, i32
  }
  func.func @transform_7(%arg0: i32, %arg1: i32) -> (i32, i32) {
    %c0_i32 = arith.constant 0 : i32
    %c0_i32_0 = arith.constant 0 : i32
    %c0_i32_1 = arith.constant 0 : i32
    return %c0_i32, %c0_i32_0 : i32, i32
  }
  func.func @transform_8(%arg0: i32, %arg1: i32) -> (i32, i32) {
    %c0_i32 = arith.constant 0 : i32
    %c0_i32_0 = arith.constant 0 : i32
    %c0_i32_1 = arith.constant 0 : i32
    return %c0_i32, %c0_i32_0 : i32, i32
  }
  func.func @transform_9(%arg0: i32, %arg1: i32) -> (i32, i32) {
    %c0_i32 = arith.constant 0 : i32
    %c0_i32_0 = arith.constant 0 : i32
    %c0_i32_1 = arith.constant 0 : i32
    return %c0_i32, %c0_i32_0 : i32, i32
  }
  func.func @transform_10(%arg0: i32, %arg1: i32) -> (i32, i32) {
    %c0_i32 = arith.constant 0 : i32
    %c0_i32_0 = arith.constant 0 : i32
    return %arg0, %c0_i32 : i32, i32
  }
}

</mosaic_0001>

<llo_original>
// kernel: encoder_forward.1
$region0: #{encoder_forward.1}
  #allocation0 [shape = 'u32[]', space=smem, size = 0x4, offset = 0x4, fixed_abs, tag = 'smem constant byte address 0x4 - core index']
  #allocation1 [shape = 'u32[144,128]{1,0:T(1,128)}', space=vmem, size = 0x12000, scoped, tag = 'internal scratch']
  #allocation2 [shape = 'f32[16,512]{1,0:T(8,128)}', space=vmem, size = 0x8000, scoped, tag = 'scratch operand']
  %s0 = inlined_call_operand.hbm [shape: f32[3], index: 0, kind: input, shape index: {}]
  %s1 = inlined_call_operand.vmem [shape: bf16[16,6144], index: 1, kind: input, shape index: {}]
  %s2 = inlined_call_operand.hbm [shape: bf16[6144,512], index: 2, kind: input, shape index: {}]
  %s3 = inlined_call_operand.hbm [shape: f32[1,512], index: 3, kind: input, shape index: {}]
  %s4 = inlined_call_operand.hbm [shape: bf16[512,256], index: 4, kind: input, shape index: {}]
  %s5 = inlined_call_operand.hbm [shape: f32[1,256], index: 5, kind: input, shape index: {}]
  %s6 = inlined_call_operand.hbm [shape: bf16[256,128], index: 6, kind: input, shape index: {}]
  %s7 = inlined_call_operand.hbm [shape: f32[1,128], index: 7, kind: input, shape index: {}]
  %s8 = inlined_call_operand.hbm [shape: bf16[128,128], index: 8, kind: input, shape index: {}]
  %s9 = inlined_call_operand.hbm [shape: f32[1,128], index: 9, kind: input, shape index: {}]
  %s10 = inlined_call_operand.vmem [shape: f32[16,128], index: 10, kind: output, shape index: {}]
  %s11 = sld [smem:[#allocation0]]
  $region140: #{encoder_forward.1} parent=0
    _
  %s13 = ssub.s32 1, %s11
  %s14 = scalar_select 0, %s13, %s11
  $region1: #{encoder_forward.1} parent=0
    #allocation3 [shape = 'u8[512]{0}', space=smem, size = 0x200, scoped, tag = 'input window, operand 0, single buffered']
    #allocation4 [shape = 's32[2]{0}', space=sflag, size = 0x8, scoped, tag = 'scoped memory for encoder_forward.1']
    #allocation5 [shape = 's32[2]{0}', space=sflag, size = 0x8, scoped, tag = 'scoped memory for encoder_forward.1']
    #allocation6 [shape = 'u8[98304]{0}', space=vmem, size = 0x18000, scoped, tag = 'input window, operand 1']
    #allocation7 [shape = 'u8[3145728]{0}', space=vmem, size = 0x300000, scoped, tag = 'input window, operand 2']
    #allocation8 [shape = 'u8[2048]{0}', space=vmem, size = 0x800, scoped, tag = 'input window, operand 3, single buffered']
    #allocation9 [shape = 's32[1]{0}', space=sflag, size = 0x4, scoped, tag = 'scoped memory for encoder_forward.1']
    #allocation10 [shape = 'u8[262144]{0}', space=vmem, size = 0x40000, scoped, tag = 'input window, operand 4, single buffered']
    #allocation11 [shape = 'u8[1024]{0}', space=vmem, size = 0x400, scoped, tag = 'input window, operand 5, single buffered']
    #allocation12 [shape = 's32[1]{0}', space=sflag, size = 0x4, scoped, tag = 'scoped memory for encoder_forward.1']
    #allocation13 [shape = 'u8[65536]{0}', space=vmem, size = 0x10000, scoped, tag = 'input window, operand 6, single buffered']
    #allocation14 [shape = 'u8[512]{0}', space=vmem, size = 0x400, scoped, tag = 'input window, operand 7, single buffered']
    #allocation15 [shape = 's32[1]{0}', space=sflag, size = 0x4, scoped, tag = 'scoped memory for encoder_forward.1']
    #allocation16 [shape = 'u8[32768]{0}', space=vmem, size = 0x8000, scoped, tag = 'input window, operand 8, single buffered']
    #allocation17 [shape = 'u8[512]{0}', space=vmem, size = 0x400, scoped, tag = 'input window, operand 9, single buffered']
    #allocation18 [shape = 's32[1]{0}', space=sflag, size = 0x4, scoped, tag = 'scoped memory for encoder_forward.1']
    %15 = vsyncpa [#allocation5], 0
    %16 = vsyncpa [#allocation4], 0
    %s17 = scalar_lea.sflag [#allocation4], 1
    %18 = vsyncpa %s17, 0
    %19 = vsyncpa [#allocation9], 0
    %20 = vsyncpa [#allocation12], 0
    %21 = vsyncpa [#allocation15], 0
    %22 = vsyncpa [#allocation18], 0
    loop: start=0, step=1, limit=6
    $region2: #{encoder_forward.1} parent=1 // loop_pre_header
      _
    $region3: #{encoder_forward.1} parent=1 // loop_header
      %s24 = sphi 0, %s28
      %p25 = scmp.ge.s32.totalorder %s24, 6
      %s31 = sphi 0, %s43
      %s32 = sphi 0, %s39
      %s33 = sphi 0, %s31
      %s34 = sphi 0, %s32
      %s35 = sphi 0, %s33
      %s36 = sphi 0, %s34
      %s44 = sphi 0, %s44
      %s46 = sphi 0, %s44
      %s47 = sphi 0, %s46
      %s61 = sphi 0, %s47
      %s69 = sphi 0, %s71
      %s72 = sphi 0, %s69
      %s73 = sphi 0, %s72
      %s89 = sphi 0, %s73
      %s95 = sphi 0, %s97
      %s98 = sphi 0, %s95
      %s99 = sphi 0, %s98
      %s115 = sphi 0, %s99
      %s119 = sphi 0, %s119
      %s121 = sphi 0, %s119
      %s122 = sphi 0, %s121
      %s136 = sphi 0, %s122
      %s140 = sphi 0, %s140
      %s142 = sphi 0, %s140
      %s143 = sphi 0, %s142
      %s157 = sphi 0, %s143
      %s161 = sphi 0, %s161
      %s163 = sphi 0, %s161
      %s164 = sphi 0, %s163
      %s178 = sphi 0, %s164
      %s182 = sphi 0, %s182
      %s184 = sphi 0, %s182
      %s185 = sphi 0, %s184
      %s199 = sphi 0, %s185
      %s203 = sphi 0, %s203
      %s205 = sphi 0, %s203
      %s206 = sphi 0, %s205
      %s220 = sphi 0, %s206
      %s224 = sphi 0, %s224
      %s226 = sphi 0, %s224
      %s227 = sphi 0, %s226
      %s241 = sphi 0, %s227
      %s245 = sphi 0, %s245
      %s247 = sphi 0, %s245
      %s248 = sphi 0, %s247
      %s262 = sphi 0, %s248
      %s268 = sphi 0, %s270
      %s271 = sphi 0, %s268
      %s272 = sphi 0, %s271
      %s288 = sphi 0, %s272
    $region4: #{encoder_forward.1} parent=1 // loop_header_branch
      %27 = sbr.rel (%p25) target = $region8
    $region5: #{encoder_forward.1} parent=1 // loop_body
      %s29 = ssub.s32 %s24, 1
      %s30 = ssub.s32 %s24, 2
      %s37 = sadd.s32 1, %s32
      %p38 = scmp.ge.s32.totalorder %s37, 4
      %s39 = scalar_select %p38, 0, %s37
      %s40 = sadd.s32 1, %s31
      %s41 = scalar_select %p38, %s40, %s31
      %p42 = scmp.ge.s32.totalorder %s41, 1
      %s43 = scalar_select %p42, 0, %s41
      %s45 = sadd.s32 %s44, 1
      %p48 = scmp.eq.s32.totalorder %s24, 3
      %p49 = scmp.ne.s32.totalorder %s44, %s46
      %p50 = scmp.eq.s32.totalorder %s24, 0
      %p51 = por %p49, %p50
      %p52 = scmp.ne.s32.totalorder %s44, %s46
      %p53 = scmp.eq.s32.totalorder %s29, 3
      %p54 = por %p52, %p53
      %p55 = scmp.ne.s32.totalorder %s46, %s47
      %p56 = scmp.eq.s32.totalorder %s29, 0
      %p57 = por %p55, %p56
      %p58 = scmp.ne.s32.totalorder %s46, %s47
      %p59 = scmp.eq.s32.totalorder %s30, 3
      %p60 = por %p58, %p59
      %p62 = scmp.ne.s32.totalorder %s47, %s61
      %p63 = scmp.eq.s32.totalorder %s30, 0
      %p64 = por %p62, %p63
      %s65 = ssub.s32 %s31, %s43
      %s66 = ssub.s32 %s32, %s39
      %s67 = sor.u32 %s65, %s66
      %p68 = scmp.eq.s32.totalorder %s67, 0
      %s70 = sadd.s32 %s69, 1
      %s71 = scalar_select %p68, %s69, %s70
      %p74 = pneg %p68
      %p75 = scmp.eq.s32.totalorder %s24, 3
      %p76 = por %p74, %p75
      %p77 = scmp.ne.s32.totalorder %s69, %s72
      %p78 = scmp.eq.s32.totalorder %s24, 0
      %p79 = por %p77, %p78
      %p80 = scmp.ne.s32.totalorder %s69, %s72
      %p81 = scmp.eq.s32.totalorder %s29, 3
      %p82 = por %p80, %p81
      %p83 = scmp.ne.s32.totalorder %s72, %s73
      %p84 = scmp.eq.s32.totalorder %s29, 0
      %p85 = por %p83, %p84
      %p86 = scmp.ne.s32.totalorder %s72, %s73
      %p87 = scmp.eq.s32.totalorder %s30, 3
      %p88 = por %p86, %p87
      %p90 = scmp.ne.s32.totalorder %s73, %s89
      %p91 = scmp.eq.s32.totalorder %s30, 0
      %p92 = por %p90, %p91
      %s93 = ssub.s32 %s32, %s39
      %p94 = scmp.eq.s32.totalorder %s93, 0
      %s96 = sadd.s32 %s95, 1
      %s97 = scalar_select %p94, %s95, %s96
      %p100 = pneg %p94
      %p101 = scmp.eq.s32.totalorder %s24, 3
      %p102 = por %p100, %p101
      %p103 = scmp.ne.s32.totalorder %s95, %s98
      %p104 = scmp.eq.s32.totalorder %s24, 0
      %p105 = por %p103, %p104
      %p106 = scmp.ne.s32.totalorder %s95, %s98
      %p107 = scmp.eq.s32.totalorder %s29, 3
      %p108 = por %p106, %p107
      %p109 = scmp.ne.s32.totalorder %s98, %s99
      %p110 = scmp.eq.s32.totalorder %s29, 0
      %p111 = por %p109, %p110
      %p112 = scmp.ne.s32.totalorder %s98, %s99
      %p113 = scmp.eq.s32.totalorder %s30, 3
      %p114 = por %p112, %p113
      %p116 = scmp.ne.s32.totalorder %s99, %s115
      %p117 = scmp.eq.s32.totalorder %s30, 0
      %p118 = por %p116, %p117
      %s120 = sadd.s32 %s119, 1
      %p123 = scmp.eq.s32.totalorder %s24, 3
      %p124 = scmp.ne.s32.totalorder %s119, %s121
      %p125 = scmp.eq.s32.totalorder %s24, 0
      %p126 = por %p124, %p125
      %p127 = scmp.ne.s32.totalorder %s119, %s121
      %p128 = scmp.eq.s32.totalorder %s29, 3
      %p129 = por %p127, %p128
      %p130 = scmp.ne.s32.totalorder %s121, %s122
      %p131 = scmp.eq.s32.totalorder %s29, 0
      %p132 = por %p130, %p131
      %p133 = scmp.ne.s32.totalorder %s121, %s122
      %p134 = scmp.eq.s32.totalorder %s30, 3
      %p135 = por %p133, %p134
      %p137 = scmp.ne.s32.totalorder %s122, %s136
      %p138 = scmp.eq.s32.totalorder %s30, 0
      %p139 = por %p137, %p138
      %s141 = sadd.s32 %s140, 1
      %p144 = scmp.eq.s32.totalorder %s24, 3
      %p145 = scmp.ne.s32.totalorder %s140, %s142
      %p146 = scmp.eq.s32.totalorder %s24, 0
      %p147 = por %p145, %p146
      %p148 = scmp.ne.s32.totalorder %s140, %s142
      %p149 = scmp.eq.s32.totalorder %s29, 3
      %p150 = por %p148, %p149
      %p151 = scmp.ne.s32.totalorder %s142, %s143
      %p152 = scmp.eq.s32.totalorder %s29, 0
      %p153 = por %p151, %p152
      %p154 = scmp.ne.s32.totalorder %s142, %s143
      %p155 = scmp.eq.s32.totalorder %s30, 3
      %p156 = por %p154, %p155
      %p158 = scmp.ne.s32.totalorder %s143, %s157
      %p159 = scmp.eq.s32.totalorder %s30, 0
      %p160 = por %p158, %p159
      %s162 = sadd.s32 %s161, 1
      %p165 = scmp.eq.s32.totalorder %s24, 3
      %p166 = scmp.ne.s32.totalorder %s161, %s163
      %p167 = scmp.eq.s32.totalorder %s24, 0
      %p168 = por %p166, %p167
      %p169 = scmp.ne.s32.totalorder %s161, %s163
      %p170 = scmp.eq.s32.totalorder %s29, 3
      %p171 = por %p169, %p170
      %p172 = scmp.ne.s32.totalorder %s163, %s164
      %p173 = scmp.eq.s32.totalorder %s29, 0
      %p174 = por %p172, %p173
      %p175 = scmp.ne.s32.totalorder %s163, %s164
      %p176 = scmp.eq.s32.totalorder %s30, 3
      %p177 = por %p175, %p176
      %p179 = scmp.ne.s32.totalorder %s164, %s178
      %p180 = scmp.eq.s32.totalorder %s30, 0
      %p181 = por %p179, %p180
      %s183 = sadd.s32 %s182, 1
      %p186 = scmp.eq.s32.totalorder %s24, 3
      %p187 = scmp.ne.s32.totalorder %s182, %s184
      %p188 = scmp.eq.s32.totalorder %s24, 0
      %p189 = por %p187, %p188
      %p190 = scmp.ne.s32.totalorder %s182, %s184
      %p191 = scmp.eq.s32.totalorder %s29, 3
      %p192 = por %p190, %p191
      %p193 = scmp.ne.s32.totalorder %s184, %s185
      %p194 = scmp.eq.s32.totalorder %s29, 0
      %p195 = por %p193, %p194
      %p196 = scmp.ne.s32.totalorder %s184, %s185
      %p197 = scmp.eq.s32.totalorder %s30, 3
      %p198 = por %p196, %p197
      %p200 = scmp.ne.s32.totalorder %s185, %s199
      %p201 = scmp.eq.s32.totalorder %s30, 0
      %p202 = por %p200, %p201
      %s204 = sadd.s32 %s203, 1
      %p207 = scmp.eq.s32.totalorder %s24, 3
      %p208 = scmp.ne.s32.totalorder %s203, %s205
      %p209 = scmp.eq.s32.totalorder %s24, 0
      %p210 = por %p208, %p209
      %p211 = scmp.ne.s32.totalorder %s203, %s205
      %p212 = scmp.eq.s32.totalorder %s29, 3
      %p213 = por %p211, %p212
      %p214 = scmp.ne.s32.totalorder %s205, %s206
      %p215 = scmp.eq.s32.totalorder %s29, 0
      %p216 = por %p214, %p215
      %p217 = scmp.ne.s32.totalorder %s205, %s206
      %p218 = scmp.eq.s32.totalorder %s30, 3
      %p219 = por %p217, %p218
      %p221 = scmp.ne.s32.totalorder %s206, %s220
      %p222 = scmp.eq.s32.totalorder %s30, 0
      %p223 = por %p221, %p222
      %s225 = sadd.s32 %s224, 1
      %p228 = scmp.eq.s32.totalorder %s24, 3
      %p229 = scmp.ne.s32.totalorder %s224, %s226
      %p230 = scmp.eq.s32.totalorder %s24, 0
      %p231 = por %p229, %p230
      %p232 = scmp.ne.s32.totalorder %s224, %s226
      %p233 = scmp.eq.s32.totalorder %s29, 3
      %p234 = por %p232, %p233
      %p235 = scmp.ne.s32.totalorder %s226, %s227
      %p236 = scmp.eq.s32.totalorder %s29, 0
      %p237 = por %p235, %p236
      %p238 = scmp.ne.s32.totalorder %s226, %s227
      %p239 = scmp.eq.s32.totalorder %s30, 3
      %p240 = por %p238, %p239
      %p242 = scmp.ne.s32.totalorder %s227, %s241
      %p243 = scmp.eq.s32.totalorder %s30, 0
      %p244 = por %p242, %p243
      %s246 = sadd.s32 %s245, 1
      %p249 = scmp.eq.s32.totalorder %s24, 3
      %p250 = scmp.ne.s32.totalorder %s245, %s247
      %p251 = scmp.eq.s32.totalorder %s24, 0
      %p252 = por %p250, %p251
      %p253 = scmp.ne.s32.totalorder %s245, %s247
      %p254 = scmp.eq.s32.totalorder %s29, 3
      %p255 = por %p253, %p254
      %p256 = scmp.ne.s32.totalorder %s247, %s248
      %p257 = scmp.eq.s32.totalorder %s29, 0
      %p258 = por %p256, %p257
      %p259 = scmp.ne.s32.totalorder %s247, %s248
      %p260 = scmp.eq.s32.totalorder %s30, 3
      %p261 = por %p259, %p260
      %p263 = scmp.ne.s32.totalorder %s248, %s262
      %p264 = scmp.eq.s32.totalorder %s30, 0
      %p265 = por %p263, %p264
      %s266 = ssub.s32 %s31, %s43
      %p267 = scmp.eq.s32.totalorder %s266, 0
      %s269 = sadd.s32 %s268, 1
      %s270 = scalar_select %p267, %s268, %s269
      %p273 = pneg %p267
      %p274 = scmp.eq.s32.totalorder %s24, 3
      %p275 = por %p273, %p274
      %p276 = scmp.ne.s32.totalorder %s268, %s271
      %p277 = scmp.eq.s32.totalorder %s24, 0
      %p278 = por %p276, %p277
      %p279 = scmp.ne.s32.totalorder %s268, %s271
      %p280 = scmp.eq.s32.totalorder %s29, 3
      %p281 = por %p279, %p280
      %p282 = scmp.ne.s32.totalorder %s271, %s272
      %p283 = scmp.eq.s32.totalorder %s29, 0
      %p284 = por %p282, %p283
      %p285 = scmp.ne.s32.totalorder %s271, %s272
      %p286 = scmp.eq.s32.totalorder %s30, 3
      %p287 = por %p285, %p286
      %p289 = scmp.ne.s32.totalorder %s272, %s288
      %p290 = scmp.eq.s32.totalorder %s30, 0
      %p291 = por %p289, %p290
      %p292 = scmp.le.s32.totalorder 1, %s24
      %p293 = scmp.lt.s32.totalorder %s24, 5
      %p294 = pnand %p292, %p293
      %p295 = pneg %p294
      // Predicated region
      $region9: #{encoder_forward.1} parent=5 // pred_check
        _
      $region10: #{encoder_forward.1} parent=5 // pred_check_branch
        %297 = sbr.rel (%p294) target = $region12
      $region11: #{encoder_forward.1} parent=5 // pred_region
        %s298 = ssub.s32 %s24, 1
        // Predicated region
        $region13: #{encoder_forward.1} parent=11 // pred_check
          %p299 = pneg %p57
        $region14: #{encoder_forward.1} parent=11 // pred_check_branch
          %301 = sbr.rel (%p299) target = $region16
        $region15: #{encoder_forward.1} parent=11 // pred_region
          %s303 = ssub.s32 16, 16
          %304 = vsyncadd [#allocation5], %s303
          %307 = dma.hbm_to_smem %s0, 16, [#allocation3], [#allocation5]
        $region16: #{encoder_forward.1} parent=11 // pred_fallthru
          _
        // Predicated region
        $region17: #{encoder_forward.1} parent=11 // pred_check
          %p308 = pneg %p132
        $region18: #{encoder_forward.1} parent=11 // pred_check_branch
          %310 = sbr.rel (%p308) target = $region20
        $region19: #{encoder_forward.1} parent=11 // pred_region
          %s312 = ssub.s32 64, 64
          %313 = vsyncadd [#allocation9], %s312
          %s315 = sshll.u32 [#allocation8], 4
          %s316 = int_to_ptr.vmem [resolvable:$true] %s315
          %318 = dma.hbm_to_vmem [thread:$0]  %s3, 64, %s316, [#allocation9]
        $region20: #{encoder_forward.1} parent=11 // pred_fallthru
          _
        // Predicated region
        $region21: #{encoder_forward.1} parent=11 // pred_check
          %p319 = pneg %p153
        $region22: #{encoder_forward.1} parent=11 // pred_check_branch
          %321 = sbr.rel (%p319) target = $region24
        $region23: #{encoder_forward.1} parent=11 // pred_region
          %s323 = ssub.s32 8192, 8192
          %324 = vsyncadd [#allocation9], %s323
          %s325 = sshll.u32 [#allocation10], 4
          %s326 = int_to_ptr.vmem [resolvable:$true] %s325
          %331 = dma.hbm_to_vmem [thread:$0]  %s4, 8192, %s326, [#allocation9], 128, 128, 8
        $region24: #{encoder_forward.1} parent=11 // pred_fallthru
          _
        // Predicated region
        $region25: #{encoder_forward.1} parent=11 // pred_check
          %p332 = pneg %p174
        $region26: #{encoder_forward.1} parent=11 // pred_check_branch
          %334 = sbr.rel (%p332) target = $region28
        $region27: #{encoder_forward.1} parent=11 // pred_region
          %s336 = ssub.s32 32, 32
          %337 = vsyncadd [#allocation12], %s336
          %s339 = sshll.u32 [#allocation11], 4
          %s340 = int_to_ptr.vmem [resolvable:$true] %s339
          %342 = dma.hbm_to_vmem [thread:$0]  %s5, 32, %s340, [#allocation12]
        $region28: #{encoder_forward.1} parent=11 // pred_fallthru
          _
        // Predicated region
        $region29: #{encoder_forward.1} parent=11 // pred_check
          %p343 = pneg %p195
        $region30: #{encoder_forward.1} parent=11 // pred_check_branch
          %345 = sbr.rel (%p343) target = $region32
        $region31: #{encoder_forward.1} parent=11 // pred_region
          %s347 = ssub.s32 2048, 2048
          %348 = vsyncadd [#allocation12], %s347
          %s349 = sshll.u32 [#allocation13], 4
          %s350 = int_to_ptr.vmem [resolvable:$true] %s349
          %355 = dma.hbm_to_vmem [thread:$0]  %s6, 2048, %s350, [#allocation12], 64, 64, 4
        $region32: #{encoder_forward.1} parent=11 // pred_fallthru
          _
        // Predicated region
        $region33: #{encoder_forward.1} parent=11 // pred_check
          %p356 = pneg %p216
        $region34: #{encoder_forward.1} parent=11 // pred_check_branch
          %358 = sbr.rel (%p356) target = $region36
        $region35: #{encoder_forward.1} parent=11 // pred_region
          %s360 = ssub.s32 16, 16
          %361 = vsyncadd [#allocation15], %s360
          %s363 = sshll.u32 [#allocation14], 4
          %s364 = int_to_ptr.vmem [resolvable:$true] %s363
          %366 = dma.hbm_to_vmem [thread:$0]  %s7, 16, %s364, [#allocation15]
        $region36: #{encoder_forward.1} parent=11 // pred_fallthru
          _
        // Predicated region
        $region37: #{encoder_forward.1} parent=11 // pred_check
          %p367 = pneg %p237
        $region38: #{encoder_forward.1} parent=11 // pred_check_branch
          %369 = sbr.rel (%p367) target = $region40
        $region39: #{encoder_forward.1} parent=11 // pred_region
          %s371 = ssub.s32 1024, 1024
          %372 = vsyncadd [#allocation15], %s371
          %s373 = sshll.u32 [#allocation16], 4
          %s374 = int_to_ptr.vmem [resolvable:$true] %s373
          %379 = dma.hbm_to_vmem [thread:$0]  %s8, 1024, %s374, [#allocation15], 64, 64, 4
        $region40: #{encoder_forward.1} parent=11 // pred_fallthru
          _
        // Predicated region
        $region41: #{encoder_forward.1} parent=11 // pred_check
          %p380 = pneg %p258
        $region42: #{encoder_forward.1} parent=11 // pred_check_branch
          %382 = sbr.rel (%p380) target = $region44
        $region43: #{encoder_forward.1} parent=11 // pred_region
          %s384 = ssub.s32 16, 16
          %385 = vsyncadd [#allocation18], %s384
          %s387 = sshll.u32 [#allocation17], 4
          %s388 = int_to_ptr.vmem [resolvable:$true] %s387
          %390 = dma.hbm_to_vmem [thread:$0]  %s9, 16, %s388, [#allocation18]
        $region44: #{encoder_forward.1} parent=11 // pred_fallthru
          _
      $region12: #{encoder_forward.1} parent=5 // pred_fallthru
        _
      %p391 = scmp.lt.s32.totalorder %s24, 4
      // Predicated region
      $region45: #{encoder_forward.1} parent=5 // pred_check
        %p392 = pneg %p391
      $region46: #{encoder_forward.1} parent=5 // pred_check_branch
        %394 = sbr.rel (%p392) target = $region48
      $region47: #{encoder_forward.1} parent=5 // pred_region
        // Predicated region
        $region49: #{encoder_forward.1} parent=47 // pred_check
          %p395 = pneg %p79
        $region50: #{encoder_forward.1} parent=47 // pred_check_branch
          %397 = sbr.rel (%p395) target = $region52
        $region51: #{encoder_forward.1} parent=47 // pred_region
          %s398 = sand.u32 %s69, 1
          %s399 = sand.u32 %s69, 1
          %s400 = smul.addr %s399, 96
          %s401 = scalar_lea.vmem [#allocation6], %s400
          %s402 = smul.u32 2, %s31
          %s403 = smul.u32 12, %s32
          %s404 = smul.addr %s402, 48
          %s405 = sadd.s32 %s403, %s404
          %s406 = smul.addr %s405, 4
          %s407 = scalar_lea.vmem %s1, %s406
          // Predicated region
          $region53: #{encoder_forward.1} parent=51 // pred_check
            _
          $region54: #{encoder_forward.1} parent=51 // pred_check_branch
            %409 = sbr.rel (0) target = $region56
          $region55: #{encoder_forward.1} parent=51 // pred_region
            // Predicated region
            $region57: #{encoder_forward.1} parent=55 // pred_check
              _
            $region58: #{encoder_forward.1} parent=55 // pred_check_branch
              %411 = sbr.rel (0) target = $region60
            $region59: #{encoder_forward.1} parent=55 // pred_region
              loop: start=0, step=1, limit=1
              $region61: #{encoder_forward.1} parent=59 // loop_pre_header
                _
              $region62: #{encoder_forward.1} parent=59 // loop_header
                %s413 = sphi 0, %s417
                %p414 = scmp.ge.s32.totalorder %s413, 1
                %s418 = sphi %s407, %s407
                %s419 = sphi %s401, %s401
              $region63: #{encoder_forward.1} parent=59 // loop_header_branch
                %416 = sbr.rel (%p414) target = $region67
              $region64: #{encoder_forward.1} parent=59 // loop_body
                %v420 = vld [vmem:[%s418] sm:$0xff]
                %421 = vst [vmem:[%s419] sm:$0xff] %v420
                %v422 = vld [vmem:[%s418 + $0x8] sm:$0xff]
                %423 = vst [vmem:[%s419 + $0x8] sm:$0xff] %v422
                %v424 = vld [vmem:[%s418 + $0x10] sm:$0xff]
                %425 = vst [vmem:[%s419 + $0x10] sm:$0xff] %v424
                %v426 = vld [vmem:[%s418 + $0x18] sm:$0xff]
                %427 = vst [vmem:[%s419 + $0x18] sm:$0xff] %v426
                %v428 = vld [vmem:[%s418 + $0x20] sm:$0xff]
                %429 = vst [vmem:[%s419 + $0x20] sm:$0xff] %v428
                %v430 = vld [vmem:[%s418 + $0x28] sm:$0xff]
                %431 = vst [vmem:[%s419 + $0x28] sm:$0xff] %v430
                %v432 = vld [vmem:[%s418 + $0xc0] sm:$0xff]
                %433 = vst [vmem:[%s419 + $0x30] sm:$0xff] %v432
                %v434 = vld [vmem:[%s418 + $0xc8] sm:$0xff]
                %435 = vst [vmem:[%s419 + $0x38] sm:$0xff] %v434
                %v436 = vld [vmem:[%s418 + $0xd0] sm:$0xff]
                %437 = vst [vmem:[%s419 + $0x40] sm:$0xff] %v436
                %v438 = vld [vmem:[%s418 + $0xd8] sm:$0xff]
                %439 = vst [vmem:[%s419 + $0x48] sm:$0xff] %v438
                %v440 = vld [vmem:[%s418 + $0xe0] sm:$0xff]
                %441 = vst [vmem:[%s419 + $0x50] sm:$0xff] %v440
                %v442 = vld [vmem:[%s418 + $0xe8] sm:$0xff]
                %443 = vst [vmem:[%s419 + $0x58] sm:$0xff] %v442
              $region65: #{encoder_forward.1} parent=59 // loop_footer
                %s417 = sadd.s32 1, %s413
              $region66: #{encoder_forward.1} parent=59 // loop_footer_branch
                %412 = sbr.rel target = $region62
              $region67: #{encoder_forward.1} parent=59 // loop_exit
                _
            $region60: #{encoder_forward.1} parent=55 // pred_fallthru
              _
            // Predicated region
            $region68: #{encoder_forward.1} parent=55 // pred_check
              _
            $region69: #{encoder_forward.1} parent=55 // pred_check_branch
              %445 = sbr.rel target = $region71
            $region70: #{encoder_forward.1} parent=55 // pred_region
              _
            $region71: #{encoder_forward.1} parent=55 // pred_fallthru
              _
          $region56: #{encoder_forward.1} parent=51 // pred_fallthru
            _
          %446 = vnop
        $region52: #{encoder_forward.1} parent=47 // pred_fallthru
          _
        // Predicated region
        $region72: #{encoder_forward.1} parent=47 // pred_check
          %p447 = pneg %p105
        $region73: #{encoder_forward.1} parent=47 // pred_check_branch
          %449 = sbr.rel (%p447) target = $region75
        $region74: #{encoder_forward.1} parent=47 // pred_region
          %s450 = sand.u32 %s95, 1
          %s451 = scalar_lea.sflag [#allocation4], %s450
          %s452 = sand.u32 %s95, 1
          %s453 = smul.addr %s452, 3072
          %s454 = scalar_lea.vmem [#allocation7], %s453
          %s455 = smul.u32 192, %s32
          %s457 = ssub.s32 49152, 49152
          %458 = vsyncadd %s451, %s457
          %s459 = smul.addr %s455, 4
          %s460 = smul.addr %s459, 64
          %s461 = scalar_lea.hbm %s2, %s460
          %s462 = sshll.u32 %s454, 4
          %s463 = int_to_ptr.vmem [resolvable:$true] %s462
          %468 = dma.hbm_to_vmem [thread:$0]  %s461, 49152, %s463, %s451, 256, 256, 16
        $region75: #{encoder_forward.1} parent=47 // pred_fallthru
          _
      $region48: #{encoder_forward.1} parent=5 // pred_fallthru
        _
      %p469 = scmp.le.s32.totalorder 1, %s24
      %p470 = scmp.lt.s32.totalorder %s24, 5
      %p471 = pnand %p469, %p470
      %p472 = pneg %p471
      // Predicated region
      $region76: #{encoder_forward.1} parent=5 // pred_check
        _
      $region77: #{encoder_forward.1} parent=5 // pred_check_branch
        %474 = sbr.rel (%p471) target = $region79
      $region78: #{encoder_forward.1} parent=5 // pred_region
        %s475 = ssub.s32 %s24, 1
        // Predicated region
        $region80: #{encoder_forward.1} parent=78 // pred_check
          %p476 = pneg %p57
        $region81: #{encoder_forward.1} parent=78 // pred_check_branch
          %478 = sbr.rel (%p476) target = $region83
        $region82: #{encoder_forward.1} parent=78 // pred_region
          %479 = dma.done [#allocation5], 16
        $region83: #{encoder_forward.1} parent=78 // pred_fallthru
          _
        %s480 = sand.u32 %s72, 1
        %s481 = sand.u32 %s72, 1
        %s482 = smul.addr %s481, 96
        %s483 = scalar_lea.vmem [#allocation6], %s482
        // Predicated region
        $region84: #{encoder_forward.1} parent=78 // pred_check
          %p484 = pneg %p85
        $region85: #{encoder_forward.1} parent=78 // pred_check_branch
          %486 = sbr.rel (%p484) target = $region87
        $region86: #{encoder_forward.1} parent=78 // pred_region
          _
        $region87: #{encoder_forward.1} parent=78 // pred_fallthru
          _
        %s487 = sand.u32 %s98, 1
        %s488 = scalar_lea.sflag [#allocation4], %s487
        %s489 = sand.u32 %s98, 1
        %s490 = smul.addr %s489, 3072
        %s491 = scalar_lea.vmem [#allocation7], %s490
        // Predicated region
        $region88: #{encoder_forward.1} parent=78 // pred_check
          %p492 = pneg %p111
        $region89: #{encoder_forward.1} parent=78 // pred_check_branch
          %494 = sbr.rel (%p492) target = $region91
        $region90: #{encoder_forward.1} parent=78 // pred_region
          %495 = dma.done %s488, 49152
        $region91: #{encoder_forward.1} parent=78 // pred_fallthru
          _
        // Predicated region
        $region92: #{encoder_forward.1} parent=78 // pred_check
          %p496 = pneg %p132
        $region93: #{encoder_forward.1} parent=78 // pred_check_branch
          %498 = sbr.rel (%p496) target = $region95
        $region94: #{encoder_forward.1} parent=78 // pred_region
          %499 = dma.done [#allocation9], 64
        $region95: #{encoder_forward.1} parent=78 // pred_fallthru
          _
        // Predicated region
        $region96: #{encoder_forward.1} parent=78 // pred_check
          %p500 = pneg %p153
        $region97: #{encoder_forward.1} parent=78 // pred_check_branch
          %502 = sbr.rel (%p500) target = $region99
        $region98: #{encoder_forward.1} parent=78 // pred_region
          %503 = dma.done [#allocation9], 8192
        $region99: #{encoder_forward.1} parent=78 // pred_fallthru
          _
        // Predicated region
        $region100: #{encoder_forward.1} parent=78 // pred_check
          %p504 = pneg %p174
        $region101: #{encoder_forward.1} parent=78 // pred_check_branch
          %506 = sbr.rel (%p504) target = $region103
        $region102: #{encoder_forward.1} parent=78 // pred_region
          %507 = dma.done [#allocation12], 32
        $region103: #{encoder_forward.1} parent=78 // pred_fallthru
          _
        // Predicated region
        $region104: #{encoder_forward.1} parent=78 // pred_check
          %p508 = pneg %p195
        $region105: #{encoder_forward.1} parent=78 // pred_check_branch
          %510 = sbr.rel (%p508) target = $region107
        $region106: #{encoder_forward.1} parent=78 // pred_region
          %511 = dma.done [#allocation12], 2048
        $region107: #{encoder_forward.1} parent=78 // pred_fallthru
          _
        // Predicated region
        $region108: #{encoder_forward.1} parent=78 // pred_check
          %p512 = pneg %p216
        $region109: #{encoder_forward.1} parent=78 // pred_check_branch
          %514 = sbr.rel (%p512) target = $region111
        $region110: #{encoder_forward.1} parent=78 // pred_region
          %515 = dma.done [#allocation15], 16
        $region111: #{encoder_forward.1} parent=78 // pred_fallthru
          _
        // Predicated region
        $region112: #{encoder_forward.1} parent=78 // pred_check
          %p516 = pneg %p237
        $region113: #{encoder_forward.1} parent=78 // pred_check_branch
          %518 = sbr.rel (%p516) target = $region115
        $region114: #{encoder_forward.1} parent=78 // pred_region
          %519 = dma.done [#allocation15], 1024
        $region115: #{encoder_forward.1} parent=78 // pred_fallthru
          _
        // Predicated region
        $region116: #{encoder_forward.1} parent=78 // pred_check
          %p520 = pneg %p258
        $region117: #{encoder_forward.1} parent=78 // pred_check_branch
          %522 = sbr.rel (%p520) target = $region119
        $region118: #{encoder_forward.1} parent=78 // pred_region
          %523 = dma.done [#allocation18], 16
        $region119: #{encoder_forward.1} parent=78 // pred_fallthru
          _
        %524 = sfence
        %p525 = pneg %p57
        %p526 = pneg %p54
        %s527 = sand.u32 %s72, 1
        %s528 = sand.u32 %s72, 1
        %s529 = smul.addr %s528, 96
        %s530 = scalar_lea.vmem [#allocation6], %s529
        %p531 = pneg %p85
        %p532 = pneg %p82
        %s533 = sand.u32 %s98, 1
        %s534 = scalar_lea.sflag [#allocation4], %s533
        %s535 = sand.u32 %s98, 1
        %s536 = smul.addr %s535, 3072
        %s537 = scalar_lea.vmem [#allocation7], %s536
        %p538 = pneg %p111
        %p539 = pneg %p108
        %p540 = pneg %p132
        %p541 = pneg %p129
        %p542 = pneg %p153
        %p543 = pneg %p150
        %p544 = pneg %p174
        %p545 = pneg %p171
        %p546 = pneg %p195
        %p547 = pneg %p192
        %p548 = pneg %p216
        %p549 = pneg %p213
        %p550 = pneg %p237
        %p551 = pneg %p234
        %p552 = pneg %p258
        %p553 = pneg %p255
        %p554 = pneg %p284
        %p555 = pneg %p281
        %s556 = smul.u32 2, %s33
        %p557 = scmp.lt.s32.totalorder %s556, 1
        %s558 = scalar_select %p557, %s556, 1
        %s559 = smul.addr %s558, 8
        %s560 = scalar_lea.vmem %s10, %s559
        %s561 = smul.u32 2, %s33
        %s562 = smul.u32 12, %s34
        %s563 = smul.u32 192, %s34
        %s564 = smul.u32 2, %s33
        %p565 = scmp.lt.s32.totalorder %s564, 1
        %s566 = scalar_select %p565, %s564, 1
        %s567 = smul.addr %s566, 8
        %s568 = scalar_lea.vmem %s10, %s567
        %s569 = smul.u32 2, %s33
        %p571 = scmp.eq.s32.totalorder %s34, 0
        // Predicated region
        $region120: #{encoder_forward.1} parent=78 // pred_check
          %p572 = pneg %p571
        $region121: #{encoder_forward.1} parent=78 // pred_check_branch
          %574 = sbr.rel (%p572) target = $region123
        $region122: #{encoder_forward.1} parent=78 // pred_region
          %575 = vst [vmem:[#allocation2] sm:$0xff] 0.0
          %576 = vst [vmem:[#allocation2 + $0x8] sm:$0xff] 0.0
          %577 = vst [vmem:[#allocation2 + $0x10] sm:$0xff] 0.0
          %578 = vst [vmem:[#allocation2 + $0x18] sm:$0xff] 0.0
          %579 = vst [vmem:[#allocation2 + $0x20] sm:$0xff] 0.0
          %580 = vst [vmem:[#allocation2 + $0x28] sm:$0xff] 0.0
          %581 = vst [vmem:[#allocation2 + $0x30] sm:$0xff] 0.0
          %582 = vst [vmem:[#allocation2 + $0x38] sm:$0xff] 0.0
        $region123: #{encoder_forward.1} parent=78 // pred_fallthru
          _
        %v583 = vld [vmem:[#allocation2] sm:$0xff]
        %v584 = vld [vmem:[#allocation2 + $0x8] sm:$0xff]
        %v585 = vld [vmem:[#allocation2 + $0x10] sm:$0xff]
        %v586 = vld [vmem:[#allocation2 + $0x18] sm:$0xff]
        %v587 = vld [vmem:[#allocation2 + $0x20] sm:$0xff]
        %v588 = vld [vmem:[#allocation2 + $0x28] sm:$0xff]
        %v589 = vld [vmem:[#allocation2 + $0x30] sm:$0xff]
        %v590 = vld [vmem:[#allocation2 + $0x38] sm:$0xff]
        %v591 = vld [vmem:[%s483] sm:$0xff]
        %v592 = vld [vmem:[%s483 + $0x8] sm:$0xff]
        %v593 = vld [vmem:[%s483 + $0x10] sm:$0xff]
        %v594 = vld [vmem:[%s483 + $0x18] sm:$0xff]
        %v595 = vld [vmem:[%s483 + $0x20] sm:$0xff]
        %v596 = vld [vmem:[%s483 + $0x28] sm:$0xff]
        %v597 = vld [vmem:[%s483 + $0x30] sm:$0xff]
        %v598 = vld [vmem:[%s483 + $0x38] sm:$0xff]
        %v599 = vld [vmem:[%s483 + $0x40] sm:$0xff]
        %v600 = vld [vmem:[%s483 + $0x48] sm:$0xff]
        %v601 = vld [vmem:[%s483 + $0x50] sm:$0xff]
        %v602 = vld [vmem:[%s483 + $0x58] sm:$0xff]
        %v603 = vld [vmem:[%s491] sm:$0xff]
        %v604 = vld [vmem:[%s491 + $0x8] sm:$0xff]
        %v605 = vld [vmem:[%s491 + $0x10] sm:$0xff]
        %v606 = vld [vmem:[%s491 + $0x18] sm:$0xff]
        %v607 = vld [vmem:[%s491 + $0x20] sm:$0xff]
        %v608 = vld [vmem:[%s491 + $0x28] sm:$0xff]
        %v609 = vld [vmem:[%s491 + $0x30] sm:$0xff]
        %v610 = vld [vmem:[%s491 + $0x38] sm:$0xff]
        %v611 = vld [vmem:[%s491 + $0x40] sm:$0xff]
        %v612 = vld [vmem:[%s491 + $0x48] sm:$0xff]
        %v613 = vld [vmem:[%s491 + $0x50] sm:$0xff]
        %v614 = vld [vmem:[%s491 + $0x58] sm:$0xff]
        %v615 = vld [vmem:[%s491 + $0x60] sm:$0xff]
        %v616 = vld [vmem:[%s491 + $0x68] sm:$0xff]
        %v617 = vld [vmem:[%s491 + $0x70] sm:$0xff]
        %v618 = vld [vmem:[%s491 + $0x78] sm:$0xff]
        %v619 = vld [vmem:[%s491 + $0x80] sm:$0xff]
        %v620 = vld [vmem:[%s491 + $0x88] sm:$0xff]
        %v621 = vld [vmem:[%s491 + $0x90] sm:$0xff]
        %v622 = vld [vmem:[%s491 + $0x98] sm:$0xff]
        %v623 = vld [vmem:[%s491 + $0xa0] sm:$0xff]
        %v624 = vld [vmem:[%s491 + $0xa8] sm:$0xff]
        %v625 = vld [vmem:[%s491 + $0xb0] sm:$0xff]
        %v626 = vld [vmem:[%s491 + $0xb8] sm:$0xff]
        %v627 = vld [vmem:[%s491 + $0xc0] sm:$0xff]
        %v628 = vld [vmem:[%s491 + $0xc8] sm:$0xff]
        %v629 = vld [vmem:[%s491 + $0xd0] sm:$0xff]
        %v630 = vld [vmem:[%s491 + $0xd8] sm:$0xff]
        %v631 = vld [vmem:[%s491 + $0xe0] sm:$0xff]
        %v632 = vld [vmem:[%s491 + $0xe8] sm:$0xff]
        %v633 = vld [vmem:[%s491 + $0xf0] sm:$0xff]
        %v634 = vld [vmem:[%s491 + $0xf8] sm:$0xff]
        %v635 = vld [vmem:[%s491 + $0x100] sm:$0xff]
        %v636 = vld [vmem:[%s491 + $0x108] sm:$0xff]
        %v637 = vld [vmem:[%s491 + $0x110] sm:$0xff]
        %v638 = vld [vmem:[%s491 + $0x118] sm:$0xff]
        %v639 = vld [vmem:[%s491 + $0x120] sm:$0xff]
        %v640 = vld [vmem:[%s491 + $0x128] sm:$0xff]
        %v641 = vld [vmem:[%s491 + $0x130] sm:$0xff]
        %v642 = vld [vmem:[%s491 + $0x138] sm:$0xff]
        %v643 = vld [vmem:[%s491 + $0x140] sm:$0xff]
        %v644 = vld [vmem:[%s491 + $0x148] sm:$0xff]
        %v645 = vld [vmem:[%s491 + $0x150] sm:$0xff]
        %v646 = vld [vmem:[%s491 + $0x158] sm:$0xff]
        %v647 = vld [vmem:[%s491 + $0x160] sm:$0xff]
        %v648 = vld [vmem:[%s491 + $0x168] sm:$0xff]
        %v649 = vld [vmem:[%s491 + $0x170] sm:$0xff]
        %v650 = vld [vmem:[%s491 + $0x178] sm:$0xff]
        %v651 = vld [vmem:[%s491 + $0x180] sm:$0xff]
        %v652 = vld [vmem:[%s491 + $0x188] sm:$0xff]
        %v653 = vld [vmem:[%s491 + $0x190] sm:$0xff]
        %v654 = vld [vmem:[%s491 + $0x198] sm:$0xff]
        %v655 = vld [vmem:[%s491 + $0x1a0] sm:$0xff]
        %v656 = vld [vmem:[%s491 + $0x1a8] sm:$0xff]
        %v657 = vld [vmem:[%s491 + $0x1b0] sm:$0xff]
        %v658 = vld [vmem:[%s491 + $0x1b8] sm:$0xff]
        %v659 = vld [vmem:[%s491 + $0x1c0] sm:$0xff]
        %v660 = vld [vmem:[%s491 + $0x1c8] sm:$0xff]
        %v661 = vld [vmem:[%s491 + $0x1d0] sm:$0xff]
        %v662 = vld [vmem:[%s491 + $0x1d8] sm:$0xff]
        %v663 = vld [vmem:[%s491 + $0x1e0] sm:$0xff]
        %v664 = vld [vmem:[%s491 + $0x1e8] sm:$0xff]
        %v665 = vld [vmem:[%s491 + $0x1f0] sm:$0xff]
        %v666 = vld [vmem:[%s491 + $0x1f8] sm:$0xff]
        %v667 = vld [vmem:[%s491 + $0x200] sm:$0xff]
        %v668 = vld [vmem:[%s491 + $0x208] sm:$0xff]
        %v669 = vld [vmem:[%s491 + $0x210] sm:$0xff]
        %v670 = vld [vmem:[%s491 + $0x218] sm:$0xff]
        %v671 = vld [vmem:[%s491 + $0x220] sm:$0xff]
        %v672 = vld [vmem:[%s491 + $0x228] sm:$0xff]
        %v673 = vld [vmem:[%s491 + $0x230] sm:$0xff]
        %v674 = vld [vmem:[%s491 + $0x238] sm:$0xff]
        %v675 = vld [vmem:[%s491 + $0x240] sm:$0xff]
        %v676 = vld [vmem:[%s491 + $0x248] sm:$0xff]
        %v677 = vld [vmem:[%s491 + $0x250] sm:$0xff]
        %v678 = vld [vmem:[%s491 + $0x258] sm:$0xff]
        %v679 = vld [vmem:[%s491 + $0x260] sm:$0xff]
        %v680 = vld [vmem:[%s491 + $0x268] sm:$0xff]
        %v681 = vld [vmem:[%s491 + $0x270] sm:$0xff]
        %v682 = vld [vmem:[%s491 + $0x278] sm:$0xff]
        %v683 = vld [vmem:[%s491 + $0x280] sm:$0xff]
        %v684 = vld [vmem:[%s491 + $0x288] sm:$0xff]
        %v685 = vld [vmem:[%s491 + $0x290] sm:$0xff]
        %v686 = vld [vmem:[%s491 + $0x298] sm:$0xff]
        %v687 = vld [vmem:[%s491 + $0x2a0] sm:$0xff]
        %v688 = vld [vmem:[%s491 + $0x2a8] sm:$0xff]
        %v689 = vld [vmem:[%s491 + $0x2b0] sm:$0xff]
        %v690 = vld [vmem:[%s491 + $0x2b8] sm:$0xff]
        %v691 = vld [vmem:[%s491 + $0x2c0] sm:$0xff]
        %v692 = vld [vmem:[%s491 + $0x2c8] sm:$0xff]
        %v693 = vld [vmem:[%s491 + $0x2d0] sm:$0xff]
        %v694 = vld [vmem:[%s491 + $0x2d8] sm:$0xff]
        %v695 = vld [vmem:[%s491 + $0x2e0] sm:$0xff]
        %v696 = vld [vmem:[%s491 + $0x2e8] sm:$0xff]
        %v697 = vld [vmem:[%s491 + $0x2f0] sm:$0xff]
        %v698 = vld [vmem:[%s491 + $0x2f8] sm:$0xff]
        %v699 = vld [vmem:[%s491 + $0x300] sm:$0xff]
        %v700 = vld [vmem:[%s491 + $0x308] sm:$0xff]
        %v701 = vld [vmem:[%s491 + $0x310] sm:$0xff]
        %v702 = vld [vmem:[%s491 + $0x318] sm:$0xff]
        %v703 = vld [vmem:[%s491 + $0x320] sm:$0xff]
        %v704 = vld [vmem:[%s491 + $0x328] sm:$0xff]
        %v705 = vld [vmem:[%s491 + $0x330] sm:$0xff]
        %v706 = vld [vmem:[%s491 + $0x338] sm:$0xff]
        %v707 = vld [vmem:[%s491 + $0x340] sm:$0xff]
        %v708 = vld [vmem:[%s491 + $0x348] sm:$0xff]
        %v709 = vld [vmem:[%s491 + $0x350] sm:$0xff]
        %v710 = vld [vmem:[%s491 + $0x358] sm:$0xff]
        %v711 = vld [vmem:[%s491 + $0x360] sm:$0xff]
        %v712 = vld [vmem:[%s491 + $0x368] sm:$0xff]
        %v713 = vld [vmem:[%s491 + $0x370] sm:$0xff]
        %v714 = vld [vmem:[%s491 + $0x378] sm:$0xff]
        %v715 = vld [vmem:[%s491 + $0x380] sm:$0xff]
        %v716 = vld [vmem:[%s491 + $0x388] sm:$0xff]
        %v717 = vld [vmem:[%s491 + $0x390] sm:$0xff]
        %v718 = vld [vmem:[%s491 + $0x398] sm:$0xff]
        %v719 = vld [vmem:[%s491 + $0x3a0] sm:$0xff]
        %v720 = vld [vmem:[%s491 + $0x3a8] sm:$0xff]
        %v721 = vld [vmem:[%s491 + $0x3b0] sm:$0xff]
        %v722 = vld [vmem:[%s491 + $0x3b8] sm:$0xff]
        %v723 = vld [vmem:[%s491 + $0x3c0] sm:$0xff]
        %v724 = vld [vmem:[%s491 + $0x3c8] sm:$0xff]
        %v725 = vld [vmem:[%s491 + $0x3d0] sm:$0xff]
        %v726 = vld [vmem:[%s491 + $0x3d8] sm:$0xff]
        %v727 = vld [vmem:[%s491 + $0x3e0] sm:$0xff]
        %v728 = vld [vmem:[%s491 + $0x3e8] sm:$0xff]
        %v729 = vld [vmem:[%s491 + $0x3f0] sm:$0xff]
        %v730 = vld [vmem:[%s491 + $0x3f8] sm:$0xff]
        %v731 = vld [vmem:[%s491 + $0x400] sm:$0xff]
        %v732 = vld [vmem:[%s491 + $0x408] sm:$0xff]
        %v733 = vld [vmem:[%s491 + $0x410] sm:$0xff]
        %v734 = vld [vmem:[%s491 + $0x418] sm:$0xff]
        %v735 = vld [vmem:[%s491 + $0x420] sm:$0xff]
        %v736 = vld [vmem:[%s491 + $0x428] sm:$0xff]
        %v737 = vld [vmem:[%s491 + $0x430] sm:$0xff]
        %v738 = vld [vmem:[%s491 + $0x438] sm:$0xff]
        %v739 = vld [vmem:[%s491 + $0x440] sm:$0xff]
        %v740 = vld [vmem:[%s491 + $0x448] sm:$0xff]
        %v741 = vld [vmem:[%s491 + $0x450] sm:$0xff]
        %v742 = vld [vmem:[%s491 + $0x458] sm:$0xff]
        %v743 = vld [vmem:[%s491 + $0x460] sm:$0xff]
        %v744 = vld [vmem:[%s491 + $0x468] sm:$0xff]
        %v745 = vld [vmem:[%s491 + $0x470] sm:$0xff]
        %v746 = vld [vmem:[%s491 + $0x478] sm:$0xff]
        %v747 = vld [vmem:[%s491 + $0x480] sm:$0xff]
        %v748 = vld [vmem:[%s491 + $0x488] sm:$0xff]
        %v749 = vld [vmem:[%s491 + $0x490] sm:$0xff]
        %v750 = vld [vmem:[%s491 + $0x498] sm:$0xff]
        %v751 = vld [vmem:[%s491 + $0x4a0] sm:$0xff]
        %v752 = vld [vmem:[%s491 + $0x4a8] sm:$0xff]
        %v753 = vld [vmem:[%s491 + $0x4b0] sm:$0xff]
        %v754 = vld [vmem:[%s491 + $0x4b8] sm:$0xff]
        %v755 = vld [vmem:[%s491 + $0x4c0] sm:$0xff]
        %v756 = vld [vmem:[%s491 + $0x4c8] sm:$0xff]
        %v757 = vld [vmem:[%s491 + $0x4d0] sm:$0xff]
        %v758 = vld [vmem:[%s491 + $0x4d8] sm:$0xff]
        %v759 = vld [vmem:[%s491 + $0x4e0] sm:$0xff]
        %v760 = vld [vmem:[%s491 + $0x4e8] sm:$0xff]
        %v761 = vld [vmem:[%s491 + $0x4f0] sm:$0xff]
        %v762 = vld [vmem:[%s491 + $0x4f8] sm:$0xff]
        %v763 = vld [vmem:[%s491 + $0x500] sm:$0xff]
        %v764 = vld [vmem:[%s491 + $0x508] sm:$0xff]
        %v765 = vld [vmem:[%s491 + $0x510] sm:$0xff]
        %v766 = vld [vmem:[%s491 + $0x518] sm:$0xff]
        %v767 = vld [vmem:[%s491 + $0x520] sm:$0xff]
        %v768 = vld [vmem:[%s491 + $0x528] sm:$0xff]
        %v769 = vld [vmem:[%s491 + $0x530] sm:$0xff]
        %v770 = vld [vmem:[%s491 + $0x538] sm:$0xff]
        %v771 = vld [vmem:[%s491 + $0x540] sm:$0xff]
        %v772 = vld [vmem:[%s491 + $0x548] sm:$0xff]
        %v773 = vld [vmem:[%s491 + $0x550] sm:$0xff]
        %v774 = vld [vmem:[%s491 + $0x558] sm:$0xff]
        %v775 = vld [vmem:[%s491 + $0x560] sm:$0xff]
        %v776 = vld [vmem:[%s491 + $0x568] sm:$0xff]
        %v777 = vld [vmem:[%s491 + $0x570] sm:$0xff]
        %v778 = vld [vmem:[%s491 + $0x578] sm:$0xff]
        %v779 = vld [vmem:[%s491 + $0x580] sm:$0xff]
        %v780 = vld [vmem:[%s491 + $0x588] sm:$0xff]
        %v781 = vld [vmem:[%s491 + $0x590] sm:$0xff]
        %v782 = vld [vmem:[%s491 + $0x598] sm:$0xff]
        %v783 = vld [vmem:[%s491 + $0x5a0] sm:$0xff]
        %v784 = vld [vmem:[%s491 + $0x5a8] sm:$0xff]
        %v785 = vld [vmem:[%s491 + $0x5b0] sm:$0xff]
        %v786 = vld [vmem:[%s491 + $0x5b8] sm:$0xff]
        %v787 = vld [vmem:[%s491 + $0x5c0] sm:$0xff]
        %v788 = vld [vmem:[%s491 + $0x5c8] sm:$0xff]
        %v789 = vld [vmem:[%s491 + $0x5d0] sm:$0xff]
        %v790 = vld [vmem:[%s491 + $0x5d8] sm:$0xff]
        %v791 = vld [vmem:[%s491 + $0x5e0] sm:$0xff]
        %v792 = vld [vmem:[%s491 + $0x5e8] sm:$0xff]
        %v793 = vld [vmem:[%s491 + $0x5f0] sm:$0xff]
        %v794 = vld [vmem:[%s491 + $0x5f8] sm:$0xff]
        %v795 = vld [vmem:[%s491 + $0x600] sm:$0xff]
        %v796 = vld [vmem:[%s491 + $0x608] sm:$0xff]
        %v797 = vld [vmem:[%s491 + $0x610] sm:$0xff]
        %v798 = vld [vmem:[%s491 + $0x618] sm:$0xff]
        %v799 = vld [vmem:[%s491 + $0x620] sm:$0xff]
        %v800 = vld [vmem:[%s491 + $0x628] sm:$0xff]
        %v801 = vld [vmem:[%s491 + $0x630] sm:$0xff]
        %v802 = vld [vmem:[%s491 + $0x638] sm:$0xff]
        %v803 = vld [vmem:[%s491 + $0x640] sm:$0xff]
        %v804 = vld [vmem:[%s491 + $0x648] sm:$0xff]
        %v805 = vld [vmem:[%s491 + $0x650] sm:$0xff]
        %v806 = vld [vmem:[%s491 + $0x658] sm:$0xff]
        %v807 = vld [vmem:[%s491 + $0x660] sm:$0xff]
        %v808 = vld [vmem:[%s491 + $0x668] sm:$0xff]
        %v809 = vld [vmem:[%s491 + $0x670] sm:$0xff]
        %v810 = vld [vmem:[%s491 + $0x678] sm:$0xff]
        %v811 = vld [vmem:[%s491 + $0x680] sm:$0xff]
        %v812 = vld [vmem:[%s491 + $0x688] sm:$0xff]
        %v813 = vld [vmem:[%s491 + $0x690] sm:$0xff]
        %v814 = vld [vmem:[%s491 + $0x698] sm:$0xff]
        %v815 = vld [vmem:[%s491 + $0x6a0] sm:$0xff]
        %v816 = vld [vmem:[%s491 + $0x6a8] sm:$0xff]
        %v817 = vld [vmem:[%s491 + $0x6b0] sm:$0xff]
        %v818 = vld [vmem:[%s491 + $0x6b8] sm:$0xff]
        %v819 = vld [vmem:[%s491 + $0x6c0] sm:$0xff]
        %v820 = vld [vmem:[%s491 + $0x6c8] sm:$0xff]
        %v821 = vld [vmem:[%s491 + $0x6d0] sm:$0xff]
        %v822 = vld [vmem:[%s491 + $0x6d8] sm:$0xff]
        %v823 = vld [vmem:[%s491 + $0x6e0] sm:$0xff]
        %v824 = vld [vmem:[%s491 + $0x6e8] sm:$0xff]
        %v825 = vld [vmem:[%s491 + $0x6f0] sm:$0xff]
        %v826 = vld [vmem:[%s491 + $0x6f8] sm:$0xff]
        %v827 = vld [vmem:[%s491 + $0x700] sm:$0xff]
        %v828 = vld [vmem:[%s491 + $0x708] sm:$0xff]
        %v829 = vld [vmem:[%s491 + $0x710] sm:$0xff]
        %v830 = vld [vmem:[%s491 + $0x718] sm:$0xff]
        %v831 = vld [vmem:[%s491 + $0x720] sm:$0xff]
        %v832 = vld [vmem:[%s491 + $0x728] sm:$0xff]
        %v833 = vld [vmem:[%s491 + $0x730] sm:$0xff]
        %v834 = vld [vmem:[%s491 + $0x738] sm:$0xff]
        %v835 = vld [vmem:[%s491 + $0x740] sm:$0xff]
        %v836 = vld [vmem:[%s491 + $0x748] sm:$0xff]
        %v837 = vld [vmem:[%s491 + $0x750] sm:$0xff]
        %v838 = vld [vmem:[%s491 + $0x758] sm:$0xff]
        %v839 = vld [vmem:[%s491 + $0x760] sm:$0xff]
        %v840 = vld [vmem:[%s491 + $0x768] sm:$0xff]
        %v841 = vld [vmem:[%s491 + $0x770] sm:$0xff]
        %v842 = vld [vmem:[%s491 + $0x778] sm:$0xff]
        %v843 = vld [vmem:[%s491 + $0x780] sm:$0xff]
        %v844 = vld [vmem:[%s491 + $0x788] sm:$0xff]
        %v845 = vld [vmem:[%s491 + $0x790] sm:$0xff]
        %v846 = vld [vmem:[%s491 + $0x798] sm:$0xff]
        %v847 = vld [vmem:[%s491 + $0x7a0] sm:$0xff]
        %v848 = vld [vmem:[%s491 + $0x7a8] sm:$0xff]
        %v849 = vld [vmem:[%s491 + $0x7b0] sm:$0xff]
        %v850 = vld [vmem:[%s491 + $0x7b8] sm:$0xff]
        %v851 = vld [vmem:[%s491 + $0x7c0] sm:$0xff]
        %v852 = vld [vmem:[%s491 + $0x7c8] sm:$0xff]
        %v853 = vld [vmem:[%s491 + $0x7d0] sm:$0xff]
        %v854 = vld [vmem:[%s491 + $0x7d8] sm:$0xff]
        %v855 = vld [vmem:[%s491 + $0x7e0] sm:$0xff]
        %v856 = vld [vmem:[%s491 + $0x7e8] sm:$0xff]
        %v857 = vld [vmem:[%s491 + $0x7f0] sm:$0xff]
        %v858 = vld [vmem:[%s491 + $0x7f8] sm:$0xff]
        %v859 = vld [vmem:[%s491 + $0x800] sm:$0xff]
        %v860 = vld [vmem:[%s491 + $0x808] sm:$0xff]
        %v861 = vld [vmem:[%s491 + $0x810] sm:$0xff]
        %v862 = vld [vmem:[%s491 + $0x818] sm:$0xff]
        %v863 = vld [vmem:[%s491 + $0x820] sm:$0xff]
        %v864 = vld [vmem:[%s491 + $0x828] sm:$0xff]
        %v865 = vld [vmem:[%s491 + $0x830] sm:$0xff]
        %v866 = vld [vmem:[%s491 + $0x838] sm:$0xff]
        %v867 = vld [vmem:[%s491 + $0x840] sm:$0xff]
        %v868 = vld [vmem:[%s491 + $0x848] sm:$0xff]
        %v869 = vld [vmem:[%s491 + $0x850] sm:$0xff]
        %v870 = vld [vmem:[%s491 + $0x858] sm:$0xff]
        %v871 = vld [vmem:[%s491 + $0x860] sm:$0xff]
        %v872 = vld [vmem:[%s491 + $0x868] sm:$0xff]
        %v873 = vld [vmem:[%s491 + $0x870] sm:$0xff]
        %v874 = vld [vmem:[%s491 + $0x878] sm:$0xff]
        %v875 = vld [vmem:[%s491 + $0x880] sm:$0xff]
        %v876 = vld [vmem:[%s491 + $0x888] sm:$0xff]
        %v877 = vld [vmem:[%s491 + $0x890] sm:$0xff]
        %v878 = vld [vmem:[%s491 + $0x898] sm:$0xff]
        %v879 = vld [vmem:[%s491 + $0x8a0] sm:$0xff]
        %v880 = vld [vmem:[%s491 + $0x8a8] sm:$0xff]
        %v881 = vld [vmem:[%s491 + $0x8b0] sm:$0xff]
        %v882 = vld [vmem:[%s491 + $0x8b8] sm:$0xff]
        %v883 = vld [vmem:[%s491 + $0x8c0] sm:$0xff]
        %v884 = vld [vmem:[%s491 + $0x8c8] sm:$0xff]
        %v885 = vld [vmem:[%s491 + $0x8d0] sm:$0xff]
        %v886 = vld [vmem:[%s491 + $0x8d8] sm:$0xff]
        %v887 = vld [vmem:[%s491 + $0x8e0] sm:$0xff]
        %v888 = vld [vmem:[%s491 + $0x8e8] sm:$0xff]
        %v889 = vld [vmem:[%s491 + $0x8f0] sm:$0xff]
        %v890 = vld [vmem:[%s491 + $0x8f8] sm:$0xff]
        %v891 = vld [vmem:[%s491 + $0x900] sm:$0xff]
        %v892 = vld [vmem:[%s491 + $0x908] sm:$0xff]
        %v893 = vld [vmem:[%s491 + $0x910] sm:$0xff]
        %v894 = vld [vmem:[%s491 + $0x918] sm:$0xff]
        %v895 = vld [vmem:[%s491 + $0x920] sm:$0xff]
        %v896 = vld [vmem:[%s491 + $0x928] sm:$0xff]
        %v897 = vld [vmem:[%s491 + $0x930] sm:$0xff]
        %v898 = vld [vmem:[%s491 + $0x938] sm:$0xff]
        %v899 = vld [vmem:[%s491 + $0x940] sm:$0xff]
        %v900 = vld [vmem:[%s491 + $0x948] sm:$0xff]
        %v901 = vld [vmem:[%s491 + $0x950] sm:$0xff]
        %v902 = vld [vmem:[%s491 + $0x958] sm:$0xff]
        %v903 = vld [vmem:[%s491 + $0x960] sm:$0xff]
        %v904 = vld [vmem:[%s491 + $0x968] sm:$0xff]
        %v905 = vld [vmem:[%s491 + $0x970] sm:$0xff]
        %v906 = vld [vmem:[%s491 + $0x978] sm:$0xff]
        %v907 = vld [vmem:[%s491 + $0x980] sm:$0xff]
        %v908 = vld [vmem:[%s491 + $0x988] sm:$0xff]
        %v909 = vld [vmem:[%s491 + $0x990] sm:$0xff]
        %v910 = vld [vmem:[%s491 + $0x998] sm:$0xff]
        %v911 = vld [vmem:[%s491 + $0x9a0] sm:$0xff]
        %v912 = vld [vmem:[%s491 + $0x9a8] sm:$0xff]
        %v913 = vld [vmem:[%s491 + $0x9b0] sm:$0xff]
        %v914 = vld [vmem:[%s491 + $0x9b8] sm:$0xff]
        %v915 = vld [vmem:[%s491 + $0x9c0] sm:$0xff]
        %v916 = vld [vmem:[%s491 + $0x9c8] sm:$0xff]
        %v917 = vld [vmem:[%s491 + $0x9d0] sm:$0xff]
        %v918 = vld [vmem:[%s491 + $0x9d8] sm:$0xff]
        %v919 = vld [vmem:[%s491 + $0x9e0] sm:$0xff]
        %v920 = vld [vmem:[%s491 + $0x9e8] sm:$0xff]
        %v921 = vld [vmem:[%s491 + $0x9f0] sm:$0xff]
        %v922 = vld [vmem:[%s491 + $0x9f8] sm:$0xff]
        %v923 = vld [vmem:[%s491 + $0xa00] sm:$0xff]
        %v924 = vld [vmem:[%s491 + $0xa08] sm:$0xff]
        %v925 = vld [vmem:[%s491 + $0xa10] sm:$0xff]
        %v926 = vld [vmem:[%s491 + $0xa18] sm:$0xff]
        %v927 = vld [vmem:[%s491 + $0xa20] sm:$0xff]
        %v928 = vld [vmem:[%s491 + $0xa28] sm:$0xff]
        %v929 = vld [vmem:[%s491 + $0xa30] sm:$0xff]
        %v930 = vld [vmem:[%s491 + $0xa38] sm:$0xff]
        %v931 = vld [vmem:[%s491 + $0xa40] sm:$0xff]
        %v932 = vld [vmem:[%s491 + $0xa48] sm:$0xff]
        %v933 = vld [vmem:[%s491 + $0xa50] sm:$0xff]
        %v934 = vld [vmem:[%s491 + $0xa58] sm:$0xff]
        %v935 = vld [vmem:[%s491 + $0xa60] sm:$0xff]
        %v936 = vld [vmem:[%s491 + $0xa68] sm:$0xff]
        %v937 = vld [vmem:[%s491 + $0xa70] sm:$0xff]
        %v938 = vld [vmem:[%s491 + $0xa78] sm:$0xff]
        %v939 = vld [vmem:[%s491 + $0xa80] sm:$0xff]
        %v940 = vld [vmem:[%s491 + $0xa88] sm:$0xff]
        %v941 = vld [vmem:[%s491 + $0xa90] sm:$0xff]
        %v942 = vld [vmem:[%s491 + $0xa98] sm:$0xff]
        %v943 = vld [vmem:[%s491 + $0xaa0] sm:$0xff]
        %v944 = vld [vmem:[%s491 + $0xaa8] sm:$0xff]
        %v945 = vld [vmem:[%s491 + $0xab0] sm:$0xff]
        %v946 = vld [vmem:[%s491 + $0xab8] sm:$0xff]
        %v947 = vld [vmem:[%s491 + $0xac0] sm:$0xff]
        %v948 = vld [vmem:[%s491 + $0xac8] sm:$0xff]
        %v949 = vld [vmem:[%s491 + $0xad0] sm:$0xff]
        %v950 = vld [vmem:[%s491 + $0xad8] sm:$0xff]
        %v951 = vld [vmem:[%s491 + $0xae0] sm:$0xff]
        %v952 = vld [vmem:[%s491 + $0xae8] sm:$0xff]
        %v953 = vld [vmem:[%s491 + $0xaf0] sm:$0xff]
        %v954 = vld [vmem:[%s491 + $0xaf8] sm:$0xff]
        %v955 = vld [vmem:[%s491 + $0xb00] sm:$0xff]
        %v956 = vld [vmem:[%s491 + $0xb08] sm:$0xff]
        %v957 = vld [vmem:[%s491 + $0xb10] sm:$0xff]
        %v958 = vld [vmem:[%s491 + $0xb18] sm:$0xff]
        %v959 = vld [vmem:[%s491 + $0xb20] sm:$0xff]
        %v960 = vld [vmem:[%s491 + $0xb28] sm:$0xff]
        %v961 = vld [vmem:[%s491 + $0xb30] sm:$0xff]
        %v962 = vld [vmem:[%s491 + $0xb38] sm:$0xff]
        %v963 = vld [vmem:[%s491 + $0xb40] sm:$0xff]
        %v964 = vld [vmem:[%s491 + $0xb48] sm:$0xff]
        %v965 = vld [vmem:[%s491 + $0xb50] sm:$0xff]
        %v966 = vld [vmem:[%s491 + $0xb58] sm:$0xff]
        %v967 = vld [vmem:[%s491 + $0xb60] sm:$0xff]
        %v968 = vld [vmem:[%s491 + $0xb68] sm:$0xff]
        %v969 = vld [vmem:[%s491 + $0xb70] sm:$0xff]
        %v970 = vld [vmem:[%s491 + $0xb78] sm:$0xff]
        %v971 = vld [vmem:[%s491 + $0xb80] sm:$0xff]
        %v972 = vld [vmem:[%s491 + $0xb88] sm:$0xff]
        %v973 = vld [vmem:[%s491 + $0xb90] sm:$0xff]
        %v974 = vld [vmem:[%s491 + $0xb98] sm:$0xff]
        %v975 = vld [vmem:[%s491 + $0xba0] sm:$0xff]
        %v976 = vld [vmem:[%s491 + $0xba8] sm:$0xff]
        %v977 = vld [vmem:[%s491 + $0xbb0] sm:$0xff]
        %v978 = vld [vmem:[%s491 + $0xbb8] sm:$0xff]
        %v979 = vld [vmem:[%s491 + $0xbc0] sm:$0xff]
        %v980 = vld [vmem:[%s491 + $0xbc8] sm:$0xff]
        %v981 = vld [vmem:[%s491 + $0xbd0] sm:$0xff]
        %v982 = vld [vmem:[%s491 + $0xbd8] sm:$0xff]
        %v983 = vld [vmem:[%s491 + $0xbe0] sm:$0xff]
        %v984 = vld [vmem:[%s491 + $0xbe8] sm:$0xff]
        %v985 = vld [vmem:[%s491 + $0xbf0] sm:$0xff]
        %v986 = vld [vmem:[%s491 + $0xbf8] sm:$0xff]
        %v999 = vunpack.c.l.b16 %v591
        %v1000 = vunpack.c.h.b16 %v591
        %v1001 = vunpack.c.l.b16 %v592
        %v1002 = vunpack.c.h.b16 %v592
        %v1003 = vunpack.c.l.b16 %v593
        %v1004 = vunpack.c.h.b16 %v593
        %v1005 = vunpack.c.l.b16 %v594
        %v1006 = vunpack.c.h.b16 %v594
        %v1007 = vunpack.c.l.b16 %v595
        %v1008 = vunpack.c.h.b16 %v595
        %v1009 = vunpack.c.l.b16 %v596
        %v1010 = vunpack.c.h.b16 %v596
        %v1011 = vunpack.c.l.b16 %v597
        %v1012 = vunpack.c.h.b16 %v597
        %v1013 = vunpack.c.l.b16 %v598
        %v1014 = vunpack.c.h.b16 %v598
        %v1015 = vunpack.c.l.b16 %v599
        %v1016 = vunpack.c.h.b16 %v599
        %v1017 = vunpack.c.l.b16 %v600
        %v1018 = vunpack.c.h.b16 %v600
        %v1019 = vunpack.c.l.b16 %v601
        %v1020 = vunpack.c.h.b16 %v601
        %v1021 = vunpack.c.l.b16 %v602
        %v1022 = vunpack.c.h.b16 %v602
        %v1023 = vpack.c.b16 %v1011, %v999
        %v1024 = vpack.c.b16 %v1012, %v1000
        %v1025 = vpack.c.b16 %v1013, %v1001
        %v1026 = vpack.c.b16 %v1014, %v1002
        %v1027 = vpack.c.b16 %v1015, %v1003
        %v1028 = vpack.c.b16 %v1016, %v1004
        %v1029 = vpack.c.b16 %v1017, %v1005
        %v1030 = vpack.c.b16 %v1018, %v1006
        %v1031 = vpack.c.b16 %v1019, %v1007
        %v1032 = vpack.c.b16 %v1020, %v1008
        %v1033 = vpack.c.b16 %v1021, %v1009
        %v1034 = vpack.c.b16 %v1022, %v1010
        %v1431 = vunpack.c.l.b16 %v603
        %v1432 = vunpack.c.h.b16 %v603
        %v1433 = vunpack.c.l.b16 %v604
        %v1434 = vunpack.c.h.b16 %v604
        %v1435 = vunpack.c.l.b16 %v605
        %v1436 = vunpack.c.h.b16 %v605
        %v1437 = vunpack.c.l.b16 %v606
        %v1438 = vunpack.c.h.b16 %v606
        %v1439 = vunpack.c.l.b16 %v607
        %v1440 = vunpack.c.h.b16 %v607
        %v1441 = vunpack.c.l.b16 %v608
        %v1442 = vunpack.c.h.b16 %v608
        %v1443 = vunpack.c.l.b16 %v609
        %v1444 = vunpack.c.h.b16 %v609
        %v1445 = vunpack.c.l.b16 %v610
        %v1446 = vunpack.c.h.b16 %v610
        %v1447 = vunpack.c.l.b16 %v611
        %v1448 = vunpack.c.h.b16 %v611
        %v1449 = vunpack.c.l.b16 %v612
        %v1450 = vunpack.c.h.b16 %v612
        %v1451 = vunpack.c.l.b16 %v613
        %v1452 = vunpack.c.h.b16 %v613
        %v1453 = vunpack.c.l.b16 %v614
        %v1454 = vunpack.c.h.b16 %v614
        %v1455 = vunpack.c.l.b16 %v615
        %v1456 = vunpack.c.h.b16 %v615
        %v1457 = vunpack.c.l.b16 %v616
        %v1458 = vunpack.c.h.b16 %v616
        %v1459 = vunpack.c.l.b16 %v617
        %v1460 = vunpack.c.h.b16 %v617
        %v1461 = vunpack.c.l.b16 %v618
        %v1462 = vunpack.c.h.b16 %v618
        %v1463 = vunpack.c.l.b16 %v619
        %v1464 = vunpack.c.h.b16 %v619
        %v1465 = vunpack.c.l.b16 %v620
        %v1466 = vunpack.c.h.b16 %v620
        %v1467 = vunpack.c.l.b16 %v621
        %v1468 = vunpack.c.h.b16 %v621
        %v1469 = vunpack.c.l.b16 %v622
        %v1470 = vunpack.c.h.b16 %v622
        %v1471 = vunpack.c.l.b16 %v623
        %v1472 = vunpack.c.h.b16 %v623
        %v1473 = vunpack.c.l.b16 %v624
        %v1474 = vunpack.c.h.b16 %v624
        %v1475 = vunpack.c.l.b16 %v625
        %v1476 = vunpack.c.h.b16 %v625
        %v1477 = vunpack.c.l.b16 %v626
        %v1478 = vunpack.c.h.b16 %v626
        %v1479 = vunpack.c.l.b16 %v627
        %v1480 = vunpack.c.h.b16 %v627
        %v1481 = vunpack.c.l.b16 %v628
        %v1482 = vunpack.c.h.b16 %v628
        %v1483 = vunpack.c.l.b16 %v629
        %v1484 = vunpack.c.h.b16 %v629
        %v1485 = vunpack.c.l.b16 %v630
        %v1486 = vunpack.c.h.b16 %v630
        %v1487 = vunpack.c.l.b16 %v631
        %v1488 = vunpack.c.h.b16 %v631
        %v1489 = vunpack.c.l.b16 %v632
        %v1490 = vunpack.c.h.b16 %v632
        %v1491 = vunpack.c.l.b16 %v633
        %v1492 = vunpack.c.h.b16 %v633
        %v1493 = vunpack.c.l.b16 %v634
        %v1494 = vunpack.c.h.b16 %v634
        %v1495 = vunpack.c.l.b16 %v635
        %v1496 = vunpack.c.h.b16 %v635
        %v1497 = vunpack.c.l.b16 %v636
        %v1498 = vunpack.c.h.b16 %v636
        %v1499 = vunpack.c.l.b16 %v637
        %v1500 = vunpack.c.h.b16 %v637
        %v1501 = vunpack.c.l.b16 %v638
        %v1502 = vunpack.c.h.b16 %v638
        %v1503 = vunpack.c.l.b16 %v639
        %v1504 = vunpack.c.h.b16 %v639
        %v1505 = vunpack.c.l.b16 %v640
        %v1506 = vunpack.c.h.b16 %v640
        %v1507 = vunpack.c.l.b16 %v641
        %v1508 = vunpack.c.h.b16 %v641
        %v1509 = vunpack.c.l.b16 %v642
        %v1510 = vunpack.c.h.b16 %v642
        %v1511 = vunpack.c.l.b16 %v643
        %v1512 = vunpack.c.h.b16 %v643
        %v1513 = vunpack.c.l.b16 %v644
        %v1514 = vunpack.c.h.b16 %v644
        %v1515 = vunpack.c.l.b16 %v645
        %v1516 = vunpack.c.h.b16 %v645
        %v1517 = vunpack.c.l.b16 %v646
        %v1518 = vunpack.c.h.b16 %v646
        %v1519 = vunpack.c.l.b16 %v647
        %v1520 = vunpack.c.h.b16 %v647
        %v1521 = vunpack.c.l.b16 %v648
        %v1522 = vunpack.c.h.b16 %v648
        %v1523 = vunpack.c.l.b16 %v649
        %v1524 = vunpack.c.h.b16 %v649
        %v1525 = vunpack.c.l.b16 %v650
        %v1526 = vunpack.c.h.b16 %v650
        %v1527 = vunpack.c.l.b16 %v651
        %v1528 = vunpack.c.h.b16 %v651
        %v1529 = vunpack.c.l.b16 %v652
        %v1530 = vunpack.c.h.b16 %v652
        %v1531 = vunpack.c.l.b16 %v653
        %v1532 = vunpack.c.h.b16 %v653
        %v1533 = vunpack.c.l.b16 %v654
        %v1534 = vunpack.c.h.b16 %v654
        %v1535 = vunpack.c.l.b16 %v655
        %v1536 = vunpack.c.h.b16 %v655
        %v1537 = vunpack.c.l.b16 %v656
        %v1538 = vunpack.c.h.b16 %v656
        %v1539 = vunpack.c.l.b16 %v657
        %v1540 = vunpack.c.h.b16 %v657
        %v1541 = vunpack.c.l.b16 %v658
        %v1542 = vunpack.c.h.b16 %v658
        %v1543 = vunpack.c.l.b16 %v659
        %v1544 = vunpack.c.h.b16 %v659
        %v1545 = vunpack.c.l.b16 %v660
        %v1546 = vunpack.c.h.b16 %v660
        %v1547 = vunpack.c.l.b16 %v661
        %v1548 = vunpack.c.h.b16 %v661
        %v1549 = vunpack.c.l.b16 %v662
        %v1550 = vunpack.c.h.b16 %v662
        %v1551 = vunpack.c.l.b16 %v663
        %v1552 = vunpack.c.h.b16 %v663
        %v1553 = vunpack.c.l.b16 %v664
        %v1554 = vunpack.c.h.b16 %v664
        %v1555 = vunpack.c.l.b16 %v665
        %v1556 = vunpack.c.h.b16 %v665
        %v1557 = vunpack.c.l.b16 %v666
        %v1558 = vunpack.c.h.b16 %v666
        %v1559 = vunpack.c.l.b16 %v667
        %v1560 = vunpack.c.h.b16 %v667
        %v1561 = vunpack.c.l.b16 %v668
        %v1562 = vunpack.c.h.b16 %v668
        %v1563 = vunpack.c.l.b16 %v669
        %v1564 = vunpack.c.h.b16 %v669
        %v1565 = vunpack.c.l.b16 %v670
        %v1566 = vunpack.c.h.b16 %v670
        %v1567 = vunpack.c.l.b16 %v671
        %v1568 = vunpack.c.h.b16 %v671
        %v1569 = vunpack.c.l.b16 %v672
        %v1570 = vunpack.c.h.b16 %v672
        %v1571 = vunpack.c.l.b16 %v673
        %v1572 = vunpack.c.h.b16 %v673
        %v1573 = vunpack.c.l.b16 %v674
        %v1574 = vunpack.c.h.b16 %v674
        %v1575 = vunpack.c.l.b16 %v675
        %v1576 = vunpack.c.h.b16 %v675
        %v1577 = vunpack.c.l.b16 %v676
        %v1578 = vunpack.c.h.b16 %v676
        %v1579 = vunpack.c.l.b16 %v677
        %v1580 = vunpack.c.h.b16 %v677
        %v1581 = vunpack.c.l.b16 %v678
        %v1582 = vunpack.c.h.b16 %v678
        %v1583 = vunpack.c.l.b16 %v679
        %v1584 = vunpack.c.h.b16 %v679
        %v1585 = vunpack.c.l.b16 %v680
        %v1586 = vunpack.c.h.b16 %v680
        %v1587 = vunpack.c.l.b16 %v681
        %v1588 = vunpack.c.h.b16 %v681
        %v1589 = vunpack.c.l.b16 %v682
        %v1590 = vunpack.c.h.b16 %v682
        %v1591 = vunpack.c.l.b16 %v683
        %v1592 = vunpack.c.h.b16 %v683
        %v1593 = vunpack.c.l.b16 %v684
        %v1594 = vunpack.c.h.b16 %v684
        %v1595 = vunpack.c.l.b16 %v685
        %v1596 = vunpack.c.h.b16 %v685
        %v1597 = vunpack.c.l.b16 %v686
        %v1598 = vunpack.c.h.b16 %v686
        %v1599 = vunpack.c.l.b16 %v687
        %v1600 = vunpack.c.h.b16 %v687
        %v1601 = vunpack.c.l.b16 %v688
        %v1602 = vunpack.c.h.b16 %v688
        %v1603 = vunpack.c.l.b16 %v689
        %v1604 = vunpack.c.h.b16 %v689
        %v1605 = vunpack.c.l.b16 %v690
        %v1606 = vunpack.c.h.b16 %v690
        %v1607 = vunpack.c.l.b16 %v691
        %v1608 = vunpack.c.h.b16 %v691
        %v1609 = vunpack.c.l.b16 %v692
        %v1610 = vunpack.c.h.b16 %v692
        %v1611 = vunpack.c.l.b16 %v693
        %v1612 = vunpack.c.h.b16 %v693
        %v1613 = vunpack.c.l.b16 %v694
        %v1614 = vunpack.c.h.b16 %v694
        %v1615 = vunpack.c.l.b16 %v695
        %v1616 = vunpack.c.h.b16 %v695
        %v1617 = vunpack.c.l.b16 %v696
        %v1618 = vunpack.c.h.b16 %v696
        %v1619 = vunpack.c.l.b16 %v697
        %v1620 = vunpack.c.h.b16 %v697
        %v1621 = vunpack.c.l.b16 %v698
        %v1622 = vunpack.c.h.b16 %v698
        %v1623 = vunpack.c.l.b16 %v699
        %v1624 = vunpack.c.h.b16 %v699
        %v1625 = vunpack.c.l.b16 %v700
        %v1626 = vunpack.c.h.b16 %v700
        %v1627 = vunpack.c.l.b16 %v701
        %v1628 = vunpack.c.h.b16 %v701
        %v1629 = vunpack.c.l.b16 %v702
        %v1630 = vunpack.c.h.b16 %v702
        %v1631 = vunpack.c.l.b16 %v703
        %v1632 = vunpack.c.h.b16 %v703
        %v1633 = vunpack.c.l.b16 %v704
        %v1634 = vunpack.c.h.b16 %v704
        %v1635 = vunpack.c.l.b16 %v705
        %v1636 = vunpack.c.h.b16 %v705
        %v1637 = vunpack.c.l.b16 %v706
        %v1638 = vunpack.c.h.b16 %v706
        %v1639 = vunpack.c.l.b16 %v707
        %v1640 = vunpack.c.h.b16 %v707
        %v1641 = vunpack.c.l.b16 %v708
        %v1642 = vunpack.c.h.b16 %v708
        %v1643 = vunpack.c.l.b16 %v709
        %v1644 = vunpack.c.h.b16 %v709
        %v1645 = vunpack.c.l.b16 %v710
        %v1646 = vunpack.c.h.b16 %v710
        %v1647 = vunpack.c.l.b16 %v711
        %v1648 = vunpack.c.h.b16 %v711
        %v1649 = vunpack.c.l.b16 %v712
        %v1650 = vunpack.c.h.b16 %v712
        %v1651 = vunpack.c.l.b16 %v713
        %v1652 = vunpack.c.h.b16 %v713
        %v1653 = vunpack.c.l.b16 %v714
        %v1654 = vunpack.c.h.b16 %v714
        %v1655 = vunpack.c.l.b16 %v715
        %v1656 = vunpack.c.h.b16 %v715
        %v1657 = vunpack.c.l.b16 %v716
        %v1658 = vunpack.c.h.b16 %v716
        %v1659 = vunpack.c.l.b16 %v717
        %v1660 = vunpack.c.h.b16 %v717
        %v1661 = vunpack.c.l.b16 %v718
        %v1662 = vunpack.c.h.b16 %v718
        %v1663 = vunpack.c.l.b16 %v719
        %v1664 = vunpack.c.h.b16 %v719
        %v1665 = vunpack.c.l.b16 %v720
        %v1666 = vunpack.c.h.b16 %v720
        %v1667 = vunpack.c.l.b16 %v721
        %v1668 = vunpack.c.h.b16 %v721
        %v1669 = vunpack.c.l.b16 %v722
        %v1670 = vunpack.c.h.b16 %v722
        %v1671 = vunpack.c.l.b16 %v723
        %v1672 = vunpack.c.h.b16 %v723
        %v1673 = vunpack.c.l.b16 %v724
        %v1674 = vunpack.c.h.b16 %v724
        %v1675 = vunpack.c.l.b16 %v725
        %v1676 = vunpack.c.h.b16 %v725
        %v1677 = vunpack.c.l.b16 %v726
        %v1678 = vunpack.c.h.b16 %v726
        %v1679 = vunpack.c.l.b16 %v727
        %v1680 = vunpack.c.h.b16 %v727
        %v1681 = vunpack.c.l.b16 %v728
        %v1682 = vunpack.c.h.b16 %v728
        %v1683 = vunpack.c.l.b16 %v729
        %v1684 = vunpack.c.h.b16 %v729
        %v1685 = vunpack.c.l.b16 %v730
        %v1686 = vunpack.c.h.b16 %v730
        %v1687 = vunpack.c.l.b16 %v731
        %v1688 = vunpack.c.h.b16 %v731
        %v1689 = vunpack.c.l.b16 %v732
        %v1690 = vunpack.c.h.b16 %v732
        %v1691 = vunpack.c.l.b16 %v733
        %v1692 = vunpack.c.h.b16 %v733
        %v1693 = vunpack.c.l.b16 %v734
        %v1694 = vunpack.c.h.b16 %v734
        %v1695 = vunpack.c.l.b16 %v735
        %v1696 = vunpack.c.h.b16 %v735
        %v1697 = vunpack.c.l.b16 %v736
        %v1698 = vunpack.c.h.b16 %v736
        %v1699 = vunpack.c.l.b16 %v737
        %v1700 = vunpack.c.h.b16 %v737
        %v1701 = vunpack.c.l.b16 %v738
        %v1702 = vunpack.c.h.b16 %v738
        %v1703 = vunpack.c.l.b16 %v739
        %v1704 = vunpack.c.h.b16 %v739
        %v1705 = vunpack.c.l.b16 %v740
        %v1706 = vunpack.c.h.b16 %v740
        %v1707 = vunpack.c.l.b16 %v741
        %v1708 = vunpack.c.h.b16 %v741
        %v1709 = vunpack.c.l.b16 %v742
        %v1710 = vunpack.c.h.b16 %v742
        %v1711 = vunpack.c.l.b16 %v743
        %v1712 = vunpack.c.h.b16 %v743
        %v1713 = vunpack.c.l.b16 %v744
        %v1714 = vunpack.c.h.b16 %v744
        %v1715 = vunpack.c.l.b16 %v745
        %v1716 = vunpack.c.h.b16 %v745
        %v1717 = vunpack.c.l.b16 %v746
        %v1718 = vunpack.c.h.b16 %v746
        %v1719 = vunpack.c.l.b16 %v747
        %v1720 = vunpack.c.h.b16 %v747
        %v1721 = vunpack.c.l.b16 %v748
        %v1722 = vunpack.c.h.b16 %v748
        %v1723 = vunpack.c.l.b16 %v749
        %v1724 = vunpack.c.h.b16 %v749
        %v1725 = vunpack.c.l.b16 %v750
        %v1726 = vunpack.c.h.b16 %v750
        %v1727 = vunpack.c.l.b16 %v751
        %v1728 = vunpack.c.h.b16 %v751
        %v1729 = vunpack.c.l.b16 %v752
        %v1730 = vunpack.c.h.b16 %v752
        %v1731 = vunpack.c.l.b16 %v753
        %v1732 = vunpack.c.h.b16 %v753
        %v1733 = vunpack.c.l.b16 %v754
        %v1734 = vunpack.c.h.b16 %v754
        %v1735 = vunpack.c.l.b16 %v755
        %v1736 = vunpack.c.h.b16 %v755
        %v1737 = vunpack.c.l.b16 %v756
        %v1738 = vunpack.c.h.b16 %v756
        %v1739 = vunpack.c.l.b16 %v757
        %v1740 = vunpack.c.h.b16 %v757
        %v1741 = vunpack.c.l.b16 %v758
        %v1742 = vunpack.c.h.b16 %v758
        %v1743 = vunpack.c.l.b16 %v759
        %v1744 = vunpack.c.h.b16 %v759
        %v1745 = vunpack.c.l.b16 %v760
        %v1746 = vunpack.c.h.b16 %v760
        %v1747 = vunpack.c.l.b16 %v761
        %v1748 = vunpack.c.h.b16 %v761
        %v1749 = vunpack.c.l.b16 %v762
        %v1750 = vunpack.c.h.b16 %v762
        %v1751 = vunpack.c.l.b16 %v763
        %v1752 = vunpack.c.h.b16 %v763
        %v1753 = vunpack.c.l.b16 %v764
        %v1754 = vunpack.c.h.b16 %v764
        %v1755 = vunpack.c.l.b16 %v765
        %v1756 = vunpack.c.h.b16 %v765
        %v1757 = vunpack.c.l.b16 %v766
        %v1758 = vunpack.c.h.b16 %v766
        %v1759 = vunpack.c.l.b16 %v767
        %v1760 = vunpack.c.h.b16 %v767
        %v1761 = vunpack.c.l.b16 %v768
        %v1762 = vunpack.c.h.b16 %v768
        %v1763 = vunpack.c.l.b16 %v769
        %v1764 = vunpack.c.h.b16 %v769
        %v1765 = vunpack.c.l.b16 %v770
        %v1766 = vunpack.c.h.b16 %v770
        %v1767 = vunpack.c.l.b16 %v771
        %v1768 = vunpack.c.h.b16 %v771
        %v1769 = vunpack.c.l.b16 %v772
        %v1770 = vunpack.c.h.b16 %v772
        %v1771 = vunpack.c.l.b16 %v773
        %v1772 = vunpack.c.h.b16 %v773
        %v1773 = vunpack.c.l.b16 %v774
        %v1774 = vunpack.c.h.b16 %v774
        %v1775 = vunpack.c.l.b16 %v775
        %v1776 = vunpack.c.h.b16 %v775
        %v1777 = vunpack.c.l.b16 %v776
        %v1778 = vunpack.c.h.b16 %v776
        %v1779 = vunpack.c.l.b16 %v777
        %v1780 = vunpack.c.h.b16 %v777
        %v1781 = vunpack.c.l.b16 %v778
        %v1782 = vunpack.c.h.b16 %v778
        %v1783 = vunpack.c.l.b16 %v779
        %v1784 = vunpack.c.h.b16 %v779
        %v1785 = vunpack.c.l.b16 %v780
        %v1786 = vunpack.c.h.b16 %v780
        %v1787 = vunpack.c.l.b16 %v781
        %v1788 = vunpack.c.h.b16 %v781
        %v1789 = vunpack.c.l.b16 %v782
        %v1790 = vunpack.c.h.b16 %v782
        %v1791 = vunpack.c.l.b16 %v783
        %v1792 = vunpack.c.h.b16 %v783
        %v1793 = vunpack.c.l.b16 %v784
        %v1794 = vunpack.c.h.b16 %v784
        %v1795 = vunpack.c.l.b16 %v785
        %v1796 = vunpack.c.h.b16 %v785
        %v1797 = vunpack.c.l.b16 %v786
        %v1798 = vunpack.c.h.b16 %v786
        %v1799 = vunpack.c.l.b16 %v787
        %v1800 = vunpack.c.h.b16 %v787
        %v1801 = vunpack.c.l.b16 %v788
        %v1802 = vunpack.c.h.b16 %v788
        %v1803 = vunpack.c.l.b16 %v789
        %v1804 = vunpack.c.h.b16 %v789
        %v1805 = vunpack.c.l.b16 %v790
        %v1806 = vunpack.c.h.b16 %v790
        %v1807 = vunpack.c.l.b16 %v791
        %v1808 = vunpack.c.h.b16 %v791
        %v1809 = vunpack.c.l.b16 %v792
        %v1810 = vunpack.c.h.b16 %v792
        %v1811 = vunpack.c.l.b16 %v793
        %v1812 = vunpack.c.h.b16 %v793
        %v1813 = vunpack.c.l.b16 %v794
        %v1814 = vunpack.c.h.b16 %v794
        %v1815 = vunpack.c.l.b16 %v795
        %v1816 = vunpack.c.h.b16 %v795
        %v1817 = vunpack.c.l.b16 %v796
        %v1818 = vunpack.c.h.b16 %v796
        %v1819 = vunpack.c.l.b16 %v797
        %v1820 = vunpack.c.h.b16 %v797
        %v1821 = vunpack.c.l.b16 %v798
        %v1822 = vunpack.c.h.b16 %v798
        %v1823 = vunpack.c.l.b16 %v799
        %v1824 = vunpack.c.h.b16 %v799
        %v1825 = vunpack.c.l.b16 %v800
        %v1826 = vunpack.c.h.b16 %v800
        %v1827 = vunpack.c.l.b16 %v801
        %v1828 = vunpack.c.h.b16 %v801
        %v1829 = vunpack.c.l.b16 %v802
        %v1830 = vunpack.c.h.b16 %v802
        %v1831 = vunpack.c.l.b16 %v803
        %v1832 = vunpack.c.h.b16 %v803
        %v1833 = vunpack.c.l.b16 %v804
        %v1834 = vunpack.c.h.b16 %v804
        %v1835 = vunpack.c.l.b16 %v805
        %v1836 = vunpack.c.h.b16 %v805
        %v1837 = vunpack.c.l.b16 %v806
        %v1838 = vunpack.c.h.b16 %v806
        %v1839 = vunpack.c.l.b16 %v807
        %v1840 = vunpack.c.h.b16 %v807
        %v1841 = vunpack.c.l.b16 %v808
        %v1842 = vunpack.c.h.b16 %v808
        %v1843 = vunpack.c.l.b16 %v809
        %v1844 = vunpack.c.h.b16 %v809
        %v1845 = vunpack.c.l.b16 %v810
        %v1846 = vunpack.c.h.b16 %v810
        %v1847 = vunpack.c.l.b16 %v811
        %v1848 = vunpack.c.h.b16 %v811
        %v1849 = vunpack.c.l.b16 %v812
        %v1850 = vunpack.c.h.b16 %v812
        %v1851 = vunpack.c.l.b16 %v813
        %v1852 = vunpack.c.h.b16 %v813
        %v1853 = vunpack.c.l.b16 %v814
        %v1854 = vunpack.c.h.b16 %v814
        %v1855 = vunpack.c.l.b16 %v815
        %v1856 = vunpack.c.h.b16 %v815
        %v1857 = vunpack.c.l.b16 %v816
        %v1858 = vunpack.c.h.b16 %v816
        %v1859 = vunpack.c.l.b16 %v817
        %v1860 = vunpack.c.h.b16 %v817
        %v1861 = vunpack.c.l.b16 %v818
        %v1862 = vunpack.c.h.b16 %v818
        %v1863 = vunpack.c.l.b16 %v819
        %v1864 = vunpack.c.h.b16 %v819
        %v1865 = vunpack.c.l.b16 %v820
        %v1866 = vunpack.c.h.b16 %v820
        %v1867 = vunpack.c.l.b16 %v821
        %v1868 = vunpack.c.h.b16 %v821
        %v1869 = vunpack.c.l.b16 %v822
        %v1870 = vunpack.c.h.b16 %v822
        %v1871 = vunpack.c.l.b16 %v823
        %v1872 = vunpack.c.h.b16 %v823
        %v1873 = vunpack.c.l.b16 %v824
        %v1874 = vunpack.c.h.b16 %v824
        %v1875 = vunpack.c.l.b16 %v825
        %v1876 = vunpack.c.h.b16 %v825
        %v1877 = vunpack.c.l.b16 %v826
        %v1878 = vunpack.c.h.b16 %v826
        %v1879 = vunpack.c.l.b16 %v827
        %v1880 = vunpack.c.h.b16 %v827
        %v1881 = vunpack.c.l.b16 %v828
        %v1882 = vunpack.c.h.b16 %v828
        %v1883 = vunpack.c.l.b16 %v829
        %v1884 = vunpack.c.h.b16 %v829
        %v1885 = vunpack.c.l.b16 %v830
        %v1886 = vunpack.c.h.b16 %v830
        %v1887 = vunpack.c.l.b16 %v831
        %v1888 = vunpack.c.h.b16 %v831
        %v1889 = vunpack.c.l.b16 %v832
        %v1890 = vunpack.c.h.b16 %v832
        %v1891 = vunpack.c.l.b16 %v833
        %v1892 = vunpack.c.h.b16 %v833
        %v1893 = vunpack.c.l.b16 %v834
        %v1894 = vunpack.c.h.b16 %v834
        %v1895 = vunpack.c.l.b16 %v835
        %v1896 = vunpack.c.h.b16 %v835
        %v1897 = vunpack.c.l.b16 %v836
        %v1898 = vunpack.c.h.b16 %v836
        %v1899 = vunpack.c.l.b16 %v837
        %v1900 = vunpack.c.h.b16 %v837
        %v1901 = vunpack.c.l.b16 %v838
        %v1902 = vunpack.c.h.b16 %v838
        %v1903 = vunpack.c.l.b16 %v839
        %v1904 = vunpack.c.h.b16 %v839
        %v1905 = vunpack.c.l.b16 %v840
        %v1906 = vunpack.c.h.b16 %v840
        %v1907 = vunpack.c.l.b16 %v841
        %v1908 = vunpack.c.h.b16 %v841
        %v1909 = vunpack.c.l.b16 %v842
        %v1910 = vunpack.c.h.b16 %v842
        %v1911 = vunpack.c.l.b16 %v843
        %v1912 = vunpack.c.h.b16 %v843
        %v1913 = vunpack.c.l.b16 %v844
        %v1914 = vunpack.c.h.b16 %v844
        %v1915 = vunpack.c.l.b16 %v845
        %v1916 = vunpack.c.h.b16 %v845
        %v1917 = vunpack.c.l.b16 %v846
        %v1918 = vunpack.c.h.b16 %v846
        %v1919 = vunpack.c.l.b16 %v847
        %v1920 = vunpack.c.h.b16 %v847
        %v1921 = vunpack.c.l.b16 %v848
        %v1922 = vunpack.c.h.b16 %v848
        %v1923 = vunpack.c.l.b16 %v849
        %v1924 = vunpack.c.h.b16 %v849
        %v1925 = vunpack.c.l.b16 %v850
        %v1926 = vunpack.c.h.b16 %v850
        %v1927 = vunpack.c.l.b16 %v851
        %v1928 = vunpack.c.h.b16 %v851
        %v1929 = vunpack.c.l.b16 %v852
        %v1930 = vunpack.c.h.b16 %v852
        %v1931 = vunpack.c.l.b16 %v853
        %v1932 = vunpack.c.h.b16 %v853
        %v1933 = vunpack.c.l.b16 %v854
        %v1934 = vunpack.c.h.b16 %v854
        %v1935 = vunpack.c.l.b16 %v855
        %v1936 = vunpack.c.h.b16 %v855
        %v1937 = vunpack.c.l.b16 %v856
        %v1938 = vunpack.c.h.b16 %v856
        %v1939 = vunpack.c.l.b16 %v857
        %v1940 = vunpack.c.h.b16 %v857
        %v1941 = vunpack.c.l.b16 %v858
        %v1942 = vunpack.c.h.b16 %v858
        %v1943 = vunpack.c.l.b16 %v859
        %v1944 = vunpack.c.h.b16 %v859
        %v1945 = vunpack.c.l.b16 %v860
        %v1946 = vunpack.c.h.b16 %v860
        %v1947 = vunpack.c.l.b16 %v861
        %v1948 = vunpack.c.h.b16 %v861
        %v1949 = vunpack.c.l.b16 %v862
        %v1950 = vunpack.c.h.b16 %v862
        %v1951 = vunpack.c.l.b16 %v863
        %v1952 = vunpack.c.h.b16 %v863
        %v1953 = vunpack.c.l.b16 %v864
        %v1954 = vunpack.c.h.b16 %v864
        %v1955 = vunpack.c.l.b16 %v865
        %v1956 = vunpack.c.h.b16 %v865
        %v1957 = vunpack.c.l.b16 %v866
        %v1958 = vunpack.c.h.b16 %v866
        %v1959 = vunpack.c.l.b16 %v867
        %v1960 = vunpack.c.h.b16 %v867
        %v1961 = vunpack.c.l.b16 %v868
        %v1962 = vunpack.c.h.b16 %v868
        %v1963 = vunpack.c.l.b16 %v869
        %v1964 = vunpack.c.h.b16 %v869
        %v1965 = vunpack.c.l.b16 %v870
        %v1966 = vunpack.c.h.b16 %v870
        %v1967 = vunpack.c.l.b16 %v871
        %v1968 = vunpack.c.h.b16 %v871
        %v1969 = vunpack.c.l.b16 %v872
        %v1970 = vunpack.c.h.b16 %v872
        %v1971 = vunpack.c.l.b16 %v873
        %v1972 = vunpack.c.h.b16 %v873
        %v1973 = vunpack.c.l.b16 %v874
        %v1974 = vunpack.c.h.b16 %v874
        %v1975 = vunpack.c.l.b16 %v875
        %v1976 = vunpack.c.h.b16 %v875
        %v1977 = vunpack.c.l.b16 %v876
        %v1978 = vunpack.c.h.b16 %v876
        %v1979 = vunpack.c.l.b16 %v877
        %v1980 = vunpack.c.h.b16 %v877
        %v1981 = vunpack.c.l.b16 %v878
        %v1982 = vunpack.c.h.b16 %v878
        %v1983 = vunpack.c.l.b16 %v879
        %v1984 = vunpack.c.h.b16 %v879
        %v1985 = vunpack.c.l.b16 %v880
        %v1986 = vunpack.c.h.b16 %v880
        %v1987 = vunpack.c.l.b16 %v881
        %v1988 = vunpack.c.h.b16 %v881
        %v1989 = vunpack.c.l.b16 %v882
        %v1990 = vunpack.c.h.b16 %v882
        %v1991 = vunpack.c.l.b16 %v883
        %v1992 = vunpack.c.h.b16 %v883
        %v1993 = vunpack.c.l.b16 %v884
        %v1994 = vunpack.c.h.b16 %v884
        %v1995 = vunpack.c.l.b16 %v885
        %v1996 = vunpack.c.h.b16 %v885
        %v1997 = vunpack.c.l.b16 %v886
        %v1998 = vunpack.c.h.b16 %v886
        %v1999 = vunpack.c.l.b16 %v887
        %v2000 = vunpack.c.h.b16 %v887
        %v2001 = vunpack.c.l.b16 %v888
        %v2002 = vunpack.c.h.b16 %v888
        %v2003 = vunpack.c.l.b16 %v889
        %v2004 = vunpack.c.h.b16 %v889
        %v2005 = vunpack.c.l.b16 %v890
        %v2006 = vunpack.c.h.b16 %v890
        %v2007 = vunpack.c.l.b16 %v891
        %v2008 = vunpack.c.h.b16 %v891
        %v2009 = vunpack.c.l.b16 %v892
        %v2010 = vunpack.c.h.b16 %v892
        %v2011 = vunpack.c.l.b16 %v893
        %v2012 = vunpack.c.h.b16 %v893
        %v2013 = vunpack.c.l.b16 %v894
        %v2014 = vunpack.c.h.b16 %v894
        %v2015 = vunpack.c.l.b16 %v895
        %v2016 = vunpack.c.h.b16 %v895
        %v2017 = vunpack.c.l.b16 %v896
        %v2018 = vunpack.c.h.b16 %v896
        %v2019 = vunpack.c.l.b16 %v897
        %v2020 = vunpack.c.h.b16 %v897
        %v2021 = vunpack.c.l.b16 %v898
        %v2022 = vunpack.c.h.b16 %v898
        %v2023 = vunpack.c.l.b16 %v899
        %v2024 = vunpack.c.h.b16 %v899
        %v2025 = vunpack.c.l.b16 %v900
        %v2026 = vunpack.c.h.b16 %v900
        %v2027 = vunpack.c.l.b16 %v901
        %v2028 = vunpack.c.h.b16 %v901
        %v2029 = vunpack.c.l.b16 %v902
        %v2030 = vunpack.c.h.b16 %v902
        %v2031 = vunpack.c.l.b16 %v903
        %v2032 = vunpack.c.h.b16 %v903
        %v2033 = vunpack.c.l.b16 %v904
        %v2034 = vunpack.c.h.b16 %v904
        %v2035 = vunpack.c.l.b16 %v905
        %v2036 = vunpack.c.h.b16 %v905
        %v2037 = vunpack.c.l.b16 %v906
        %v2038 = vunpack.c.h.b16 %v906
        %v2039 = vunpack.c.l.b16 %v907
        %v2040 = vunpack.c.h.b16 %v907
        %v2041 = vunpack.c.l.b16 %v908
        %v2042 = vunpack.c.h.b16 %v908
        %v2043 = vunpack.c.l.b16 %v909
        %v2044 = vunpack.c.h.b16 %v909
        %v2045 = vunpack.c.l.b16 %v910
        %v2046 = vunpack.c.h.b16 %v910
        %v2047 = vunpack.c.l.b16 %v911
        %v2048 = vunpack.c.h.b16 %v911
        %v2049 = vunpack.c.l.b16 %v912
        %v2050 = vunpack.c.h.b16 %v912
        %v2051 = vunpack.c.l.b16 %v913
        %v2052 = vunpack.c.h.b16 %v913
        %v2053 = vunpack.c.l.b16 %v914
        %v2054 = vunpack.c.h.b16 %v914
        %v2055 = vunpack.c.l.b16 %v915
        %v2056 = vunpack.c.h.b16 %v915
        %v2057 = vunpack.c.l.b16 %v916
        %v2058 = vunpack.c.h.b16 %v916
        %v2059 = vunpack.c.l.b16 %v917
        %v2060 = vunpack.c.h.b16 %v917
        %v2061 = vunpack.c.l.b16 %v918
        %v2062 = vunpack.c.h.b16 %v918
        %v2063 = vunpack.c.l.b16 %v919
        %v2064 = vunpack.c.h.b16 %v919
        %v2065 = vunpack.c.l.b16 %v920
        %v2066 = vunpack.c.h.b16 %v920
        %v2067 = vunpack.c.l.b16 %v921
        %v2068 = vunpack.c.h.b16 %v921
        %v2069 = vunpack.c.l.b16 %v922
        %v2070 = vunpack.c.h.b16 %v922
        %v2071 = vunpack.c.l.b16 %v923
        %v2072 = vunpack.c.h.b16 %v923
        %v2073 = vunpack.c.l.b16 %v924
        %v2074 = vunpack.c.h.b16 %v924
        %v2075 = vunpack.c.l.b16 %v925
        %v2076 = vunpack.c.h.b16 %v925
        %v2077 = vunpack.c.l.b16 %v926
        %v2078 = vunpack.c.h.b16 %v926
        %v2079 = vunpack.c.l.b16 %v927
        %v2080 = vunpack.c.h.b16 %v927
        %v2081 = vunpack.c.l.b16 %v928
        %v2082 = vunpack.c.h.b16 %v928
        %v2083 = vunpack.c.l.b16 %v929
        %v2084 = vunpack.c.h.b16 %v929
        %v2085 = vunpack.c.l.b16 %v930
        %v2086 = vunpack.c.h.b16 %v930
        %v2087 = vunpack.c.l.b16 %v931
        %v2088 = vunpack.c.h.b16 %v931
        %v2089 = vunpack.c.l.b16 %v932
        %v2090 = vunpack.c.h.b16 %v932
        %v2091 = vunpack.c.l.b16 %v933
        %v2092 = vunpack.c.h.b16 %v933
        %v2093 = vunpack.c.l.b16 %v934
        %v2094 = vunpack.c.h.b16 %v934
        %v2095 = vunpack.c.l.b16 %v935
        %v2096 = vunpack.c.h.b16 %v935
        %v2097 = vunpack.c.l.b16 %v936
        %v2098 = vunpack.c.h.b16 %v936
        %v2099 = vunpack.c.l.b16 %v937
        %v2100 = vunpack.c.h.b16 %v937
        %v2101 = vunpack.c.l.b16 %v938
        %v2102 = vunpack.c.h.b16 %v938
        %v2103 = vunpack.c.l.b16 %v939
        %v2104 = vunpack.c.h.b16 %v939
        %v2105 = vunpack.c.l.b16 %v940
        %v2106 = vunpack.c.h.b16 %v940
        %v2107 = vunpack.c.l.b16 %v941
        %v2108 = vunpack.c.h.b16 %v941
        %v2109 = vunpack.c.l.b16 %v942
        %v2110 = vunpack.c.h.b16 %v942
        %v2111 = vunpack.c.l.b16 %v943
        %v2112 = vunpack.c.h.b16 %v943
        %v2113 = vunpack.c.l.b16 %v944
        %v2114 = vunpack.c.h.b16 %v944
        %v2115 = vunpack.c.l.b16 %v945
        %v2116 = vunpack.c.h.b16 %v945
        %v2117 = vunpack.c.l.b16 %v946
        %v2118 = vunpack.c.h.b16 %v946
        %v2119 = vunpack.c.l.b16 %v947
        %v2120 = vunpack.c.h.b16 %v947
        %v2121 = vunpack.c.l.b16 %v948
        %v2122 = vunpack.c.h.b16 %v948
        %v2123 = vunpack.c.l.b16 %v949
        %v2124 = vunpack.c.h.b16 %v949
        %v2125 = vunpack.c.l.b16 %v950
        %v2126 = vunpack.c.h.b16 %v950
        %v2127 = vunpack.c.l.b16 %v951
        %v2128 = vunpack.c.h.b16 %v951
        %v2129 = vunpack.c.l.b16 %v952
        %v2130 = vunpack.c.h.b16 %v952
        %v2131 = vunpack.c.l.b16 %v953
        %v2132 = vunpack.c.h.b16 %v953
        %v2133 = vunpack.c.l.b16 %v954
        %v2134 = vunpack.c.h.b16 %v954
        %v2135 = vunpack.c.l.b16 %v955
        %v2136 = vunpack.c.h.b16 %v955
        %v2137 = vunpack.c.l.b16 %v956
        %v2138 = vunpack.c.h.b16 %v956
        %v2139 = vunpack.c.l.b16 %v957
        %v2140 = vunpack.c.h.b16 %v957
        %v2141 = vunpack.c.l.b16 %v958
        %v2142 = vunpack.c.h.b16 %v958
        %v2143 = vunpack.c.l.b16 %v959
        %v2144 = vunpack.c.h.b16 %v959
        %v2145 = vunpack.c.l.b16 %v960
        %v2146 = vunpack.c.h.b16 %v960
        %v2147 = vunpack.c.l.b16 %v961
        %v2148 = vunpack.c.h.b16 %v961
        %v2149 = vunpack.c.l.b16 %v962
        %v2150 = vunpack.c.h.b16 %v962
        %v2151 = vunpack.c.l.b16 %v963
        %v2152 = vunpack.c.h.b16 %v963
        %v2153 = vunpack.c.l.b16 %v964
        %v2154 = vunpack.c.h.b16 %v964
        %v2155 = vunpack.c.l.b16 %v965
        %v2156 = vunpack.c.h.b16 %v965
        %v2157 = vunpack.c.l.b16 %v966
        %v2158 = vunpack.c.h.b16 %v966
        %v2159 = vunpack.c.l.b16 %v967
        %v2160 = vunpack.c.h.b16 %v967
        %v2161 = vunpack.c.l.b16 %v968
        %v2162 = vunpack.c.h.b16 %v968
        %v2163 = vunpack.c.l.b16 %v969
        %v2164 = vunpack.c.h.b16 %v969
        %v2165 = vunpack.c.l.b16 %v970
        %v2166 = vunpack.c.h.b16 %v970
        %v2167 = vunpack.c.l.b16 %v971
        %v2168 = vunpack.c.h.b16 %v971
        %v2169 = vunpack.c.l.b16 %v972
        %v2170 = vunpack.c.h.b16 %v972
        %v2171 = vunpack.c.l.b16 %v973
        %v2172 = vunpack.c.h.b16 %v973
        %v2173 = vunpack.c.l.b16 %v974
        %v2174 = vunpack.c.h.b16 %v974
        %v2175 = vunpack.c.l.b16 %v975
        %v2176 = vunpack.c.h.b16 %v975
        %v2177 = vunpack.c.l.b16 %v976
        %v2178 = vunpack.c.h.b16 %v976
        %v2179 = vunpack.c.l.b16 %v977
        %v2180 = vunpack.c.h.b16 %v977
        %v2181 = vunpack.c.l.b16 %v978
        %v2182 = vunpack.c.h.b16 %v978
        %v2183 = vunpack.c.l.b16 %v979
        %v2184 = vunpack.c.h.b16 %v979
        %v2185 = vunpack.c.l.b16 %v980
        %v2186 = vunpack.c.h.b16 %v980
        %v2187 = vunpack.c.l.b16 %v981
        %v2188 = vunpack.c.h.b16 %v981
        %v2189 = vunpack.c.l.b16 %v982
        %v2190 = vunpack.c.h.b16 %v982
        %v2191 = vunpack.c.l.b16 %v983
        %v2192 = vunpack.c.h.b16 %v983
        %v2193 = vunpack.c.l.b16 %v984
        %v2194 = vunpack.c.h.b16 %v984
        %v2195 = vunpack.c.l.b16 %v985
        %v2196 = vunpack.c.h.b16 %v985
        %v2197 = vunpack.c.l.b16 %v986
        %v2198 = vunpack.c.h.b16 %v986
        %v2199 = vpack.c.b16 %v1435, %v1431
        %v2200 = vpack.c.b16 %v1436, %v1432
        %v2201 = vpack.c.b16 %v1437, %v1433
        %v2202 = vpack.c.b16 %v1438, %v1434
        %v2203 = vpack.c.b16 %v1443, %v1439
        %v2204 = vpack.c.b16 %v1444, %v1440
        %v2205 = vpack.c.b16 %v1445, %v1441
        %v2206 = vpack.c.b16 %v1446, %v1442
        %v2207 = vpack.c.b16 %v1451, %v1447
        %v2208 = vpack.c.b16 %v1452, %v1448
        %v2209 = vpack.c.b16 %v1453, %v1449
        %v2210 = vpack.c.b16 %v1454, %v1450
        %v2211 = vpack.c.b16 %v1459, %v1455
        %v2212 = vpack.c.b16 %v1460, %v1456
        %v2213 = vpack.c.b16 %v1461, %v1457
        %v2214 = vpack.c.b16 %v1462, %v1458
        %v2215 = vpack.c.b16 %v1467, %v1463
        %v2216 = vpack.c.b16 %v1468, %v1464
        %v2217 = vpack.c.b16 %v1469, %v1465
        %v2218 = vpack.c.b16 %v1470, %v1466
        %v2219 = vpack.c.b16 %v1475, %v1471
        %v2220 = vpack.c.b16 %v1476, %v1472
        %v2221 = vpack.c.b16 %v1477, %v1473
        %v2222 = vpack.c.b16 %v1478, %v1474
        %v2223 = vpack.c.b16 %v1483, %v1479
        %v2224 = vpack.c.b16 %v1484, %v1480
        %v2225 = vpack.c.b16 %v1485, %v1481
        %v2226 = vpack.c.b16 %v1486, %v1482
        %v2227 = vpack.c.b16 %v1491, %v1487
        %v2228 = vpack.c.b16 %v1492, %v1488
        %v2229 = vpack.c.b16 %v1493, %v1489
        %v2230 = vpack.c.b16 %v1494, %v1490
        %v2231 = vpack.c.b16 %v1499, %v1495
        %v2232 = vpack.c.b16 %v1500, %v1496
        %v2233 = vpack.c.b16 %v1501, %v1497
        %v2234 = vpack.c.b16 %v1502, %v1498
        %v2235 = vpack.c.b16 %v1507, %v1503
        %v2236 = vpack.c.b16 %v1508, %v1504
        %v2237 = vpack.c.b16 %v1509, %v1505
        %v2238 = vpack.c.b16 %v1510, %v1506
        %v2239 = vpack.c.b16 %v1515, %v1511
        %v2240 = vpack.c.b16 %v1516, %v1512
        %v2241 = vpack.c.b16 %v1517, %v1513
        %v2242 = vpack.c.b16 %v1518, %v1514
        %v2243 = vpack.c.b16 %v1523, %v1519
        %v2244 = vpack.c.b16 %v1524, %v1520
        %v2245 = vpack.c.b16 %v1525, %v1521
        %v2246 = vpack.c.b16 %v1526, %v1522
        %v2247 = vpack.c.b16 %v1531, %v1527
        %v2248 = vpack.c.b16 %v1532, %v1528
        %v2249 = vpack.c.b16 %v1533, %v1529
        %v2250 = vpack.c.b16 %v1534, %v1530
        %v2251 = vpack.c.b16 %v1539, %v1535
        %v2252 = vpack.c.b16 %v1540, %v1536
        %v2253 = vpack.c.b16 %v1541, %v1537
        %v2254 = vpack.c.b16 %v1542, %v1538
        %v2255 = vpack.c.b16 %v1547, %v1543
        %v2256 = vpack.c.b16 %v1548, %v1544
        %v2257 = vpack.c.b16 %v1549, %v1545
        %v2258 = vpack.c.b16 %v1550, %v1546
        %v2259 = vpack.c.b16 %v1555, %v1551
        %v2260 = vpack.c.b16 %v1556, %v1552
        %v2261 = vpack.c.b16 %v1557, %v1553
        %v2262 = vpack.c.b16 %v1558, %v1554
        %v2263 = vpack.c.b16 %v1563, %v1559
        %v2264 = vpack.c.b16 %v1564, %v1560
        %v2265 = vpack.c.b16 %v1565, %v1561
        %v2266 = vpack.c.b16 %v1566, %v1562
        %v2267 = vpack.c.b16 %v1571, %v1567
        %v2268 = vpack.c.b16 %v1572, %v1568
        %v2269 = vpack.c.b16 %v1573, %v1569
        %v2270 = vpack.c.b16 %v1574, %v1570
        %v2271 = vpack.c.b16 %v1579, %v1575
        %v2272 = vpack.c.b16 %v1580, %v1576
        %v2273 = vpack.c.b16 %v1581, %v1577
        %v2274 = vpack.c.b16 %v1582, %v1578
        %v2275 = vpack.c.b16 %v1587, %v1583
        %v2276 = vpack.c.b16 %v1588, %v1584
        %v2277 = vpack.c.b16 %v1589, %v1585
        %v2278 = vpack.c.b16 %v1590, %v1586
        %v2279 = vpack.c.b16 %v1595, %v1591
        %v2280 = vpack.c.b16 %v1596, %v1592
        %v2281 = vpack.c.b16 %v1597, %v1593
        %v2282 = vpack.c.b16 %v1598, %v1594
        %v2283 = vpack.c.b16 %v1603, %v1599
        %v2284 = vpack.c.b16 %v1604, %v1600
        %v2285 = vpack.c.b16 %v1605, %v1601
        %v2286 = vpack.c.b16 %v1606, %v1602
        %v2287 = vpack.c.b16 %v1611, %v1607
        %v2288 = vpack.c.b16 %v1612, %v1608
        %v2289 = vpack.c.b16 %v1613, %v1609
        %v2290 = vpack.c.b16 %v1614, %v1610
        %v2291 = vpack.c.b16 %v1619, %v1615
        %v2292 = vpack.c.b16 %v1620, %v1616
        %v2293 = vpack.c.b16 %v1621, %v1617
        %v2294 = vpack.c.b16 %v1622, %v1618
        %v2295 = vpack.c.b16 %v1627, %v1623
        %v2296 = vpack.c.b16 %v1628, %v1624
        %v2297 = vpack.c.b16 %v1629, %v1625
        %v2298 = vpack.c.b16 %v1630, %v1626
        %v2299 = vpack.c.b16 %v1635, %v1631
        %v2300 = vpack.c.b16 %v1636, %v1632
        %v2301 = vpack.c.b16 %v1637, %v1633
        %v2302 = vpack.c.b16 %v1638, %v1634
        %v2303 = vpack.c.b16 %v1643, %v1639
        %v2304 = vpack.c.b16 %v1644, %v1640
        %v2305 = vpack.c.b16 %v1645, %v1641
        %v2306 = vpack.c.b16 %v1646, %v1642
        %v2307 = vpack.c.b16 %v1651, %v1647
        %v2308 = vpack.c.b16 %v1652, %v1648
        %v2309 = vpack.c.b16 %v1653, %v1649
        %v2310 = vpack.c.b16 %v1654, %v1650
        %v2311 = vpack.c.b16 %v1659, %v1655
        %v2312 = vpack.c.b16 %v1660, %v1656
        %v2313 = vpack.c.b16 %v1661, %v1657
        %v2314 = vpack.c.b16 %v1662, %v1658
        %v2315 = vpack.c.b16 %v1667, %v1663
        %v2316 = vpack.c.b16 %v1668, %v1664
        %v2317 = vpack.c.b16 %v1669, %v1665
        %v2318 = vpack.c.b16 %v1670, %v1666
        %v2319 = vpack.c.b16 %v1675, %v1671
        %v2320 = vpack.c.b16 %v1676, %v1672
        %v2321 = vpack.c.b16 %v1677, %v1673
        %v2322 = vpack.c.b16 %v1678, %v1674
        %v2323 = vpack.c.b16 %v1683, %v1679
        %v2324 = vpack.c.b16 %v1684, %v1680
        %v2325 = vpack.c.b16 %v1685, %v1681
        %v2326 = vpack.c.b16 %v1686, %v1682
        %v2327 = vpack.c.b16 %v1691, %v1687
        %v2328 = vpack.c.b16 %v1692, %v1688
        %v2329 = vpack.c.b16 %v1693, %v1689
        %v2330 = vpack.c.b16 %v1694, %v1690
        %v2331 = vpack.c.b16 %v1699, %v1695
        %v2332 = vpack.c.b16 %v1700, %v1696
        %v2333 = vpack.c.b16 %v1701, %v1697
        %v2334 = vpack.c.b16 %v1702, %v1698
        %v2335 = vpack.c.b16 %v1707, %v1703
        %v2336 = vpack.c.b16 %v1708, %v1704
        %v2337 = vpack.c.b16 %v1709, %v1705
        %v2338 = vpack.c.b16 %v1710, %v1706
        %v2339 = vpack.c.b16 %v1715, %v1711
        %v2340 = vpack.c.b16 %v1716, %v1712
        %v2341 = vpack.c.b16 %v1717, %v1713
        %v2342 = vpack.c.b16 %v1718, %v1714
        %v2343 = vpack.c.b16 %v1723, %v1719
        %v2344 = vpack.c.b16 %v1724, %v1720
        %v2345 = vpack.c.b16 %v1725, %v1721
        %v2346 = vpack.c.b16 %v1726, %v1722
        %v2347 = vpack.c.b16 %v1731, %v1727
        %v2348 = vpack.c.b16 %v1732, %v1728
        %v2349 = vpack.c.b16 %v1733, %v1729
        %v2350 = vpack.c.b16 %v1734, %v1730
        %v2351 = vpack.c.b16 %v1739, %v1735
        %v2352 = vpack.c.b16 %v1740, %v1736
        %v2353 = vpack.c.b16 %v1741, %v1737
        %v2354 = vpack.c.b16 %v1742, %v1738
        %v2355 = vpack.c.b16 %v1747, %v1743
        %v2356 = vpack.c.b16 %v1748, %v1744
        %v2357 = vpack.c.b16 %v1749, %v1745
        %v2358 = vpack.c.b16 %v1750, %v1746
        %v2359 = vpack.c.b16 %v1755, %v1751
        %v2360 = vpack.c.b16 %v1756, %v1752
        %v2361 = vpack.c.b16 %v1757, %v1753
        %v2362 = vpack.c.b16 %v1758, %v1754
        %v2363 = vpack.c.b16 %v1763, %v1759
        %v2364 = vpack.c.b16 %v1764, %v1760
        %v2365 = vpack.c.b16 %v1765, %v1761
        %v2366 = vpack.c.b16 %v1766, %v1762
        %v2367 = vpack.c.b16 %v1771, %v1767
        %v2368 = vpack.c.b16 %v1772, %v1768
        %v2369 = vpack.c.b16 %v1773, %v1769
        %v2370 = vpack.c.b16 %v1774, %v1770
        %v2371 = vpack.c.b16 %v1779, %v1775
        %v2372 = vpack.c.b16 %v1780, %v1776
        %v2373 = vpack.c.b16 %v1781, %v1777
        %v2374 = vpack.c.b16 %v1782, %v1778
        %v2375 = vpack.c.b16 %v1787, %v1783
        %v2376 = vpack.c.b16 %v1788, %v1784
        %v2377 = vpack.c.b16 %v1789, %v1785
        %v2378 = vpack.c.b16 %v1790, %v1786
        %v2379 = vpack.c.b16 %v1795, %v1791
        %v2380 = vpack.c.b16 %v1796, %v1792
        %v2381 = vpack.c.b16 %v1797, %v1793
        %v2382 = vpack.c.b16 %v1798, %v1794
        %v2383 = vpack.c.b16 %v1803, %v1799
        %v2384 = vpack.c.b16 %v1804, %v1800
        %v2385 = vpack.c.b16 %v1805, %v1801
        %v2386 = vpack.c.b16 %v1806, %v1802
        %v2387 = vpack.c.b16 %v1811, %v1807
        %v2388 = vpack.c.b16 %v1812, %v1808
        %v2389 = vpack.c.b16 %v1813, %v1809
        %v2390 = vpack.c.b16 %v1814, %v1810
        %v2391 = vpack.c.b16 %v1819, %v1815
        %v2392 = vpack.c.b16 %v1820, %v1816
        %v2393 = vpack.c.b16 %v1821, %v1817
        %v2394 = vpack.c.b16 %v1822, %v1818
        %v2395 = vpack.c.b16 %v1827, %v1823
        %v2396 = vpack.c.b16 %v1828, %v1824
        %v2397 = vpack.c.b16 %v1829, %v1825
        %v2398 = vpack.c.b16 %v1830, %v1826
        %v2399 = vpack.c.b16 %v1835, %v1831
        %v2400 = vpack.c.b16 %v1836, %v1832
        %v2401 = vpack.c.b16 %v1837, %v1833
        %v2402 = vpack.c.b16 %v1838, %v1834
        %v2403 = vpack.c.b16 %v1843, %v1839
        %v2404 = vpack.c.b16 %v1844, %v1840
        %v2405 = vpack.c.b16 %v1845, %v1841
        %v2406 = vpack.c.b16 %v1846, %v1842
        %v2407 = vpack.c.b16 %v1851, %v1847
        %v2408 = vpack.c.b16 %v1852, %v1848
        %v2409 = vpack.c.b16 %v1853, %v1849
        %v2410 = vpack.c.b16 %v1854, %v1850
        %v2411 = vpack.c.b16 %v1859, %v1855
        %v2412 = vpack.c.b16 %v1860, %v1856
        %v2413 = vpack.c.b16 %v1861, %v1857
        %v2414 = vpack.c.b16 %v1862, %v1858
        %v2415 = vpack.c.b16 %v1867, %v1863
        %v2416 = vpack.c.b16 %v1868, %v1864
        %v2417 = vpack.c.b16 %v1869, %v1865
        %v2418 = vpack.c.b16 %v1870, %v1866
        %v2419 = vpack.c.b16 %v1875, %v1871
        %v2420 = vpack.c.b16 %v1876, %v1872
        %v2421 = vpack.c.b16 %v1877, %v1873
        %v2422 = vpack.c.b16 %v1878, %v1874
        %v2423 = vpack.c.b16 %v1883, %v1879
        %v2424 = vpack.c.b16 %v1884, %v1880
        %v2425 = vpack.c.b16 %v1885, %v1881
        %v2426 = vpack.c.b16 %v1886, %v1882
        %v2427 = vpack.c.b16 %v1891, %v1887
        %v2428 = vpack.c.b16 %v1892, %v1888
        %v2429 = vpack.c.b16 %v1893, %v1889
        %v2430 = vpack.c.b16 %v1894, %v1890
        %v2431 = vpack.c.b16 %v1899, %v1895
        %v2432 = vpack.c.b16 %v1900, %v1896
        %v2433 = vpack.c.b16 %v1901, %v1897
        %v2434 = vpack.c.b16 %v1902, %v1898
        %v2435 = vpack.c.b16 %v1907, %v1903
        %v2436 = vpack.c.b16 %v1908, %v1904
        %v2437 = vpack.c.b16 %v1909, %v1905
        %v2438 = vpack.c.b16 %v1910, %v1906
        %v2439 = vpack.c.b16 %v1915, %v1911
        %v2440 = vpack.c.b16 %v1916, %v1912
        %v2441 = vpack.c.b16 %v1917, %v1913
        %v2442 = vpack.c.b16 %v1918, %v1914
        %v2443 = vpack.c.b16 %v1923, %v1919
        %v2444 = vpack.c.b16 %v1924, %v1920
        %v2445 = vpack.c.b16 %v1925, %v1921
        %v2446 = vpack.c.b16 %v1926, %v1922
        %v2447 = vpack.c.b16 %v1931, %v1927
        %v2448 = vpack.c.b16 %v1932, %v1928
        %v2449 = vpack.c.b16 %v1933, %v1929
        %v2450 = vpack.c.b16 %v1934, %v1930
        %v2451 = vpack.c.b16 %v1939, %v1935
        %v2452 = vpack.c.b16 %v1940, %v1936
        %v2453 = vpack.c.b16 %v1941, %v1937
        %v2454 = vpack.c.b16 %v1942, %v1938
        %v2455 = vpack.c.b16 %v1947, %v1943
        %v2456 = vpack.c.b16 %v1948, %v1944
        %v2457 = vpack.c.b16 %v1949, %v1945
        %v2458 = vpack.c.b16 %v1950, %v1946
        %v2459 = vpack.c.b16 %v1955, %v1951
        %v2460 = vpack.c.b16 %v1956, %v1952
        %v2461 = vpack.c.b16 %v1957, %v1953
        %v2462 = vpack.c.b16 %v1958, %v1954
        %v2463 = vpack.c.b16 %v1963, %v1959
        %v2464 = vpack.c.b16 %v1964, %v1960
        %v2465 = vpack.c.b16 %v1965, %v1961
        %v2466 = vpack.c.b16 %v1966, %v1962
        %v2467 = vpack.c.b16 %v1971, %v1967
        %v2468 = vpack.c.b16 %v1972, %v1968
        %v2469 = vpack.c.b16 %v1973, %v1969
        %v2470 = vpack.c.b16 %v1974, %v1970
        %v2471 = vpack.c.b16 %v1979, %v1975
        %v2472 = vpack.c.b16 %v1980, %v1976
        %v2473 = vpack.c.b16 %v1981, %v1977
        %v2474 = vpack.c.b16 %v1982, %v1978
        %v2475 = vpack.c.b16 %v1987, %v1983
        %v2476 = vpack.c.b16 %v1988, %v1984
        %v2477 = vpack.c.b16 %v1989, %v1985
        %v2478 = vpack.c.b16 %v1990, %v1986
        %v2479 = vpack.c.b16 %v1995, %v1991
        %v2480 = vpack.c.b16 %v1996, %v1992
        %v2481 = vpack.c.b16 %v1997, %v1993
        %v2482 = vpack.c.b16 %v1998, %v1994
        %v2483 = vpack.c.b16 %v2003, %v1999
        %v2484 = vpack.c.b16 %v2004, %v2000
        %v2485 = vpack.c.b16 %v2005, %v2001
        %v2486 = vpack.c.b16 %v2006, %v2002
        %v2487 = vpack.c.b16 %v2011, %v2007
        %v2488 = vpack.c.b16 %v2012, %v2008
        %v2489 = vpack.c.b16 %v2013, %v2009
        %v2490 = vpack.c.b16 %v2014, %v2010
        %v2491 = vpack.c.b16 %v2019, %v2015
        %v2492 = vpack.c.b16 %v2020, %v2016
        %v2493 = vpack.c.b16 %v2021, %v2017
        %v2494 = vpack.c.b16 %v2022, %v2018
        %v2495 = vpack.c.b16 %v2027, %v2023
        %v2496 = vpack.c.b16 %v2028, %v2024
        %v2497 = vpack.c.b16 %v2029, %v2025
        %v2498 = vpack.c.b16 %v2030, %v2026
        %v2499 = vpack.c.b16 %v2035, %v2031
        %v2500 = vpack.c.b16 %v2036, %v2032
        %v2501 = vpack.c.b16 %v2037, %v2033
        %v2502 = vpack.c.b16 %v2038, %v2034
        %v2503 = vpack.c.b16 %v2043, %v2039
        %v2504 = vpack.c.b16 %v2044, %v2040
        %v2505 = vpack.c.b16 %v2045, %v2041
        %v2506 = vpack.c.b16 %v2046, %v2042
        %v2507 = vpack.c.b16 %v2051, %v2047
        %v2508 = vpack.c.b16 %v2052, %v2048
        %v2509 = vpack.c.b16 %v2053, %v2049
        %v2510 = vpack.c.b16 %v2054, %v2050
        %v2511 = vpack.c.b16 %v2059, %v2055
        %v2512 = vpack.c.b16 %v2060, %v2056
        %v2513 = vpack.c.b16 %v2061, %v2057
        %v2514 = vpack.c.b16 %v2062, %v2058
        %v2515 = vpack.c.b16 %v2067, %v2063
        %v2516 = vpack.c.b16 %v2068, %v2064
        %v2517 = vpack.c.b16 %v2069, %v2065
        %v2518 = vpack.c.b16 %v2070, %v2066
        %v2519 = vpack.c.b16 %v2075, %v2071
        %v2520 = vpack.c.b16 %v2076, %v2072
        %v2521 = vpack.c.b16 %v2077, %v2073
        %v2522 = vpack.c.b16 %v2078, %v2074
        %v2523 = vpack.c.b16 %v2083, %v2079
        %v2524 = vpack.c.b16 %v2084, %v2080
        %v2525 = vpack.c.b16 %v2085, %v2081
        %v2526 = vpack.c.b16 %v2086, %v2082
        %v2527 = vpack.c.b16 %v2091, %v2087
        %v2528 = vpack.c.b16 %v2092, %v2088
        %v2529 = vpack.c.b16 %v2093, %v2089
        %v2530 = vpack.c.b16 %v2094, %v2090
        %v2531 = vpack.c.b16 %v2099, %v2095
        %v2532 = vpack.c.b16 %v2100, %v2096
        %v2533 = vpack.c.b16 %v2101, %v2097
        %v2534 = vpack.c.b16 %v2102, %v2098
        %v2535 = vpack.c.b16 %v2107, %v2103
        %v2536 = vpack.c.b16 %v2108, %v2104
        %v2537 = vpack.c.b16 %v2109, %v2105
        %v2538 = vpack.c.b16 %v2110, %v2106
        %v2539 = vpack.c.b16 %v2115, %v2111
        %v2540 = vpack.c.b16 %v2116, %v2112
        %v2541 = vpack.c.b16 %v2117, %v2113
        %v2542 = vpack.c.b16 %v2118, %v2114
        %v2543 = vpack.c.b16 %v2123, %v2119
        %v2544 = vpack.c.b16 %v2124, %v2120
        %v2545 = vpack.c.b16 %v2125, %v2121
        %v2546 = vpack.c.b16 %v2126, %v2122
        %v2547 = vpack.c.b16 %v2131, %v2127
        %v2548 = vpack.c.b16 %v2132, %v2128
        %v2549 = vpack.c.b16 %v2133, %v2129
        %v2550 = vpack.c.b16 %v2134, %v2130
        %v2551 = vpack.c.b16 %v2139, %v2135
        %v2552 = vpack.c.b16 %v2140, %v2136
        %v2553 = vpack.c.b16 %v2141, %v2137
        %v2554 = vpack.c.b16 %v2142, %v2138
        %v2555 = vpack.c.b16 %v2147, %v2143
        %v2556 = vpack.c.b16 %v2148, %v2144
        %v2557 = vpack.c.b16 %v2149, %v2145
        %v2558 = vpack.c.b16 %v2150, %v2146
        %v2559 = vpack.c.b16 %v2155, %v2151
        %v2560 = vpack.c.b16 %v2156, %v2152
        %v2561 = vpack.c.b16 %v2157, %v2153
        %v2562 = vpack.c.b16 %v2158, %v2154
        %v2563 = vpack.c.b16 %v2163, %v2159
        %v2564 = vpack.c.b16 %v2164, %v2160
        %v2565 = vpack.c.b16 %v2165, %v2161
        %v2566 = vpack.c.b16 %v2166, %v2162
        %v2567 = vpack.c.b16 %v2171, %v2167
        %v2568 = vpack.c.b16 %v2172, %v2168
        %v2569 = vpack.c.b16 %v2173, %v2169
        %v2570 = vpack.c.b16 %v2174, %v2170
        %v2571 = vpack.c.b16 %v2179, %v2175
        %v2572 = vpack.c.b16 %v2180, %v2176
        %v2573 = vpack.c.b16 %v2181, %v2177
        %v2574 = vpack.c.b16 %v2182, %v2178
        %v2575 = vpack.c.b16 %v2187, %v2183
        %v2576 = vpack.c.b16 %v2188, %v2184
        %v2577 = vpack.c.b16 %v2189, %v2185
        %v2578 = vpack.c.b16 %v2190, %v2186
        %v2579 = vpack.c.b16 %v2195, %v2191
        %v2580 = vpack.c.b16 %v2196, %v2192
        %v2581 = vpack.c.b16 %v2197, %v2193
        %v2582 = vpack.c.b16 %v2198, %v2194
        %2967 = vmatprep.subr.bf16.mxu0 %v2200
        %2968 = vmatpush1.bf16.msra.mxu0 %v2199
        %2969 = vmatprep.subr.bf16.mxu0 %v2204
        %2970 = vmatpush1.bf16.msra.mxu0 %v2203
        %2971 = vmatprep.subr.bf16.mxu0 %v2208
        %2972 = vmatpush1.bf16.msra.mxu0 %v2207
        %2973 = vmatprep.subr.bf16.mxu0 %v2212
        %2974 = vmatpush1.bf16.msra.mxu0 %v2211
        %2975 = vmatprep.subr.bf16.mxu0 %v2216
        %2976 = vmatpush1.bf16.msra.mxu0 %v2215
        %2977 = vmatprep.subr.bf16.mxu0 %v2220
        %2978 = vmatpush1.bf16.msra.mxu0 %v2219
        %2979 = vmatprep.subr.bf16.mxu0 %v2224
        %2980 = vmatpush1.bf16.msra.mxu0 %v2223
        %2981 = vmatprep.subr.bf16.mxu0 %v2228
        %2982 = vmatpush1.bf16.msra.mxu0 %v2227
        %2983 = vmatprep.subr.bf16.mxu0 %v2232
        %2984 = vmatpush1.bf16.msra.mxu0 %v2231
        %2985 = vmatprep.subr.bf16.mxu0 %v2236
        %2986 = vmatpush1.bf16.msra.mxu0 %v2235
        %2987 = vmatprep.subr.bf16.mxu0 %v2240
        %2988 = vmatpush1.bf16.msra.mxu0 %v2239
        %2989 = vmatprep.subr.bf16.mxu0 %v2244
        %2990 = vmatpush1.bf16.msra.mxu0 %v2243
        %2991 = vmatprep.subr.bf16.mxu0 %v2248
        %2992 = vmatpush1.bf16.msra.mxu0 %v2247
        %2993 = vmatprep.subr.bf16.mxu0 %v2252
        %2994 = vmatpush1.bf16.msra.mxu0 %v2251
        %2995 = vmatprep.subr.bf16.mxu0 %v2256
        %2996 = vmatpush1.bf16.msra.mxu0 %v2255
        %2997 = vmatprep.subr.bf16.mxu0 %v2260
        %2998 = vmatpush1.bf16.msra.mxu0 %v2259
        %2999 = vmatprep.mubr.bf16.mxu0 %v1024
        %3000 = vmatmul.mubr.bf16.gmra.mrb[0].mxu0 %v1023
        %v3001 = vpop.f32.mrb[0].mxu0
        %v3002 = vadd.f32 0.0, %v3001
        %v3003 = vpop.f32.mrb[0].mxu0
        %v3004 = vadd.f32 0.0, %v3003
        %v3005 = vpop.f32.mrb[0].mxu0
        %v3006 = vadd.f32 0.0, %v3005
        %v3007 = vpop.f32.mrb[0].mxu0
        %v3008 = vadd.f32 0.0, %v3007
        %3009 = vdwg.mxu0
        %3010 = vmatprep.subr.bf16.mxu0 %v2264
        %3011 = vmatpush1.bf16.msra.mxu0 %v2263
        %3012 = vmatprep.subr.bf16.mxu0 %v2268
        %3013 = vmatpush1.bf16.msra.mxu0 %v2267
        %3014 = vmatprep.subr.bf16.mxu0 %v2272
        %3015 = vmatpush1.bf16.msra.mxu0 %v2271
        %3016 = vmatprep.subr.bf16.mxu0 %v2276
        %3017 = vmatpush1.bf16.msra.mxu0 %v2275
        %3018 = vmatprep.subr.bf16.mxu0 %v2280
        %3019 = vmatpush1.bf16.msra.mxu0 %v2279
        %3020 = vmatprep.subr.bf16.mxu0 %v2284
        %3021 = vmatpush1.bf16.msra.mxu0 %v2283
        %3022 = vmatprep.subr.bf16.mxu0 %v2288
        %3023 = vmatpush1.bf16.msra.mxu0 %v2287
        %3024 = vmatprep.subr.bf16.mxu0 %v2292
        %3025 = vmatpush1.bf16.msra.mxu0 %v2291
        %3026 = vmatprep.subr.bf16.mxu0 %v2296
        %3027 = vmatpush1.bf16.msra.mxu0 %v2295
        %3028 = vmatprep.subr.bf16.mxu0 %v2300
        %3029 = vmatpush1.bf16.msra.mxu0 %v2299
        %3030 = vmatprep.subr.bf16.mxu0 %v2304
        %3031 = vmatpush1.bf16.msra.mxu0 %v2303
        %3032 = vmatprep.subr.bf16.mxu0 %v2308
        %3033 = vmatpush1.bf16.msra.mxu0 %v2307
        %3034 = vmatprep.subr.bf16.mxu0 %v2312
        %3035 = vmatpush1.bf16.msra.mxu0 %v2311
        %3036 = vmatprep.subr.bf16.mxu0 %v2316
        %3037 = vmatpush1.bf16.msra.mxu0 %v2315
        %3038 = vmatprep.subr.bf16.mxu0 %v2320
        %3039 = vmatpush1.bf16.msra.mxu0 %v2319
        %3040 = vmatprep.subr.bf16.mxu0 %v2324
        %3041 = vmatpush1.bf16.msra.mxu0 %v2323
        %3042 = vmatprep.mubr.bf16.mxu0 %v1026
        %3043 = vmatmul.mubr.bf16.gmra.mrb[0].mxu0 %v1025
        %v3044 = vpop.f32.mrb[0].mxu0
        %v3045 = vadd.f32 %v3002, %v3044
        %v3046 = vpop.f32.mrb[0].mxu0
        %v3047 = vadd.f32 %v3004, %v3046
        %v3048 = vpop.f32.mrb[0].mxu0
        %v3049 = vadd.f32 %v3006, %v3048
        %v3050 = vpop.f32.mrb[0].mxu0
        %v3051 = vadd.f32 %v3008, %v3050
        %3052 = vdwg.mxu0
        %3053 = vmatprep.subr.bf16.mxu0 %v2328
        %3054 = vmatpush1.bf16.msra.mxu0 %v2327
        %3055 = vmatprep.subr.bf16.mxu0 %v2332
        %3056 = vmatpush1.bf16.msra.mxu0 %v2331
        %3057 = vmatprep.subr.bf16.mxu0 %v2336
        %3058 = vmatpush1.bf16.msra.mxu0 %v2335
        %3059 = vmatprep.subr.bf16.mxu0 %v2340
        %3060 = vmatpush1.bf16.msra.mxu0 %v2339
        %3061 = vmatprep.subr.bf16.mxu0 %v2344
        %3062 = vmatpush1.bf16.msra.mxu0 %v2343
        %3063 = vmatprep.subr.bf16.mxu0 %v2348
        %3064 = vmatpush1.bf16.msra.mxu0 %v2347
        %3065 = vmatprep.subr.bf16.mxu0 %v2352
        %3066 = vmatpush1.bf16.msra.mxu0 %v2351
        %3067 = vmatprep.subr.bf16.mxu0 %v2356
        %3068 = vmatpush1.bf16.msra.mxu0 %v2355
        %3069 = vmatprep.subr.bf16.mxu0 %v2360
        %3070 = vmatpush1.bf16.msra.mxu0 %v2359
        %3071 = vmatprep.subr.bf16.mxu0 %v2364
        %3072 = vmatpush1.bf16.msra.mxu0 %v2363
        %3073 = vmatprep.subr.bf16.mxu0 %v2368
        %3074 = vmatpush1.bf16.msra.mxu0 %v2367
        %3075 = vmatprep.subr.bf16.mxu0 %v2372
        %3076 = vmatpush1.bf16.msra.mxu0 %v2371
        %3077 = vmatprep.subr.bf16.mxu0 %v2376
        %3078 = vmatpush1.bf16.msra.mxu0 %v2375
        %3079 = vmatprep.subr.bf16.mxu0 %v2380
        %3080 = vmatpush1.bf16.msra.mxu0 %v2379
        %3081 = vmatprep.subr.bf16.mxu0 %v2384
        %3082 = vmatpush1.bf16.msra.mxu0 %v2383
        %3083 = vmatprep.subr.bf16.mxu0 %v2388
        %3084 = vmatpush1.bf16.msra.mxu0 %v2387
        %3085 = vmatprep.mubr.bf16.mxu0 %v1028
        %3086 = vmatmul.mubr.bf16.gmra.mrb[0].mxu0 %v1027
        %v3087 = vpop.f32.mrb[0].mxu0
        %v3088 = vadd.f32 %v3045, %v3087
        %v3089 = vpop.f32.mrb[0].mxu0
        %v3090 = vadd.f32 %v3047, %v3089
        %v3091 = vpop.f32.mrb[0].mxu0
        %v3092 = vadd.f32 %v3049, %v3091
        %v3093 = vpop.f32.mrb[0].mxu0
        %v3094 = vadd.f32 %v3051, %v3093
        %3095 = vdwg.mxu0
        %3096 = vmatprep.subr.bf16.mxu0 %v2392
        %3097 = vmatpush1.bf16.msra.mxu0 %v2391
        %3098 = vmatprep.subr.bf16.mxu0 %v2396
        %3099 = vmatpush1.bf16.msra.mxu0 %v2395
        %3100 = vmatprep.subr.bf16.mxu0 %v2400
        %3101 = vmatpush1.bf16.msra.mxu0 %v2399
        %3102 = vmatprep.subr.bf16.mxu0 %v2404
        %3103 = vmatpush1.bf16.msra.mxu0 %v2403
        %3104 = vmatprep.subr.bf16.mxu0 %v2408
        %3105 = vmatpush1.bf16.msra.mxu0 %v2407
        %3106 = vmatprep.subr.bf16.mxu0 %v2412
        %3107 = vmatpush1.bf16.msra.mxu0 %v2411
        %3108 = vmatprep.subr.bf16.mxu0 %v2416
        %3109 = vmatpush1.bf16.msra.mxu0 %v2415
        %3110 = vmatprep.subr.bf16.mxu0 %v2420
        %3111 = vmatpush1.bf16.msra.mxu0 %v2419
        %3112 = vmatprep.subr.bf16.mxu0 %v2424
        %3113 = vmatpush1.bf16.msra.mxu0 %v2423
        %3114 = vmatprep.subr.bf16.mxu0 %v2428
        %3115 = vmatpush1.bf16.msra.mxu0 %v2427
        %3116 = vmatprep.subr.bf16.mxu0 %v2432
        %3117 = vmatpush1.bf16.msra.mxu0 %v2431
        %3118 = vmatprep.subr.bf16.mxu0 %v2436
        %3119 = vmatpush1.bf16.msra.mxu0 %v2435
        %3120 = vmatprep.subr.bf16.mxu0 %v2440
        %3121 = vmatpush1.bf16.msra.mxu0 %v2439
        %3122 = vmatprep.subr.bf16.mxu0 %v2444
        %3123 = vmatpush1.bf16.msra.mxu0 %v2443
        %3124 = vmatprep.subr.bf16.mxu0 %v2448
        %3125 = vmatpush1.bf16.msra.mxu0 %v2447
        %3126 = vmatprep.subr.bf16.mxu0 %v2452
        %3127 = vmatpush1.bf16.msra.mxu0 %v2451
        %3128 = vmatprep.mubr.bf16.mxu0 %v1030
        %3129 = vmatmul.mubr.bf16.gmra.mrb[0].mxu0 %v1029
        %v3130 = vpop.f32.mrb[0].mxu0
        %v3131 = vadd.f32 %v3088, %v3130
        %v3132 = vpop.f32.mrb[0].mxu0
        %v3133 = vadd.f32 %v3090, %v3132
        %v3134 = vpop.f32.mrb[0].mxu0
        %v3135 = vadd.f32 %v3092, %v3134
        %v3136 = vpop.f32.mrb[0].mxu0
        %v3137 = vadd.f32 %v3094, %v3136
        %3138 = vdwg.mxu0
        %3139 = vmatprep.subr.bf16.mxu0 %v2456
        %3140 = vmatpush1.bf16.msra.mxu0 %v2455
        %3141 = vmatprep.subr.bf16.mxu0 %v2460
        %3142 = vmatpush1.bf16.msra.mxu0 %v2459
        %3143 = vmatprep.subr.bf16.mxu0 %v2464
        %3144 = vmatpush1.bf16.msra.mxu0 %v2463
        %3145 = vmatprep.subr.bf16.mxu0 %v2468
        %3146 = vmatpush1.bf16.msra.mxu0 %v2467
        %3147 = vmatprep.subr.bf16.mxu0 %v2472
        %3148 = vmatpush1.bf16.msra.mxu0 %v2471
        %3149 = vmatprep.subr.bf16.mxu0 %v2476
        %3150 = vmatpush1.bf16.msra.mxu0 %v2475
        %3151 = vmatprep.subr.bf16.mxu0 %v2480
        %3152 = vmatpush1.bf16.msra.mxu0 %v2479
        %3153 = vmatprep.subr.bf16.mxu0 %v2484
        %3154 = vmatpush1.bf16.msra.mxu0 %v2483
        %3155 = vmatprep.subr.bf16.mxu0 %v2488
        %3156 = vmatpush1.bf16.msra.mxu0 %v2487
        %3157 = vmatprep.subr.bf16.mxu0 %v2492
        %3158 = vmatpush1.bf16.msra.mxu0 %v2491
        %3159 = vmatprep.subr.bf16.mxu0 %v2496
        %3160 = vmatpush1.bf16.msra.mxu0 %v2495
        %3161 = vmatprep.subr.bf16.mxu0 %v2500
        %3162 = vmatpush1.bf16.msra.mxu0 %v2499
        %3163 = vmatprep.subr.bf16.mxu0 %v2504
        %3164 = vmatpush1.bf16.msra.mxu0 %v2503
        %3165 = vmatprep.subr.bf16.mxu0 %v2508
        %3166 = vmatpush1.bf16.msra.mxu0 %v2507
        %3167 = vmatprep.subr.bf16.mxu0 %v2512
        %3168 = vmatpush1.bf16.msra.mxu0 %v2511
        %3169 = vmatprep.subr.bf16.mxu0 %v2516
        %3170 = vmatpush1.bf16.msra.mxu0 %v2515
        %3171 = vmatprep.mubr.bf16.mxu0 %v1032
        %3172 = vmatmul.mubr.bf16.gmra.mrb[0].mxu0 %v1031
        %v3173 = vpop.f32.mrb[0].mxu0
        %v3174 = vadd.f32 %v3131, %v3173
        %v3175 = vpop.f32.mrb[0].mxu0
        %v3176 = vadd.f32 %v3133, %v3175
        %v3177 = vpop.f32.mrb[0].mxu0
        %v3178 = vadd.f32 %v3135, %v3177
        %v3179 = vpop.f32.mrb[0].mxu0
        %v3180 = vadd.f32 %v3137, %v3179
        %3181 = vdwg.mxu0
        %3182 = vmatprep.subr.bf16.mxu0 %v2520
        %3183 = vmatpush1.bf16.msra.mxu0 %v2519
        %3184 = vmatprep.subr.bf16.mxu0 %v2524
        %3185 = vmatpush1.bf16.msra.mxu0 %v2523
        %3186 = vmatprep.subr.bf16.mxu0 %v2528
        %3187 = vmatpush1.bf16.msra.mxu0 %v2527
        %3188 = vmatprep.subr.bf16.mxu0 %v2532
        %3189 = vmatpush1.bf16.msra.mxu0 %v2531
        %3190 = vmatprep.subr.bf16.mxu0 %v2536
        %3191 = vmatpush1.bf16.msra.mxu0 %v2535
        %3192 = vmatprep.subr.bf16.mxu0 %v2540
        %3193 = vmatpush1.bf16.msra.mxu0 %v2539
        %3194 = vmatprep.subr.bf16.mxu0 %v2544
        %3195 = vmatpush1.bf16.msra.mxu0 %v2543
        %3196 = vmatprep.subr.bf16.mxu0 %v2548
        %3197 = vmatpush1.bf16.msra.mxu0 %v2547
        %3198 = vmatprep.subr.bf16.mxu0 %v2552
        %3199 = vmatpush1.bf16.msra.mxu0 %v2551
        %3200 = vmatprep.subr.bf16.mxu0 %v2556
        %3201 = vmatpush1.bf16.msra.mxu0 %v2555
        %3202 = vmatprep.subr.bf16.mxu0 %v2560
        %3203 = vmatpush1.bf16.msra.mxu0 %v2559
        %3204 = vmatprep.subr.bf16.mxu0 %v2564
        %3205 = vmatpush1.bf16.msra.mxu0 %v2563
        %3206 = vmatprep.subr.bf16.mxu0 %v2568
        %3207 = vmatpush1.bf16.msra.mxu0 %v2567
        %3208 = vmatprep.subr.bf16.mxu0 %v2572
        %3209 = vmatpush1.bf16.msra.mxu0 %v2571
        %3210 = vmatprep.subr.bf16.mxu0 %v2576
        %3211 = vmatpush1.bf16.msra.mxu0 %v2575
        %3212 = vmatprep.subr.bf16.mxu0 %v2580
        %3213 = vmatpush1.bf16.msra.mxu0 %v2579
        %3214 = vmatprep.mubr.bf16.mxu0 %v1034
        %3215 = vmatmul.mubr.bf16.gmra.mrb[0].mxu0 %v1033
        %v3216 = vpop.f32.mrb[0].mxu0
        %v3217 = vadd.f32 %v3174, %v3216
        %v3218 = vpop.f32.mrb[0].mxu0
        %v3219 = vadd.f32 %v3176, %v3218
        %v3220 = vpop.f32.mrb[0].mxu0
        %v3221 = vadd.f32 %v3178, %v3220
        %v3222 = vpop.f32.mrb[0].mxu0
        %v3223 = vadd.f32 %v3180, %v3222
        %3224 = vdwg.mxu0
        %3225 = vmatprep.subr.bf16.mxu0 %v2202
        %3226 = vmatpush1.bf16.msra.mxu0 %v2201
        %3227 = vmatprep.subr.bf16.mxu0 %v2206
        %3228 = vmatpush1.bf16.msra.mxu0 %v2205
        %3229 = vmatprep.subr.bf16.mxu0 %v2210
        %3230 = vmatpush1.bf16.msra.mxu0 %v2209
        %3231 = vmatprep.subr.bf16.mxu0 %v2214
        %3232 = vmatpush1.bf16.msra.mxu0 %v2213
        %3233 = vmatprep.subr.bf16.mxu0 %v2218
        %3234 = vmatpush1.bf16.msra.mxu0 %v2217
        %3235 = vmatprep.subr.bf16.mxu0 %v2222
        %3236 = vmatpush1.bf16.msra.mxu0 %v2221
        %3237 = vmatprep.subr.bf16.mxu0 %v2226
        %3238 = vmatpush1.bf16.msra.mxu0 %v2225
        %3239 = vmatprep.subr.bf16.mxu0 %v2230
        %3240 = vmatpush1.bf16.msra.mxu0 %v2229
        %3241 = vmatprep.subr.bf16.mxu0 %v2234
        %3242 = vmatpush1.bf16.msra.mxu0 %v2233
        %3243 = vmatprep.subr.bf16.mxu0 %v2238
        %3244 = vmatpush1.bf16.msra.mxu0 %v2237
        %3245 = vmatprep.subr.bf16.mxu0 %v2242
        %3246 = vmatpush1.bf16.msra.mxu0 %v2241
        %3247 = vmatprep.subr.bf16.mxu0 %v2246
        %3248 = vmatpush1.bf16.msra.mxu0 %v2245
        %3249 = vmatprep.subr.bf16.mxu0 %v2250
        %3250 = vmatpush1.bf16.msra.mxu0 %v2249
        %3251 = vmatprep.subr.bf16.mxu0 %v2254
        %3252 = vmatpush1.bf16.msra.mxu0 %v2253
        %3253 = vmatprep.subr.bf16.mxu0 %v2258
        %3254 = vmatpush1.bf16.msra.mxu0 %v2257
        %3255 = vmatprep.subr.bf16.mxu0 %v2262
        %3256 = vmatpush1.bf16.msra.mxu0 %v2261
        %3257 = vmatprep.mubr.bf16.mxu0 %v1024
        %3258 = vmatmul.mubr.bf16.gmra.mrb[0].mxu0 %v1023
        %v3259 = vpop.f32.mrb[0].mxu0
        %v3260 = vadd.f32 0.0, %v3259
        %v3261 = vpop.f32.mrb[0].mxu0
        %v3262 = vadd.f32 0.0, %v3261
        %v3263 = vpop.f32.mrb[0].mxu0
        %v3264 = vadd.f32 0.0, %v3263
        %v3265 = vpop.f32.mrb[0].mxu0
        %v3266 = vadd.f32 0.0, %v3265
        %3267 = vdwg.mxu0
        %3268 = vmatprep.subr.bf16.mxu0 %v2266
        %3269 = vmatpush1.bf16.msra.mxu0 %v2265
        %3270 = vmatprep.subr.bf16.mxu0 %v2270
        %3271 = vmatpush1.bf16.msra.mxu0 %v2269
        %3272 = vmatprep.subr.bf16.mxu0 %v2274
        %3273 = vmatpush1.bf16.msra.mxu0 %v2273
        %3274 = vmatprep.subr.bf16.mxu0 %v2278
        %3275 = vmatpush1.bf16.msra.mxu0 %v2277
        %3276 = vmatprep.subr.bf16.mxu0 %v2282
        %3277 = vmatpush1.bf16.msra.mxu0 %v2281
        %3278 = vmatprep.subr.bf16.mxu0 %v2286
        %3279 = vmatpush1.bf16.msra.mxu0 %v2285
        %3280 = vmatprep.subr.bf16.mxu0 %v2290
        %3281 = vmatpush1.bf16.msra.mxu0 %v2289
        %3282 = vmatprep.subr.bf16.mxu0 %v2294
        %3283 = vmatpush1.bf16.msra.mxu0 %v2293
        %3284 = vmatprep.subr.bf16.mxu0 %v2298
        %3285 = vmatpush1.bf16.msra.mxu0 %v2297
        %3286 = vmatprep.subr.bf16.mxu0 %v2302
        %3287 = vmatpush1.bf16.msra.mxu0 %v2301
        %3288 = vmatprep.subr.bf16.mxu0 %v2306
        %3289 = vmatpush1.bf16.msra.mxu0 %v2305
        %3290 = vmatprep.subr.bf16.mxu0 %v2310
        %3291 = vmatpush1.bf16.msra.mxu0 %v2309
        %3292 = vmatprep.subr.bf16.mxu0 %v2314
        %3293 = vmatpush1.bf16.msra.mxu0 %v2313
        %3294 = vmatprep.subr.bf16.mxu0 %v2318
        %3295 = vmatpush1.bf16.msra.mxu0 %v2317
        %3296 = vmatprep.subr.bf16.mxu0 %v2322
        %3297 = vmatpush1.bf16.msra.mxu0 %v2321
        %3298 = vmatprep.subr.bf16.mxu0 %v2326
        %3299 = vmatpush1.bf16.msra.mxu0 %v2325
        %3300 = vmatprep.mubr.bf16.mxu0 %v1026
        %3301 = vmatmul.mubr.bf16.gmra.mrb[0].mxu0 %v1025
        %v3302 = vpop.f32.mrb[0].mxu0
        %v3303 = vadd.f32 %v3260, %v3302
        %v3304 = vpop.f32.mrb[0].mxu0
        %v3305 = vadd.f32 %v3262, %v3304
        %v3306 = vpop.f32.mrb[0].mxu0
        %v3307 = vadd.f32 %v3264, %v3306
        %v3308 = vpop.f32.mrb[0].mxu0
        %v3309 = vadd.f32 %v3266, %v3308
        %3310 = vdwg.mxu0
        %3311 = vmatprep.subr.bf16.mxu0 %v2330
        %3312 = vmatpush1.bf16.msra.mxu0 %v2329
        %3313 = vmatprep.subr.bf16.mxu0 %v2334
        %3314 = vmatpush1.bf16.msra.mxu0 %v2333
        %3315 = vmatprep.subr.bf16.mxu0 %v2338
        %3316 = vmatpush1.bf16.msra.mxu0 %v2337
        %3317 = vmatprep.subr.bf16.mxu0 %v2342
        %3318 = vmatpush1.bf16.msra.mxu0 %v2341
        %3319 = vmatprep.subr.bf16.mxu0 %v2346
        %3320 = vmatpush1.bf16.msra.mxu0 %v2345
        %3321 = vmatprep.subr.bf16.mxu0 %v2350
        %3322 = vmatpush1.bf16.msra.mxu0 %v2349
        %3323 = vmatprep.subr.bf16.mxu0 %v2354
        %3324 = vmatpush1.bf16.msra.mxu0 %v2353
        %3325 = vmatprep.subr.bf16.mxu0 %v2358
        %3326 = vmatpush1.bf16.msra.mxu0 %v2357
        %3327 = vmatprep.subr.bf16.mxu0 %v2362
        %3328 = vmatpush1.bf16.msra.mxu0 %v2361
        %3329 = vmatprep.subr.bf16.mxu0 %v2366
        %3330 = vmatpush1.bf16.msra.mxu0 %v2365
        %3331 = vmatprep.subr.bf16.mxu0 %v2370
        %3332 = vmatpush1.bf16.msra.mxu0 %v2369
        %3333 = vmatprep.subr.bf16.mxu0 %v2374
        %3334 = vmatpush1.bf16.msra.mxu0 %v2373
        %3335 = vmatprep.subr.bf16.mxu0 %v2378
        %3336 = vmatpush1.bf16.msra.mxu0 %v2377
        %3337 = vmatprep.subr.bf16.mxu0 %v2382
        %3338 = vmatpush1.bf16.msra.mxu0 %v2381
        %3339 = vmatprep.subr.bf16.mxu0 %v2386
        %3340 = vmatpush1.bf16.msra.mxu0 %v2385
        %3341 = vmatprep.subr.bf16.mxu0 %v2390
        %3342 = vmatpush1.bf16.msra.mxu0 %v2389
        %3343 = vmatprep.mubr.bf16.mxu0 %v1028
        %3344 = vmatmul.mubr.bf16.gmra.mrb[0].mxu0 %v1027
        %v3345 = vpop.f32.mrb[0].mxu0
        %v3346 = vadd.f32 %v3303, %v3345
        %v3347 = vpop.f32.mrb[0].mxu0
        %v3348 = vadd.f32 %v3305, %v3347
        %v3349 = vpop.f32.mrb[0].mxu0
        %v3350 = vadd.f32 %v3307, %v3349
        %v3351 = vpop.f32.mrb[0].mxu0
        %v3352 = vadd.f32 %v3309, %v3351
        %3353 = vdwg.mxu0
        %3354 = vmatprep.subr.bf16.mxu0 %v2394
        %3355 = vmatpush1.bf16.msra.mxu0 %v2393
        %3356 = vmatprep.subr.bf16.mxu0 %v2398
        %3357 = vmatpush1.bf16.msra.mxu0 %v2397
        %3358 = vmatprep.subr.bf16.mxu0 %v2402
        %3359 = vmatpush1.bf16.msra.mxu0 %v2401
        %3360 = vmatprep.subr.bf16.mxu0 %v2406
        %3361 = vmatpush1.bf16.msra.mxu0 %v2405
        %3362 = vmatprep.subr.bf16.mxu0 %v2410
        %3363 = vmatpush1.bf16.msra.mxu0 %v2409
        %3364 = vmatprep.subr.bf16.mxu0 %v2414
        %3365 = vmatpush1.bf16.msra.mxu0 %v2413
        %3366 = vmatprep.subr.bf16.mxu0 %v2418
        %3367 = vmatpush1.bf16.msra.mxu0 %v2417
        %3368 = vmatprep.subr.bf16.mxu0 %v2422
        %3369 = vmatpush1.bf16.msra.mxu0 %v2421
        %3370 = vmatprep.subr.bf16.mxu0 %v2426
        %3371 = vmatpush1.bf16.msra.mxu0 %v2425
        %3372 = vmatprep.subr.bf16.mxu0 %v2430
        %3373 = vmatpush1.bf16.msra.mxu0 %v2429
        %3374 = vmatprep.subr.bf16.mxu0 %v2434
        %3375 = vmatpush1.bf16.msra.mxu0 %v2433
        %3376 = vmatprep.subr.bf16.mxu0 %v2438
        %3377 = vmatpush1.bf16.msra.mxu0 %v2437
        %3378 = vmatprep.subr.bf16.mxu0 %v2442
        %3379 = vmatpush1.bf16.msra.mxu0 %v2441
        %3380 = vmatprep.subr.bf16.mxu0 %v2446
        %3381 = vmatpush1.bf16.msra.mxu0 %v2445
        %3382 = vmatprep.subr.bf16.mxu0 %v2450
        %3383 = vmatpush1.bf16.msra.mxu0 %v2449
        %3384 = vmatprep.subr.bf16.mxu0 %v2454
        %3385 = vmatpush1.bf16.msra.mxu0 %v2453
        %3386 = vmatprep.mubr.bf16.mxu0 %v1030
        %3387 = vmatmul.mubr.bf16.gmra.mrb[0].mxu0 %v1029
        %v3388 = vpop.f32.mrb[0].mxu0
        %v3389 = vadd.f32 %v3346, %v3388
        %v3390 = vpop.f32.mrb[0].mxu0
        %v3391 = vadd.f32 %v3348, %v3390
        %v3392 = vpop.f32.mrb[0].mxu0
        %v3393 = vadd.f32 %v3350, %v3392
        %v3394 = vpop.f32.mrb[0].mxu0
        %v3395 = vadd.f32 %v3352, %v3394
        %3396 = vdwg.mxu0
        %3397 = vmatprep.subr.bf16.mxu0 %v2458
        %3398 = vmatpush1.bf16.msra.mxu0 %v2457
        %3399 = vmatprep.subr.bf16.mxu0 %v2462
        %3400 = vmatpush1.bf16.msra.mxu0 %v2461
        %3401 = vmatprep.subr.bf16.mxu0 %v2466
        %3402 = vmatpush1.bf16.msra.mxu0 %v2465
        %3403 = vmatprep.subr.bf16.mxu0 %v2470
        %3404 = vmatpush1.bf16.msra.mxu0 %v2469
        %3405 = vmatprep.subr.bf16.mxu0 %v2474
        %3406 = vmatpush1.bf16.msra.mxu0 %v2473
        %3407 = vmatprep.subr.bf16.mxu0 %v2478
        %3408 = vmatpush1.bf16.msra.mxu0 %v2477
        %3409 = vmatprep.subr.bf16.mxu0 %v2482
        %3410 = vmatpush1.bf16.msra.mxu0 %v2481
        %3411 = vmatprep.subr.bf16.mxu0 %v2486
        %3412 = vmatpush1.bf16.msra.mxu0 %v2485
        %3413 = vmatprep.subr.bf16.mxu0 %v2490
        %3414 = vmatpush1.bf16.msra.mxu0 %v2489
        %3415 = vmatprep.subr.bf16.mxu0 %v2494
        %3416 = vmatpush1.bf16.msra.mxu0 %v2493
        %3417 = vmatprep.subr.bf16.mxu0 %v2498
        %3418 = vmatpush1.bf16.msra.mxu0 %v2497
        %3419 = vmatprep.subr.bf16.mxu0 %v2502
        %3420 = vmatpush1.bf16.msra.mxu0 %v2501
        %3421 = vmatprep.subr.bf16.mxu0 %v2506
        %3422 = vmatpush1.bf16.msra.mxu0 %v2505
        %3423 = vmatprep.subr.bf16.mxu0 %v2510
        %3424 = vmatpush1.bf16.msra.mxu0 %v2509
        %3425 = vmatprep.subr.bf16.mxu0 %v2514
        %3426 = vmatpush1.bf16.msra.mxu0 %v2513
        %3427 = vmatprep.subr.bf16.mxu0 %v2518
        %3428 = vmatpush1.bf16.msra.mxu0 %v2517
        %3429 = vmatprep.mubr.bf16.mxu0 %v1032
        %3430 = vmatmul.mubr.bf16.gmra.mrb[0].mxu0 %v1031
        %v3431 = vpop.f32.mrb[0].mxu0
        %v3432 = vadd.f32 %v3389, %v3431
        %v3433 = vpop.f32.mrb[0].mxu0
        %v3434 = vadd.f32 %v3391, %v3433
        %v3435 = vpop.f32.mrb[0].mxu0
        %v3436 = vadd.f32 %v3393, %v3435
        %v3437 = vpop.f32.mrb[0].mxu0
        %v3438 = vadd.f32 %v3395, %v3437
        %3439 = vdwg.mxu0
        %3440 = vmatprep.subr.bf16.mxu0 %v2522
        %3441 = vmatpush1.bf16.msra.mxu0 %v2521
        %3442 = vmatprep.subr.bf16.mxu0 %v2526
        %3443 = vmatpush1.bf16.msra.mxu0 %v2525
        %3444 = vmatprep.subr.bf16.mxu0 %v2530
        %3445 = vmatpush1.bf16.msra.mxu0 %v2529
        %3446 = vmatprep.subr.bf16.mxu0 %v2534
        %3447 = vmatpush1.bf16.msra.mxu0 %v2533
        %3448 = vmatprep.subr.bf16.mxu0 %v2538
        %3449 = vmatpush1.bf16.msra.mxu0 %v2537
        %3450 = vmatprep.subr.bf16.mxu0 %v2542
        %3451 = vmatpush1.bf16.msra.mxu0 %v2541
        %3452 = vmatprep.subr.bf16.mxu0 %v2546
        %3453 = vmatpush1.bf16.msra.mxu0 %v2545
        %3454 = vmatprep.subr.bf16.mxu0 %v2550
        %3455 = vmatpush1.bf16.msra.mxu0 %v2549
        %3456 = vmatprep.subr.bf16.mxu0 %v2554
        %3457 = vmatpush1.bf16.msra.mxu0 %v2553
        %3458 = vmatprep.subr.bf16.mxu0 %v2558
        %3459 = vmatpush1.bf16.msra.mxu0 %v2557
        %3460 = vmatprep.subr.bf16.mxu0 %v2562
        %3461 = vmatpush1.bf16.msra.mxu0 %v2561
        %3462 = vmatprep.subr.bf16.mxu0 %v2566
        %3463 = vmatpush1.bf16.msra.mxu0 %v2565
        %3464 = vmatprep.subr.bf16.mxu0 %v2570
        %3465 = vmatpush1.bf16.msra.mxu0 %v2569
        %3466 = vmatprep.subr.bf16.mxu0 %v2574
        %3467 = vmatpush1.bf16.msra.mxu0 %v2573
        %3468 = vmatprep.subr.bf16.mxu0 %v2578
        %3469 = vmatpush1.bf16.msra.mxu0 %v2577
        %3470 = vmatprep.subr.bf16.mxu0 %v2582
        %3471 = vmatpush1.bf16.msra.mxu0 %v2581
        %3472 = vmatprep.mubr.bf16.mxu0 %v1034
        %3473 = vmatmul.mubr.bf16.gmra.mrb[0].mxu0 %v1033
        %v3474 = vpop.f32.mrb[0].mxu0
        %v3475 = vadd.f32 %v3432, %v3474
        %v3476 = vpop.f32.mrb[0].mxu0
        %v3477 = vadd.f32 %v3434, %v3476
        %v3478 = vpop.f32.mrb[0].mxu0
        %v3479 = vadd.f32 %v3436, %v3478
        %v3480 = vpop.f32.mrb[0].mxu0
        %v3481 = vadd.f32 %v3438, %v3480
        %3482 = vdwg.mxu0
        %v3483 = vadd.f32 %v583, %v3217
        %v3484 = vadd.f32 %v584, %v3219
        %v3485 = vadd.f32 %v585, %v3475
        %v3486 = vadd.f32 %v586, %v3477
        %v3487 = vadd.f32 %v587, %v3221
        %v3488 = vadd.f32 %v588, %v3223
        %v3489 = vadd.f32 %v589, %v3479
        %v3490 = vadd.f32 %v590, %v3481
        %3491 = vst [vmem:[#allocation2] sm:$0xff] %v3483
        %3492 = vst [vmem:[#allocation2 + $0x8] sm:$0xff] %v3484
        %3493 = vst [vmem:[#allocation2 + $0x10] sm:$0xff] %v3485
        %3494 = vst [vmem:[#allocation2 + $0x18] sm:$0xff] %v3486
        %3495 = vst [vmem:[#allocation2 + $0x20] sm:$0xff] %v3487
        %3496 = vst [vmem:[#allocation2 + $0x28] sm:$0xff] %v3488
        %3497 = vst [vmem:[#allocation2 + $0x30] sm:$0xff] %v3489
        %3498 = vst [vmem:[#allocation2 + $0x38] sm:$0xff] %v3490
        %p3499 = scmp.eq.s32.totalorder %s34, 3
        // Predicated region
        $region124: #{encoder_forward.1} parent=78 // pred_check
          %p3500 = pneg %p3499
        $region125: #{encoder_forward.1} parent=78 // pred_check_branch
          %3502 = sbr.rel (%p3500) target = $region127
        $region126: #{encoder_forward.1} parent=78 // pred_region
          %v3503 = vld [vmem:[#allocation2] sm:$0xff]
          %v3504 = vld [vmem:[#allocation2 + $0x8] sm:$0xff]
          %v3505 = vld [vmem:[#allocation2 + $0x10] sm:$0xff]
          %v3506 = vld [vmem:[#allocation2 + $0x18] sm:$0xff]
          %v3507 = vld [vmem:[#allocation2 + $0x20] sm:$0xff]
          %v3508 = vld [vmem:[#allocation2 + $0x28] sm:$0xff]
          %v3509 = vld [vmem:[#allocation2 + $0x30] sm:$0xff]
          %v3510 = vld [vmem:[#allocation2 + $0x38] sm:$0xff]
          %v3511 = vld [vmem:[#allocation8] sm:$0xf]
          %v3513 = vlaneseq
          %v3514 = vshrl.u32 %v3513, 7
          %v3515 = vsub.s32 0, %v3514
          %v3516 = vrot.slane %v3511, %v3515
          %v3517 = vlaneseq
          %v3518 = vshrl.u32 %v3517, 7
          %v3519 = vsub.s32 1, %v3518
          %v3520 = vrot.slane %v3511, %v3519
          %v3521 = vlaneseq
          %v3522 = vshrl.u32 %v3521, 7
          %v3523 = vsub.s32 2, %v3522
          %v3524 = vrot.slane %v3511, %v3523
          %v3525 = vlaneseq
          %v3526 = vshrl.u32 %v3525, 7
          %v3527 = vsub.s32 3, %v3526
          %v3528 = vrot.slane %v3511, %v3527
          %v3533 = vadd.f32 %v3503, %v3516
          %v3534 = vadd.f32 %v3504, %v3520
          %v3535 = vadd.f32 %v3505, %v3524
          %v3536 = vadd.f32 %v3506, %v3528
          %v3537 = vadd.f32 %v3507, %v3516
          %v3538 = vadd.f32 %v3508, %v3520
          %v3539 = vadd.f32 %v3509, %v3524
          %v3540 = vadd.f32 %v3510, %v3528
          %s3541 = sld [smem:[#allocation3]]
          %vm3542 = vcmp.gt.f32.partialorder %v3533, 0.0
          %vm3543 = vcmp.gt.f32.partialorder %v3534, 0.0
          %vm3544 = vcmp.gt.f32.partialorder %v3535, 0.0
          %vm3545 = vcmp.gt.f32.partialorder %v3536, 0.0
          %vm3546 = vcmp.gt.f32.partialorder %v3537, 0.0
          %vm3547 = vcmp.gt.f32.partialorder %v3538, 0.0
          %vm3548 = vcmp.gt.f32.partialorder %v3539, 0.0
          %vm3549 = vcmp.gt.f32.partialorder %v3540, 0.0
          %v3550 = vstv %s3541
          %v3551 = vmul.f32 %v3550, %v3533
          %v3552 = vmul.f32 %v3550, %v3534
          %v3553 = vmul.f32 %v3550, %v3535
          %v3554 = vmul.f32 %v3550, %v3536
          %v3555 = vmul.f32 %v3550, %v3537
          %v3556 = vmul.f32 %v3550, %v3538
          %v3557 = vmul.f32 %v3550, %v3539
          %v3558 = vmul.f32 %v3550, %v3540
          %v3559 = vsel %vm3542, %v3533, %v3551
          %v3560 = vsel %vm3543, %v3534, %v3552
          %v3561 = vsel %vm3544, %v3535, %v3553
          %v3562 = vsel %vm3545, %v3536, %v3554
          %v3563 = vsel %vm3546, %v3537, %v3555
          %v3564 = vsel %vm3547, %v3538, %v3556
          %v3565 = vsel %vm3548, %v3539, %v3557
          %v3566 = vsel %vm3549, %v3540, %v3558
          %v3567 = vpack.c.bf16 %v3563, %v3559
          %v3568 = vpack.c.bf16 %v3564, %v3560
          %v3569 = vpack.c.bf16 %v3565, %v3561
          %v3570 = vpack.c.bf16 %v3566, %v3562
          %v3571 = vld [vmem:[#allocation10] sm:$0xff]
          %v3572 = vld [vmem:[#allocation10 + $0x8] sm:$0xff]
          %v3573 = vld [vmem:[#allocation10 + $0x10] sm:$0xff]
          %v3574 = vld [vmem:[#allocation10 + $0x18] sm:$0xff]
          %v3575 = vld [vmem:[#allocation10 + $0x20] sm:$0xff]
          %v3576 = vld [vmem:[#allocation10 + $0x28] sm:$0xff]
          %v3577 = vld [vmem:[#allocation10 + $0x30] sm:$0xff]
          %v3578 = vld [vmem:[#allocation10 + $0x38] sm:$0xff]
          %v3579 = vld [vmem:[#allocation10 + $0x40] sm:$0xff]
          %v3580 = vld [vmem:[#allocation10 + $0x48] sm:$0xff]
          %v3581 = vld [vmem:[#allocation10 + $0x50] sm:$0xff]
          %v3582 = vld [vmem:[#allocation10 + $0x58] sm:$0xff]
          %v3583 = vld [vmem:[#allocation10 + $0x60] sm:$0xff]
          %v3584 = vld [vmem:[#allocation10 + $0x68] sm:$0xff]
          %v3585 = vld [vmem:[#allocation10 + $0x70] sm:$0xff]
          %v3586 = vld [vmem:[#allocation10 + $0x78] sm:$0xff]
          %v3587 = vld [vmem:[#allocation10 + $0x80] sm:$0xff]
          %v3588 = vld [vmem:[#allocation10 + $0x88] sm:$0xff]
          %v3589 = vld [vmem:[#allocation10 + $0x90] sm:$0xff]
          %v3590 = vld [vmem:[#allocation10 + $0x98] sm:$0xff]
          %v3591 = vld [vmem:[#allocation10 + $0xa0] sm:$0xff]
          %v3592 = vld [vmem:[#allocation10 + $0xa8] sm:$0xff]
          %v3593 = vld [vmem:[#allocation10 + $0xb0] sm:$0xff]
          %v3594 = vld [vmem:[#allocation10 + $0xb8] sm:$0xff]
          %v3595 = vld [vmem:[#allocation10 + $0xc0] sm:$0xff]
          %v3596 = vld [vmem:[#allocation10 + $0xc8] sm:$0xff]
          %v3597 = vld [vmem:[#allocation10 + $0xd0] sm:$0xff]
          %v3598 = vld [vmem:[#allocation10 + $0xd8] sm:$0xff]
          %v3599 = vld [vmem:[#allocation10 + $0xe0] sm:$0xff]
          %v3600 = vld [vmem:[#allocation10 + $0xe8] sm:$0xff]
          %v3601 = vld [vmem:[#allocation10 + $0xf0] sm:$0xff]
          %v3602 = vld [vmem:[#allocation10 + $0xf8] sm:$0xff]
          %v3603 = vld [vmem:[#allocation10 + $0x100] sm:$0xff]
          %v3604 = vld [vmem:[#allocation10 + $0x108] sm:$0xff]
          %v3605 = vld [vmem:[#allocation10 + $0x110] sm:$0xff]
          %v3606 = vld [vmem:[#allocation10 + $0x118] sm:$0xff]
          %v3607 = vld [vmem:[#allocation10 + $0x120] sm:$0xff]
          %v3608 = vld [vmem:[#allocation10 + $0x128] sm:$0xff]
          %v3609 = vld [vmem:[#allocation10 + $0x130] sm:$0xff]
          %v3610 = vld [vmem:[#allocation10 + $0x138] sm:$0xff]
          %v3611 = vld [vmem:[#allocation10 + $0x140] sm:$0xff]
          %v3612 = vld [vmem:[#allocation10 + $0x148] sm:$0xff]
          %v3613 = vld [vmem:[#allocation10 + $0x150] sm:$0xff]
          %v3614 = vld [vmem:[#allocation10 + $0x158] sm:$0xff]
          %v3615 = vld [vmem:[#allocation10 + $0x160] sm:$0xff]
          %v3616 = vld [vmem:[#allocation10 + $0x168] sm:$0xff]
          %v3617 = vld [vmem:[#allocation10 + $0x170] sm:$0xff]
          %v3618 = vld [vmem:[#allocation10 + $0x178] sm:$0xff]
          %v3619 = vld [vmem:[#allocation10 + $0x180] sm:$0xff]
          %v3620 = vld [vmem:[#allocation10 + $0x188] sm:$0xff]
          %v3621 = vld [vmem:[#allocation10 + $0x190] sm:$0xff]
          %v3622 = vld [vmem:[#allocation10 + $0x198] sm:$0xff]
          %v3623 = vld [vmem:[#allocation10 + $0x1a0] sm:$0xff]
          %v3624 = vld [vmem:[#allocation10 + $0x1a8] sm:$0xff]
          %v3625 = vld [vmem:[#allocation10 + $0x1b0] sm:$0xff]
          %v3626 = vld [vmem:[#allocation10 + $0x1b8] sm:$0xff]
          %v3627 = vld [vmem:[#allocation10 + $0x1c0] sm:$0xff]
          %v3628 = vld [vmem:[#allocation10 + $0x1c8] sm:$0xff]
          %v3629 = vld [vmem:[#allocation10 + $0x1d0] sm:$0xff]
          %v3630 = vld [vmem:[#allocation10 + $0x1d8] sm:$0xff]
          %v3631 = vld [vmem:[#allocation10 + $0x1e0] sm:$0xff]
          %v3632 = vld [vmem:[#allocation10 + $0x1e8] sm:$0xff]
          %v3633 = vld [vmem:[#allocation10 + $0x1f0] sm:$0xff]
          %v3634 = vld [vmem:[#allocation10 + $0x1f8] sm:$0xff]
          %v3635 = vld [vmem:[#allocation11] sm:$0x3]
          %v3637 = vlaneseq
          %v3638 = vshrl.u32 %v3637, 7
          %v3639 = vsub.s32 0, %v3638
          %v3640 = vrot.slane %v3635, %v3639
          %v3641 = vlaneseq
          %v3642 = vshrl.u32 %v3641, 7
          %v3643 = vsub.s32 1, %v3642
          %v3644 = vrot.slane %v3635, %v3643
          %v3711 = vunpack.c.l.b16 %v3571
          %v3712 = vunpack.c.h.b16 %v3571
          %v3713 = vunpack.c.l.b16 %v3572
          %v3714 = vunpack.c.h.b16 %v3572
          %v3715 = vunpack.c.l.b16 %v3573
          %v3716 = vunpack.c.h.b16 %v3573
          %v3717 = vunpack.c.l.b16 %v3574
          %v3718 = vunpack.c.h.b16 %v3574
          %v3719 = vunpack.c.l.b16 %v3575
          %v3720 = vunpack.c.h.b16 %v3575
          %v3721 = vunpack.c.l.b16 %v3576
          %v3722 = vunpack.c.h.b16 %v3576
          %v3723 = vunpack.c.l.b16 %v3577
          %v3724 = vunpack.c.h.b16 %v3577
          %v3725 = vunpack.c.l.b16 %v3578
          %v3726 = vunpack.c.h.b16 %v3578
          %v3727 = vunpack.c.l.b16 %v3579
          %v3728 = vunpack.c.h.b16 %v3579
          %v3729 = vunpack.c.l.b16 %v3580
          %v3730 = vunpack.c.h.b16 %v3580
          %v3731 = vunpack.c.l.b16 %v3581
          %v3732 = vunpack.c.h.b16 %v3581
          %v3733 = vunpack.c.l.b16 %v3582
          %v3734 = vunpack.c.h.b16 %v3582
          %v3735 = vunpack.c.l.b16 %v3583
          %v3736 = vunpack.c.h.b16 %v3583
          %v3737 = vunpack.c.l.b16 %v3584
          %v3738 = vunpack.c.h.b16 %v3584
          %v3739 = vunpack.c.l.b16 %v3585
          %v3740 = vunpack.c.h.b16 %v3585
          %v3741 = vunpack.c.l.b16 %v3586
          %v3742 = vunpack.c.h.b16 %v3586
          %v3743 = vunpack.c.l.b16 %v3587
          %v3744 = vunpack.c.h.b16 %v3587
          %v3745 = vunpack.c.l.b16 %v3588
          %v3746 = vunpack.c.h.b16 %v3588
          %v3747 = vunpack.c.l.b16 %v3589
          %v3748 = vunpack.c.h.b16 %v3589
          %v3749 = vunpack.c.l.b16 %v3590
          %v3750 = vunpack.c.h.b16 %v3590
          %v3751 = vunpack.c.l.b16 %v3591
          %v3752 = vunpack.c.h.b16 %v3591
          %v3753 = vunpack.c.l.b16 %v3592
          %v3754 = vunpack.c.h.b16 %v3592
          %v3755 = vunpack.c.l.b16 %v3593
          %v3756 = vunpack.c.h.b16 %v3593
          %v3757 = vunpack.c.l.b16 %v3594
          %v3758 = vunpack.c.h.b16 %v3594
          %v3759 = vunpack.c.l.b16 %v3595
          %v3760 = vunpack.c.h.b16 %v3595
          %v3761 = vunpack.c.l.b16 %v3596
          %v3762 = vunpack.c.h.b16 %v3596
          %v3763 = vunpack.c.l.b16 %v3597
          %v3764 = vunpack.c.h.b16 %v3597
          %v3765 = vunpack.c.l.b16 %v3598
          %v3766 = vunpack.c.h.b16 %v3598
          %v3767 = vunpack.c.l.b16 %v3599
          %v3768 = vunpack.c.h.b16 %v3599
          %v3769 = vunpack.c.l.b16 %v3600
          %v3770 = vunpack.c.h.b16 %v3600
          %v3771 = vunpack.c.l.b16 %v3601
          %v3772 = vunpack.c.h.b16 %v3601
          %v3773 = vunpack.c.l.b16 %v3602
          %v3774 = vunpack.c.h.b16 %v3602
          %v3775 = vunpack.c.l.b16 %v3603
          %v3776 = vunpack.c.h.b16 %v3603
          %v3777 = vunpack.c.l.b16 %v3604
          %v3778 = vunpack.c.h.b16 %v3604
          %v3779 = vunpack.c.l.b16 %v3605
          %v3780 = vunpack.c.h.b16 %v3605
          %v3781 = vunpack.c.l.b16 %v3606
          %v3782 = vunpack.c.h.b16 %v3606
          %v3783 = vunpack.c.l.b16 %v3607
          %v3784 = vunpack.c.h.b16 %v3607
          %v3785 = vunpack.c.l.b16 %v3608
          %v3786 = vunpack.c.h.b16 %v3608
          %v3787 = vunpack.c.l.b16 %v3609
          %v3788 = vunpack.c.h.b16 %v3609
          %v3789 = vunpack.c.l.b16 %v3610
          %v3790 = vunpack.c.h.b16 %v3610
          %v3791 = vunpack.c.l.b16 %v3611
          %v3792 = vunpack.c.h.b16 %v3611
          %v3793 = vunpack.c.l.b16 %v3612
          %v3794 = vunpack.c.h.b16 %v3612
          %v3795 = vunpack.c.l.b16 %v3613
          %v3796 = vunpack.c.h.b16 %v3613
          %v3797 = vunpack.c.l.b16 %v3614
          %v3798 = vunpack.c.h.b16 %v3614
          %v3799 = vunpack.c.l.b16 %v3615
          %v3800 = vunpack.c.h.b16 %v3615
          %v3801 = vunpack.c.l.b16 %v3616
          %v3802 = vunpack.c.h.b16 %v3616
          %v3803 = vunpack.c.l.b16 %v3617
          %v3804 = vunpack.c.h.b16 %v3617
          %v3805 = vunpack.c.l.b16 %v3618
          %v3806 = vunpack.c.h.b16 %v3618
          %v3807 = vunpack.c.l.b16 %v3619
          %v3808 = vunpack.c.h.b16 %v3619
          %v3809 = vunpack.c.l.b16 %v3620
          %v3810 = vunpack.c.h.b16 %v3620
          %v3811 = vunpack.c.l.b16 %v3621
          %v3812 = vunpack.c.h.b16 %v3621
          %v3813 = vunpack.c.l.b16 %v3622
          %v3814 = vunpack.c.h.b16 %v3622
          %v3815 = vunpack.c.l.b16 %v3623
          %v3816 = vunpack.c.h.b16 %v3623
          %v3817 = vunpack.c.l.b16 %v3624
          %v3818 = vunpack.c.h.b16 %v3624
          %v3819 = vunpack.c.l.b16 %v3625
          %v3820 = vunpack.c.h.b16 %v3625
          %v3821 = vunpack.c.l.b16 %v3626
          %v3822 = vunpack.c.h.b16 %v3626
          %v3823 = vunpack.c.l.b16 %v3627
          %v3824 = vunpack.c.h.b16 %v3627
          %v3825 = vunpack.c.l.b16 %v3628
          %v3826 = vunpack.c.h.b16 %v3628
          %v3827 = vunpack.c.l.b16 %v3629
          %v3828 = vunpack.c.h.b16 %v3629
          %v3829 = vunpack.c.l.b16 %v3630
          %v3830 = vunpack.c.h.b16 %v3630
          %v3831 = vunpack.c.l.b16 %v3631
          %v3832 = vunpack.c.h.b16 %v3631
          %v3833 = vunpack.c.l.b16 %v3632
          %v3834 = vunpack.c.h.b16 %v3632
          %v3835 = vunpack.c.l.b16 %v3633
          %v3836 = vunpack.c.h.b16 %v3633
          %v3837 = vunpack.c.l.b16 %v3634
          %v3838 = vunpack.c.h.b16 %v3634
          %v3839 = vpack.c.b16 %v3713, %v3711
          %v3840 = vpack.c.b16 %v3714, %v3712
          %v3841 = vpack.c.b16 %v3717, %v3715
          %v3842 = vpack.c.b16 %v3718, %v3716
          %v3843 = vpack.c.b16 %v3721, %v3719
          %v3844 = vpack.c.b16 %v3722, %v3720
          %v3845 = vpack.c.b16 %v3725, %v3723
          %v3846 = vpack.c.b16 %v3726, %v3724
          %v3847 = vpack.c.b16 %v3729, %v3727
          %v3848 = vpack.c.b16 %v3730, %v3728
          %v3849 = vpack.c.b16 %v3733, %v3731
          %v3850 = vpack.c.b16 %v3734, %v3732
          %v3851 = vpack.c.b16 %v3737, %v3735
          %v3852 = vpack.c.b16 %v3738, %v3736
          %v3853 = vpack.c.b16 %v3741, %v3739
          %v3854 = vpack.c.b16 %v3742, %v3740
          %v3855 = vpack.c.b16 %v3745, %v3743
          %v3856 = vpack.c.b16 %v3746, %v3744
          %v3857 = vpack.c.b16 %v3749, %v3747
          %v3858 = vpack.c.b16 %v3750, %v3748
          %v3859 = vpack.c.b16 %v3753, %v3751
          %v3860 = vpack.c.b16 %v3754, %v3752
          %v3861 = vpack.c.b16 %v3757, %v3755
          %v3862 = vpack.c.b16 %v3758, %v3756
          %v3863 = vpack.c.b16 %v3761, %v3759
          %v3864 = vpack.c.b16 %v3762, %v3760
          %v3865 = vpack.c.b16 %v3765, %v3763
          %v3866 = vpack.c.b16 %v3766, %v3764
          %v3867 = vpack.c.b16 %v3769, %v3767
          %v3868 = vpack.c.b16 %v3770, %v3768
          %v3869 = vpack.c.b16 %v3773, %v3771
          %v3870 = vpack.c.b16 %v3774, %v3772
          %v3871 = vpack.c.b16 %v3777, %v3775
          %v3872 = vpack.c.b16 %v3778, %v3776
          %v3873 = vpack.c.b16 %v3781, %v3779
          %v3874 = vpack.c.b16 %v3782, %v3780
          %v3875 = vpack.c.b16 %v3785, %v3783
          %v3876 = vpack.c.b16 %v3786, %v3784
          %v3877 = vpack.c.b16 %v3789, %v3787
          %v3878 = vpack.c.b16 %v3790, %v3788
          %v3879 = vpack.c.b16 %v3793, %v3791
          %v3880 = vpack.c.b16 %v3794, %v3792
          %v3881 = vpack.c.b16 %v3797, %v3795
          %v3882 = vpack.c.b16 %v3798, %v3796
          %v3883 = vpack.c.b16 %v3801, %v3799
          %v3884 = vpack.c.b16 %v3802, %v3800
          %v3885 = vpack.c.b16 %v3805, %v3803
          %v3886 = vpack.c.b16 %v3806, %v3804
          %v3887 = vpack.c.b16 %v3809, %v3807
          %v3888 = vpack.c.b16 %v3810, %v3808
          %v3889 = vpack.c.b16 %v3813, %v3811
          %v3890 = vpack.c.b16 %v3814, %v3812
          %v3891 = vpack.c.b16 %v3817, %v3815
          %v3892 = vpack.c.b16 %v3818, %v3816
          %v3893 = vpack.c.b16 %v3821, %v3819
          %v3894 = vpack.c.b16 %v3822, %v3820
          %v3895 = vpack.c.b16 %v3825, %v3823
          %v3896 = vpack.c.b16 %v3826, %v3824
          %v3897 = vpack.c.b16 %v3829, %v3827
          %v3898 = vpack.c.b16 %v3830, %v3828
          %v3899 = vpack.c.b16 %v3833, %v3831
          %v3900 = vpack.c.b16 %v3834, %v3832
          %v3901 = vpack.c.b16 %v3837, %v3835
          %v3902 = vpack.c.b16 %v3838, %v3836
          %3967 = vmatprep.subr.bf16.mxu0 %v3840
          %3968 = vmatpush1.bf16.msra.mxu0 %v3839
          %3969 = vmatprep.subr.bf16.mxu0 %v3842
          %3970 = vmatpush1.bf16.msra.mxu0 %v3841
          %3971 = vmatprep.subr.bf16.mxu0 %v3844
          %3972 = vmatpush1.bf16.msra.mxu0 %v3843
          %3973 = vmatprep.subr.bf16.mxu0 %v3846
          %3974 = vmatpush1.bf16.msra.mxu0 %v3845
          %3975 = vmatprep.subr.bf16.mxu0 %v3848
          %3976 = vmatpush1.bf16.msra.mxu0 %v3847
          %3977 = vmatprep.subr.bf16.mxu0 %v3850
          %3978 = vmatpush1.bf16.msra.mxu0 %v3849
          %3979 = vmatprep.subr.bf16.mxu0 %v3852
          %3980 = vmatpush1.bf16.msra.mxu0 %v3851
          %3981 = vmatprep.subr.bf16.mxu0 %v3854
          %3982 = vmatpush1.bf16.msra.mxu0 %v3853
          %3983 = vmatprep.subr.bf16.mxu0 %v3856
          %3984 = vmatpush1.bf16.msra.mxu0 %v3855
          %3985 = vmatprep.subr.bf16.mxu0 %v3858
          %3986 = vmatpush1.bf16.msra.mxu0 %v3857
          %3987 = vmatprep.subr.bf16.mxu0 %v3860
          %3988 = vmatpush1.bf16.msra.mxu0 %v3859
          %3989 = vmatprep.subr.bf16.mxu0 %v3862
          %3990 = vmatpush1.bf16.msra.mxu0 %v3861
          %3991 = vmatprep.subr.bf16.mxu0 %v3864
          %3992 = vmatpush1.bf16.msra.mxu0 %v3863
          %3993 = vmatprep.subr.bf16.mxu0 %v3866
          %3994 = vmatpush1.bf16.msra.mxu0 %v3865
          %3995 = vmatprep.subr.bf16.mxu0 %v3868
          %3996 = vmatpush1.bf16.msra.mxu0 %v3867
          %3997 = vmatprep.subr.bf16.mxu0 %v3870
          %3998 = vmatpush1.bf16.msra.mxu0 %v3869
          %3999 = vmatprep.mubr.bf16.mxu0 %v3568
          %4000 = vmatmul.mubr.bf16.gmra.mrb[0].mxu0 %v3567
          %v4001 = vpop.f32.mrb[0].mxu0
          %v4002 = vadd.f32 %v3640, %v4001
          %v4003 = vpop.f32.mrb[0].mxu0
          %v4004 = vadd.f32 %v3644, %v4003
          %v4005 = vpop.f32.mrb[0].mxu0
          %v4006 = vadd.f32 %v3640, %v4005
          %v4007 = vpop.f32.mrb[0].mxu0
          %v4008 = vadd.f32 %v3644, %v4007
          %4009 = vdwg.mxu0
          %4010 = vmatprep.subr.bf16.mxu0 %v3872
          %4011 = vmatpush1.bf16.msra.mxu0 %v3871
          %4012 = vmatprep.subr.bf16.mxu0 %v3874
          %4013 = vmatpush1.bf16.msra.mxu0 %v3873
          %4014 = vmatprep.subr.bf16.mxu0 %v3876
          %4015 = vmatpush1.bf16.msra.mxu0 %v3875
          %4016 = vmatprep.subr.bf16.mxu0 %v3878
          %4017 = vmatpush1.bf16.msra.mxu0 %v3877
          %4018 = vmatprep.subr.bf16.mxu0 %v3880
          %4019 = vmatpush1.bf16.msra.mxu0 %v3879
          %4020 = vmatprep.subr.bf16.mxu0 %v3882
          %4021 = vmatpush1.bf16.msra.mxu0 %v3881
          %4022 = vmatprep.subr.bf16.mxu0 %v3884
          %4023 = vmatpush1.bf16.msra.mxu0 %v3883
          %4024 = vmatprep.subr.bf16.mxu0 %v3886
          %4025 = vmatpush1.bf16.msra.mxu0 %v3885
          %4026 = vmatprep.subr.bf16.mxu0 %v3888
          %4027 = vmatpush1.bf16.msra.mxu0 %v3887
          %4028 = vmatprep.subr.bf16.mxu0 %v3890
          %4029 = vmatpush1.bf16.msra.mxu0 %v3889
          %4030 = vmatprep.subr.bf16.mxu0 %v3892
          %4031 = vmatpush1.bf16.msra.mxu0 %v3891
          %4032 = vmatprep.subr.bf16.mxu0 %v3894
          %4033 = vmatpush1.bf16.msra.mxu0 %v3893
          %4034 = vmatprep.subr.bf16.mxu0 %v3896
          %4035 = vmatpush1.bf16.msra.mxu0 %v3895
          %4036 = vmatprep.subr.bf16.mxu0 %v3898
          %4037 = vmatpush1.bf16.msra.mxu0 %v3897
          %4038 = vmatprep.subr.bf16.mxu0 %v3900
          %4039 = vmatpush1.bf16.msra.mxu0 %v3899
          %4040 = vmatprep.subr.bf16.mxu0 %v3902
          %4041 = vmatpush1.bf16.msra.mxu0 %v3901
          %4042 = vmatprep.mubr.bf16.mxu0 %v3570
          %4043 = vmatmul.mubr.bf16.gmra.mrb[0].mxu0 %v3569
          %v4044 = vpop.f32.mrb[0].mxu0
          %v4045 = vadd.f32 %v4002, %v4044
          %v4046 = vpop.f32.mrb[0].mxu0
          %v4047 = vadd.f32 %v4004, %v4046
          %v4048 = vpop.f32.mrb[0].mxu0
          %v4049 = vadd.f32 %v4006, %v4048
          %v4050 = vpop.f32.mrb[0].mxu0
          %v4051 = vadd.f32 %v4008, %v4050
          %4052 = vdwg.mxu0
          %s4053 = sld [smem:[#allocation3 + $0x1]]
          %vm4054 = vcmp.gt.f32.partialorder %v4045, 0.0
          %vm4055 = vcmp.gt.f32.partialorder %v4047, 0.0
          %vm4056 = vcmp.gt.f32.partialorder %v4049, 0.0
          %vm4057 = vcmp.gt.f32.partialorder %v4051, 0.0
          %v4058 = vstv %s4053
          %v4059 = vmul.f32 %v4058, %v4045
          %v4060 = vmul.f32 %v4058, %v4047
          %v4061 = vmul.f32 %v4058, %v4049
          %v4062 = vmul.f32 %v4058, %v4051
          %v4063 = vsel %vm4054, %v4045, %v4059
          %v4064 = vsel %vm4055, %v4047, %v4060
          %v4065 = vsel %vm4056, %v4049, %v4061
          %v4066 = vsel %vm4057, %v4051, %v4062
          %v4067 = vpack.c.bf16 %v4065, %v4063
          %v4068 = vpack.c.bf16 %v4066, %v4064
          %v4069 = vld [vmem:[#allocation13] sm:$0xf]
          %v4070 = vld [vmem:[#allocation13 + $0x4] sm:$0xf]
          %v4071 = vld [vmem:[#allocation13 + $0x8] sm:$0xf]
          %v4072 = vld [vmem:[#allocation13 + $0xc] sm:$0xf]
          %v4073 = vld [vmem:[#allocation13 + $0x10] sm:$0xf]
          %v4074 = vld [vmem:[#allocation13 + $0x14] sm:$0xf]
          %v4075 = vld [vmem:[#allocation13 + $0x18] sm:$0xf]
          %v4076 = vld [vmem:[#allocation13 + $0x1c] sm:$0xf]
          %v4077 = vld [vmem:[#allocation13 + $0x20] sm:$0xf]
          %v4078 = vld [vmem:[#allocation13 + $0x24] sm:$0xf]
          %v4079 = vld [vmem:[#allocation13 + $0x28] sm:$0xf]
          %v4080 = vld [vmem:[#allocation13 + $0x2c] sm:$0xf]
          %v4081 = vld [vmem:[#allocation13 + $0x30] sm:$0xf]
          %v4082 = vld [vmem:[#allocation13 + $0x34] sm:$0xf]
          %v4083 = vld [vmem:[#allocation13 + $0x38] sm:$0xf]
          %v4084 = vld [vmem:[#allocation13 + $0x3c] sm:$0xf]
          %v4085 = vld [vmem:[#allocation13 + $0x40] sm:$0xf]
          %v4086 = vld [vmem:[#allocation13 + $0x44] sm:$0xf]
          %v4087 = vld [vmem:[#allocation13 + $0x48] sm:$0xf]
          %v4088 = vld [vmem:[#allocation13 + $0x4c] sm:$0xf]
          %v4089 = vld [vmem:[#allocation13 + $0x50] sm:$0xf]
          %v4090 = vld [vmem:[#allocation13 + $0x54] sm:$0xf]
          %v4091 = vld [vmem:[#allocation13 + $0x58] sm:$0xf]
          %v4092 = vld [vmem:[#allocation13 + $0x5c] sm:$0xf]
          %v4093 = vld [vmem:[#allocation13 + $0x60] sm:$0xf]
          %v4094 = vld [vmem:[#allocation13 + $0x64] sm:$0xf]
          %v4095 = vld [vmem:[#allocation13 + $0x68] sm:$0xf]
          %v4096 = vld [vmem:[#allocation13 + $0x6c] sm:$0xf]
          %v4097 = vld [vmem:[#allocation13 + $0x70] sm:$0xf]
          %v4098 = vld [vmem:[#allocation13 + $0x74] sm:$0xf]
          %v4099 = vld [vmem:[#allocation13 + $0x78] sm:$0xf]
          %v4100 = vld [vmem:[#allocation13 + $0x7c] sm:$0xf]
          %v4101 = vld [vmem:[#allocation14] sm:$0x1]
          %v4103 = vlaneseq
          %v4104 = vshrl.u32 %v4103, 7
          %v4105 = vsub.s32 0, %v4104
          %v4106 = vrot.slane %v4101, %v4105
          %v4140 = vunpack.c.l.b16 %v4069
          %v4141 = vunpack.c.l.b16 %v4070
          %v4142 = vunpack.c.l.b16 %v4071
          %v4143 = vunpack.c.l.b16 %v4072
          %v4144 = vunpack.c.l.b16 %v4073
          %v4145 = vunpack.c.l.b16 %v4074
          %v4146 = vunpack.c.l.b16 %v4075
          %v4147 = vunpack.c.l.b16 %v4076
          %v4148 = vunpack.c.l.b16 %v4077
          %v4149 = vunpack.c.l.b16 %v4078
          %v4150 = vunpack.c.l.b16 %v4079
          %v4151 = vunpack.c.l.b16 %v4080
          %v4152 = vunpack.c.l.b16 %v4081
          %v4153 = vunpack.c.l.b16 %v4082
          %v4154 = vunpack.c.l.b16 %v4083
          %v4155 = vunpack.c.l.b16 %v4084
          %v4156 = vunpack.c.l.b16 %v4085
          %v4157 = vunpack.c.l.b16 %v4086
          %v4158 = vunpack.c.l.b16 %v4087
          %v4159 = vunpack.c.l.b16 %v4088
          %v4160 = vunpack.c.l.b16 %v4089
          %v4161 = vunpack.c.l.b16 %v4090
          %v4162 = vunpack.c.l.b16 %v4091
          %v4163 = vunpack.c.l.b16 %v4092
          %v4164 = vunpack.c.l.b16 %v4093
          %v4165 = vunpack.c.l.b16 %v4094
          %v4166 = vunpack.c.l.b16 %v4095
          %v4167 = vunpack.c.l.b16 %v4096
          %v4168 = vunpack.c.l.b16 %v4097
          %v4169 = vunpack.c.l.b16 %v4098
          %v4170 = vunpack.c.l.b16 %v4099
          %v4171 = vunpack.c.l.b16 %v4100
          %v4172 = vpack.c.b16 %v4141, %v4140
          %v4173 = vpack.c.b16 %v4143, %v4142
          %v4174 = vpack.c.b16 %v4145, %v4144
          %v4175 = vpack.c.b16 %v4147, %v4146
          %v4176 = vpack.c.b16 %v4149, %v4148
          %v4177 = vpack.c.b16 %v4151, %v4150
          %v4178 = vpack.c.b16 %v4153, %v4152
          %v4179 = vpack.c.b16 %v4155, %v4154
          %v4180 = vpack.c.b16 %v4157, %v4156
          %v4181 = vpack.c.b16 %v4159, %v4158
          %v4182 = vpack.c.b16 %v4161, %v4160
          %v4183 = vpack.c.b16 %v4163, %v4162
          %v4184 = vpack.c.b16 %v4165, %v4164
          %v4185 = vpack.c.b16 %v4167, %v4166
          %v4186 = vpack.c.b16 %v4169, %v4168
          %v4187 = vpack.c.b16 %v4171, %v4170
          %4204 = vmatprep.subr.bf16.mxu0 0
          %4205 = vmatpush1.bf16.msra.mxu0 %v4172
          %4206 = vmatprep.subr.bf16.mxu0 0
          %4207 = vmatpush1.bf16.msra.mxu0 %v4173
          %4208 = vmatprep.subr.bf16.mxu0 0
          %4209 = vmatpush1.bf16.msra.mxu0 %v4174
          %4210 = vmatprep.subr.bf16.mxu0 0
          %4211 = vmatpush1.bf16.msra.mxu0 %v4175
          %4212 = vmatprep.subr.bf16.mxu0 0
          %4213 = vmatpush1.bf16.msra.mxu0 %v4176
          %4214 = vmatprep.subr.bf16.mxu0 0
          %4215 = vmatpush1.bf16.msra.mxu0 %v4177
          %4216 = vmatprep.subr.bf16.mxu0 0
          %4217 = vmatpush1.bf16.msra.mxu0 %v4178
          %4218 = vmatprep.subr.bf16.mxu0 0
          %4219 = vmatpush1.bf16.msra.mxu0 %v4179
          %4220 = vmatprep.subr.bf16.mxu0 0
          %4221 = vmatpush1.bf16.msra.mxu0 %v4180
          %4222 = vmatprep.subr.bf16.mxu0 0
          %4223 = vmatpush1.bf16.msra.mxu0 %v4181
          %4224 = vmatprep.subr.bf16.mxu0 0
          %4225 = vmatpush1.bf16.msra.mxu0 %v4182
          %4226 = vmatprep.subr.bf16.mxu0 0
          %4227 = vmatpush1.bf16.msra.mxu0 %v4183
          %4228 = vmatprep.subr.bf16.mxu0 0
          %4229 = vmatpush1.bf16.msra.mxu0 %v4184
          %4230 = vmatprep.subr.bf16.mxu0 0
          %4231 = vmatpush1.bf16.msra.mxu0 %v4185
          %4232 = vmatprep.subr.bf16.mxu0 0
          %4233 = vmatpush1.bf16.msra.mxu0 %v4186
          %4234 = vmatprep.subr.bf16.mxu0 0
          %4235 = vmatpush1.bf16.msra.mxu0 %v4187
          %4236 = vmatprep.mubr.bf16.mxu0 %v4068
          %4237 = vmatmul.mubr.bf16.gmra.mrb[0].mxu0 %v4067
          %v4238 = vpop.f32.mrb[0].mxu0
          %v4239 = vadd.f32 %v4106, %v4238
          %v4240 = vpop.f32.mrb[0].mxu0
          %v4241 = vpop.f32.mrb[0].mxu0
          %v4242 = vadd.f32 %v4106, %v4241
          %v4243 = vpop.f32.mrb[0].mxu0
          %4244 = vdwg.mxu0
          %s4245 = sld [smem:[#allocation3 + $0x2]]
          %vm4246 = vcmp.gt.f32.partialorder %v4239, 0.0
          %vm4247 = vcmp.gt.f32.partialorder %v4242, 0.0
          %v4248 = vstv %s4245
          %v4249 = vmul.f32 %v4248, %v4239
          %v4250 = vmul.f32 %v4248, %v4242
          %v4251 = vsel %vm4246, %v4239, %v4249
          %v4252 = vsel %vm4247, %v4242, %v4250
          %v4253 = vpack.c.bf16 %v4252, %v4251
          %v4254 = vld [vmem:[#allocation16] sm:$0xf]
          %v4255 = vld [vmem:[#allocation16 + $0x4] sm:$0xf]
          %v4256 = vld [vmem:[#allocation16 + $0x8] sm:$0xf]
          %v4257 = vld [vmem:[#allocation16 + $0xc] sm:$0xf]
          %v4258 = vld [vmem:[#allocation16 + $0x10] sm:$0xf]
          %v4259 = vld [vmem:[#allocation16 + $0x14] sm:$0xf]
          %v4260 = vld [vmem:[#allocation16 + $0x18] sm:$0xf]
          %v4261 = vld [vmem:[#allocation16 + $0x1c] sm:$0xf]
          %v4262 = vld [vmem:[#allocation16 + $0x20] sm:$0xf]
          %v4263 = vld [vmem:[#allocation16 + $0x24] sm:$0xf]
          %v4264 = vld [vmem:[#allocation16 + $0x28] sm:$0xf]
          %v4265 = vld [vmem:[#allocation16 + $0x2c] sm:$0xf]
          %v4266 = vld [vmem:[#allocation16 + $0x30] sm:$0xf]
          %v4267 = vld [vmem:[#allocation16 + $0x34] sm:$0xf]
          %v4268 = vld [vmem:[#allocation16 + $0x38] sm:$0xf]
          %v4269 = vld [vmem:[#allocation16 + $0x3c] sm:$0xf]
          %v4270 = vld [vmem:[#allocation17] sm:$0x1]
          %v4272 = vlaneseq
          %v4273 = vshrl.u32 %v4272, 7
          %v4274 = vsub.s32 0, %v4273
          %v4275 = vrot.slane %v4270, %v4274
          %v4293 = vunpack.c.l.b16 %v4254
          %v4294 = vunpack.c.l.b16 %v4255
          %v4295 = vunpack.c.l.b16 %v4256
          %v4296 = vunpack.c.l.b16 %v4257
          %v4297 = vunpack.c.l.b16 %v4258
          %v4298 = vunpack.c.l.b16 %v4259
          %v4299 = vunpack.c.l.b16 %v4260
          %v4300 = vunpack.c.l.b16 %v4261
          %v4301 = vunpack.c.l.b16 %v4262
          %v4302 = vunpack.c.l.b16 %v4263
          %v4303 = vunpack.c.l.b16 %v4264
          %v4304 = vunpack.c.l.b16 %v4265
          %v4305 = vunpack.c.l.b16 %v4266
          %v4306 = vunpack.c.l.b16 %v4267
          %v4307 = vunpack.c.l.b16 %v4268
          %v4308 = vunpack.c.l.b16 %v4269
          %v4309 = vpack.c.b16 %v4294, %v4293
          %v4310 = vpack.c.b16 %v4296, %v4295
          %v4311 = vpack.c.b16 %v4298, %v4297
          %v4312 = vpack.c.b16 %v4300, %v4299
          %v4313 = vpack.c.b16 %v4302, %v4301
          %v4314 = vpack.c.b16 %v4304, %v4303
          %v4315 = vpack.c.b16 %v4306, %v4305
          %v4316 = vpack.c.b16 %v4308, %v4307
          %4325 = vmatprep.subr.bf16.mxu0 0
          %4326 = vmatpush1.bf16.msra.mxu0 %v4309
          %4327 = vmatprep.subr.bf16.mxu0 0
          %4328 = vmatpush1.bf16.msra.mxu0 %v4310
          %4329 = vmatprep.subr.bf16.mxu0 0
          %4330 = vmatpush1.bf16.msra.mxu0 %v4311
          %4331 = vmatprep.subr.bf16.mxu0 0
          %4332 = vmatpush1.bf16.msra.mxu0 %v4312
          %4333 = vmatprep.subr.bf16.mxu0 0
          %4334 = vmatpush1.bf16.msra.mxu0 %v4313
          %4335 = vmatprep.subr.bf16.mxu0 0
          %4336 = vmatpush1.bf16.msra.mxu0 %v4314
          %4337 = vmatprep.subr.bf16.mxu0 0
          %4338 = vmatpush1.bf16.msra.mxu0 %v4315
          %4339 = vmatprep.subr.bf16.mxu0 0
          %4340 = vmatpush1.bf16.msra.mxu0 %v4316
          %4341 = vmatprep.subr.bf16.mxu0 0
          %4342 = vmatpush1.bf16.msra.mxu0 0
          %4343 = vmatprep.subr.bf16.mxu0 0
          %4344 = vmatpush1.bf16.msra.mxu0 0
          %4345 = vmatprep.subr.bf16.mxu0 0
          %4346 = vmatpush1.bf16.msra.mxu0 0
          %4347 = vmatprep.subr.bf16.mxu0 0
          %4348 = vmatpush1.bf16.msra.mxu0 0
          %4349 = vmatprep.subr.bf16.mxu0 0
          %4350 = vmatpush1.bf16.msra.mxu0 0
          %4351 = vmatprep.subr.bf16.mxu0 0
          %4352 = vmatpush1.bf16.msra.mxu0 0
          %4353 = vmatprep.subr.bf16.mxu0 0
          %4354 = vmatpush1.bf16.msra.mxu0 0
          %4355 = vmatprep.subr.bf16.mxu0 0
          %4356 = vmatpush1.bf16.msra.mxu0 0
          %4357 = vmatprep.mubr.bf16.mxu0 0
          %4358 = vmatmul.mubr.bf16.gmra.mrb[0].mxu0 %v4253
          %v4359 = vpop.f32.mrb[0].mxu0
          %v4360 = vadd.f32 %v4275, %v4359
          %v4361 = vpop.f32.mrb[0].mxu0
          %v4362 = vpop.f32.mrb[0].mxu0
          %v4363 = vadd.f32 %v4275, %v4362
          %v4364 = vpop.f32.mrb[0].mxu0
          %4365 = vdwg.mxu0
          %4366 = vst [vmem:[%s568] sm:$0xff] %v4360
          %4367 = vst [vmem:[%s568 + $0x8] sm:$0xff] %v4363
        $region127: #{encoder_forward.1} parent=78 // pred_fallthru
          _
        %s4368 = smul.u32 2, %s33
        %p4369 = scmp.lt.s32.totalorder %s4368, 1
        %s4370 = scalar_select %p4369, %s4368, 1
        %s4371 = smul.addr %s4370, 8
        %s4372 = scalar_lea.vmem %s10, %s4371
        // Predicated region
        $region128: #{encoder_forward.1} parent=78 // pred_check
          %p4373 = pneg %p281
        $region129: #{encoder_forward.1} parent=78 // pred_check_branch
          %4375 = sbr.rel (%p4373) target = $region131
        $region130: #{encoder_forward.1} parent=78 // pred_region
          %s4376 = smul.u32 2, %s33
        $region131: #{encoder_forward.1} parent=78 // pred_fallthru
          _
        // Predicated region
        $region132: #{encoder_forward.1} parent=78 // pred_check
          %p4377 = pneg %p281
        $region133: #{encoder_forward.1} parent=78 // pred_check_branch
          %4379 = sbr.rel (%p4377) target = $region135
        $region134: #{encoder_forward.1} parent=78 // pred_region
          %s4380 = smul.u32 2, %s33
          %p4381 = scmp.lt.s32.totalorder %s4380, 1
          %s4382 = scalar_select %p4381, %s4380, 1
          %s4383 = smul.addr %s4382, 8
          %s4384 = scalar_lea.vmem %s10, %s4383
        $region135: #{encoder_forward.1} parent=78 // pred_fallthru
          _
      $region79: #{encoder_forward.1} parent=5 // pred_fallthru
        _
      %p4385 = scmp.le.s32.totalorder 2, %s24
      // Predicated region
      $region136: #{encoder_forward.1} parent=5 // pred_check
        %p4386 = pneg %p4385
      $region137: #{encoder_forward.1} parent=5 // pred_check_branch
        %4388 = sbr.rel (%p4386) target = $region139
      $region138: #{encoder_forward.1} parent=5 // pred_region
        %s4389 = ssub.s32 %s24, 2
      $region139: #{encoder_forward.1} parent=5 // pred_fallthru
        _
    $region6: #{encoder_forward.1} parent=1 // loop_footer
      %s28 = sadd.s32 1, %s24
    $region7: #{encoder_forward.1} parent=1 // loop_footer_branch
      %23 = sbr.rel target = $region3
    $region8: #{encoder_forward.1} parent=1 // loop_exit
      _
    %4390 = vsyncpa [#allocation4], 1
    %s4391 = scalar_lea.sflag [#allocation4], 1
    %4392 = vsyncpa %s4391, 1
    %4393 = vsyncpa [#allocation9], 1
    %4394 = vsyncpa [#allocation12], 1
    %4395 = vsyncpa [#allocation15], 1
    %4396 = vsyncpa [#allocation18], 1
    %4397 = vsyncpa [#allocation5], 1
    %s4398 = scalar_lea.sflag [#allocation5], 1
    %4399 = vsyncpa %s4398, 1

</llo_original>
